<compile_context>
chip_gen: v7x
topology: tpu7x:2x2x1
jax: 0.10.0
libtpu: 0.0.40
codegen_flags: <defaults>
</compile_context>

<pallas_src>
import functools

import jax
import jax.numpy as jnp
from jax.experimental import pallas as pl
from jax.experimental.pallas import tpu as pltpu


def _round_up(x, m):
    return ((x + m - 1) // m) * m


def _pick_tile(dim, target, align):
    """Largest multiple of `align` dividing `dim`, <= max(target, align).

    `dim` must already be a multiple of `align` (callers pad first), so this
    never falls back to an untiled / unaligned block."""
    assert dim % align == 0, (dim, align)
    if dim <= target:
        return dim
    t = (target // align) * align
    while t > align:
        if dim % t == 0:
            return t
        t -= align
    return align


# ---------------------------------------------------------------------------
# Weight-resident single-shot linear:  y = x @ w_t + b   (used for q48 only)
# ---------------------------------------------------------------------------
def _linear_kernel(x_ref, w_ref, b_ref, o_ref):
    acc = jnp.dot(x_ref[...], w_ref[...], preferred_element_type=jnp.float32)
    o_ref[...] = (acc + b_ref[...]).astype(o_ref.dtype)


def linear_resident(x, w_t, b, *, out_dtype=None):
    M, K = x.shape
    Cout = w_t.shape[1]
    out_dtype = out_dtype or x.dtype
    return pl.pallas_call(
        _linear_kernel,
        out_shape=jax.ShapeDtypeStruct((M, Cout), out_dtype),
        grid=(1,),
        in_specs=[
            pl.BlockSpec((M, K), lambda i: (0, 0)),
            pl.BlockSpec((K, Cout), lambda i: (0, 0)),
            pl.BlockSpec((1, Cout), lambda i: (0, 0)),
        ],
        out_specs=pl.BlockSpec((M, Cout), lambda i: (0, 0)),
        compiler_params=pltpu.CompilerParams(
            dimension_semantics=("arbitrary",)),
    )(x, w_t, b.reshape(1, Cout))


# ---------------------------------------------------------------------------
# Fused:  kv-projection  +  flash attention over the 48 task queries  +  proj
#   q48:   (Tq, C)  bf16, scale folded, shared across batch (resident)
#   x:     (B, Npad, C)  streamed as (1, tn, C) tiles
#   kw/vw/pw: (C, C) bf16 resident;  kb/vb/pb: (1, C) f32 resident
#   out:   (B, Tq, C)  -- already projected, lane-dense
# ---------------------------------------------------------------------------
def _fused_attn_kernel(q_ref, x_ref, kw_ref, kb_ref, vw_ref, vb_ref,
                       pw_ref, pb_ref, o_ref, m_sc, l_sc, acc_sc,
                       *, num_heads, head_dim, seq_len, needs_mask):
    n = pl.program_id(1)
    tq = q_ref.shape[0]
    tn = x_ref.shape[1]

    @pl.when(n == 0)
    def _init():
        m_sc[...] = jnp.full(m_sc.shape, -jnp.inf, jnp.float32)
        l_sc[...] = jnp.zeros(l_sc.shape, jnp.float32)
        acc_sc[...] = jnp.zeros(acc_sc.shape, jnp.float32)

    # Fused K/V projection for this KV tile: two full (tn,C)x(C,C) bf16 MXU dots.
    xb = x_ref[0].astype(jnp.bfloat16)                              # (tn, C)
    k = (jnp.dot(xb, kw_ref[...], preferred_element_type=jnp.float32)
         + kb_ref[...]).astype(jnp.bfloat16)                        # (tn, C)
    v = (jnp.dot(xb, vw_ref[...], preferred_element_type=jnp.float32)
         + vb_ref[...]).astype(jnp.bfloat16)                        # (tn, C)

    if needs_mask:
        kv_pos = n * tn + jax.lax.broadcasted_iota(jnp.int32, (tq, tn), 1)
        pad_mask = kv_pos < seq_len                                 # (tq, tn)

    # Per-head online softmax (static unrolled loop; nh is small).  Per-head
    # pieces are gathered as VALUES and written with one lane-dense (Tq, C)
    # accumulator RMW per KV step (no per-head 64-lane masked stores).
    pv_parts = []
    alpha_parts = []
    for h in range(num_heads):
        sl = slice(h * head_dim, (h + 1) * head_dim)
        qh = q_ref[:, sl]                                           # (Tq, hd) bf16
        s = jax.lax.dot_general(qh, k[:, sl], (((1,), (1,)), ((), ())),
                                preferred_element_type=jnp.float32)  # (Tq, tn)
        if needs_mask:
            s = jnp.where(pad_mask, s, -jnp.inf)
        m_prev = m_sc[h]                                            # (Tq, 1)
        m_new = jnp.maximum(m_prev, jnp.max(s, axis=-1, keepdims=True))
        alpha = jnp.exp(m_prev - m_new)
        p = jnp.exp(s - m_new)
        l_sc[h] = alpha * l_sc[h] + jnp.sum(p, axis=-1, keepdims=True)
        m_sc[h] = m_new
        pv_parts.append(jnp.dot(p.astype(jnp.bfloat16), v[:, sl],
                                preferred_element_type=jnp.float32))  # (Tq, hd)
        alpha_parts.append(jnp.broadcast_to(alpha, (tq, head_dim)))

    acc_sc[...] = (jnp.concatenate(alpha_parts, axis=-1) * acc_sc[...]
                   + jnp.concatenate(pv_parts, axis=-1))            # (Tq, C)

    @pl.when(n == pl.num_programs(1) - 1)
    def _finalize():
        l_full = jnp.concatenate(
            [jnp.broadcast_to(l_sc[h], (tq, head_dim)) for h in range(num_heads)],
            axis=-1)                                                # (Tq, C)
        attn = (acc_sc[...] * pl.reciprocal(l_full, approx=False)
                ).astype(jnp.bfloat16)
        proj = jnp.dot(attn, pw_ref[...],
                       preferred_element_type=jnp.float32) + pb_ref[...]
        o_ref[0] = proj.astype(o_ref.dtype)


def fused_attention(q48, x, kw_t, kb, vw_t, vb, pw_t, pb, *, num_heads,
                    out_dtype, tn_target=1024):
    Tq, C = q48.shape
    B, N, _ = x.shape
    hd = C // num_heads

    # Pad the KV axis to a multiple of 128 lanes (padded rows masked in-kernel).
    n_pad = _round_up(N, 128)
    if n_pad != N:
        x = jnp.pad(x, ((0, 0), (0, n_pad - N), (0, 0)))
    tn = _pick_tile(n_pad, tn_target, 128)

    kernel = functools.partial(_fused_attn_kernel, num_heads=num_heads,
                               head_dim=hd, seq_len=N,
                               needs_mask=(n_pad != N))
    return pl.pallas_call(
        kernel,
        out_shape=jax.ShapeDtypeStruct((B, Tq, C), out_dtype),
        grid=(B, n_pad // tn),
        in_specs=[
            pl.BlockSpec((Tq, C), lambda b, n: (0, 0)),      # q48 (resident)
            pl.BlockSpec((1, tn, C), lambda b, n: (b, n, 0)),  # x (streamed)
            pl.BlockSpec((C, C), lambda b, n: (0, 0)),       # kw_t (resident)
            pl.BlockSpec((1, C), lambda b, n: (0, 0)),       # kb
            pl.BlockSpec((C, C), lambda b, n: (0, 0)),       # vw_t
            pl.BlockSpec((1, C), lambda b, n: (0, 0)),       # vb
            pl.BlockSpec((C, C), lambda b, n: (0, 0)),       # pw_t
            pl.BlockSpec((1, C), lambda b, n: (0, 0)),       # pb
        ],
        out_specs=pl.BlockSpec((1, Tq, C), lambda b, n: (b, 0, 0)),
        scratch_shapes=[
            pltpu.VMEM((num_heads, Tq, 1), jnp.float32),     # running max
            pltpu.VMEM((num_heads, Tq, 1), jnp.float32),     # running denom
            pltpu.VMEM((Tq, C), jnp.float32),                # output accumulator
        ],
        compiler_params=pltpu.CompilerParams(
            dimension_semantics=("parallel", "arbitrary"),
            # v5e/v6e have 128 MiB physical VMEM; reduce toward the 32 MiB
            # default on v7x (64 MiB physical) if needed.
            vmem_limit_bytes=64 * 1024 * 1024,
        ),
        cost_estimate=pl.CostEstimate(
            flops=int(4 * B * n_pad * C * C + 4 * B * Tq * n_pad * C
                      + 2 * B * Tq * C * C),
            transcendentals=int(B * num_heads * Tq * n_pad),
            bytes_accessed=int(B * n_pad * C * x.dtype.itemsize
                               + B * Tq * C * 4 + 6 * C * C),
        ),
    )(q48, x, kw_t, kb.reshape(1, C), vw_t, vb.reshape(1, C),
      pw_t, pb.reshape(1, C))


# ---------------------------------------------------------------------------
# Nearest-neighbour row expansion 48 -> N as a lane-dense one-hot matmul
# (replaces the trailing XLA gather, which wrote the largest tensor in the op)
# ---------------------------------------------------------------------------
def _expand_kernel(src_ref, out48_ref, o_ref):
    tq = out48_ref.shape[1]
    tn = src_ref.shape[0]
    src = src_ref[...]                                              # (tn, 1) i32
    cols = jax.lax.broadcasted_iota(jnp.int32, (tn, tq), 1)
    onehot = (cols == src).astype(out48_ref.dtype)                  # (tn, Tq)
    o_ref[0] = jnp.dot(onehot, out48_ref[0],
                       preferred_element_type=jnp.float32).astype(o_ref.dtype)


def expand_rows(out48, n_out, *, tn_target=512):
    B, Tq, C = out48.shape
    n_pad = _round_up(n_out, 8)
    tn = _pick_tile(n_pad, tn_target, 8)
    rows = jnp.arange(n_pad, dtype=jnp.int32)
    src = jnp.where(rows < n_out, (rows * Tq) // n_out, 0).reshape(n_pad, 1)
    out = pl.pallas_call(
        _expand_kernel,
        out_shape=jax.ShapeDtypeStruct((B, n_pad, C), out48.dtype),
        grid=(B, n_pad // tn),
        in_specs=[
            pl.BlockSpec((tn, 1), lambda b, n: (n, 0)),
            pl.BlockSpec((1, Tq, C), lambda b, n: (b, 0, 0)),
        ],
        out_specs=pl.BlockSpec((1, tn, C), lambda b, n: (b, n, 0)),
        compiler_params=pltpu.CompilerParams(
            dimension_semantics=("parallel", "parallel")),
    )(src, out48)
    return out if n_pad == n_out else out[:, :n_out, :]


# ---------------------------------------------------------------------------
# Module: parameter init + forward
# ---------------------------------------------------------------------------
def init_attention_dec_params(key, dim, num_heads, qkv_bias=False, std=0.1):
    ks = jax.random.split(key, 4)
    return {
        "task_query": jax.random.normal(ks[0], (1, 48, dim), jnp.float32),
        "q_w": std * jax.random.normal(ks[1], (dim, dim), jnp.float32),
        "q_b": jnp.zeros((dim,), jnp.float32),
        "kv_w": std * jax.random.normal(ks[2], (2 * dim, dim), jnp.float32),
        "kv_b": jnp.zeros((2 * dim,), jnp.float32),
        "proj_w": std * jax.random.normal(ks[3], (dim, dim), jnp.float32),
        "proj_b": jnp.zeros((dim,), jnp.float32),
    }  # qkv_bias=False -> q/kv biases stay zero (same semantics as "no bias")


def attention_dec_forward(params, x, H, W, *, num_heads, qk_scale=None,
                          tn_target=1024):
    B, N, C = x.shape
    assert C % num_heads == 0
    hd = C // num_heads
    scale = qk_scale if qk_scale is not None else hd ** (-0.5)
    task_q = params["task_query"][0]                     # (Tq, C), Tq = 48

    # Trace-time weight prep: transpose to (Cin, Cout), fold the softmax scale
    # into the q projection, split kv into k/v halves, cast weights to bf16.
    qw_t = (scale * params["q_w"]).T.astype(jnp.bfloat16)
    qb = (scale * params["q_b"]).astype(jnp.float32)
    kw_t = params["kv_w"][:C].T.astype(jnp.bfloat16)
    kb = params["kv_b"][:C].astype(jnp.float32)
    vw_t = params["kv_w"][C:].T.astype(jnp.bfloat16)
    vb = params["kv_b"][C:].astype(jnp.float32)
    pw_t = params["proj_w"].T.astype(jnp.bfloat16)
    pb = params["proj_b"].astype(jnp.float32)

    # q projection once for the 48 task queries (shared by every batch element).
    q48 = linear_resident(task_q.astype(jnp.bfloat16), qw_t, qb,
                          out_dtype=jnp.bfloat16)        # (Tq, C)

    # Fused kv-projection + flash attention + output projection on the 48 rows.
    out48 = fused_attention(q48, x, kw_t, kb, vw_t, vb, pw_t, pb,
                            num_heads=num_heads, out_dtype=x.dtype,
                            tn_target=tn_target)         # (B, Tq, C)

    # F.interpolate(q, mode='nearest') row expansion applied to the final output
    # (a row-wise linear commutes with the row gather).
    return expand_rows(out48, N)                         # (B, N, C)


# ---------------------------------------------------------------------------
# Pure-JAX reference (mirrors the PyTorch forward exactly, f32)
# ---------------------------------------------------------------------------
def reference_forward(params, x, H, W, *, num_heads, qk_scale=None):
    B, N, C = x.shape
    hd = C // num_heads
    scale = qk_scale if qk_scale is not None else hd ** (-0.5)
    task_q = jnp.broadcast_to(params["task_query"], (B, 48, C))
    Tq = task_q.shape[1]
    q = task_q @ params["q_w"].T + params["q_b"]
    q = q.reshape(B, Tq, num_heads, hd).transpose(0, 2, 1, 3)
    kv = x @ params["kv_w"].T + params["kv_b"]
    kv = kv.reshape(B, N, 2, num_heads, hd).transpose(2, 0, 3, 1, 4)
    k, v = kv[0], kv[1]
    src = (jnp.arange(N) * Tq) // N           # nearest interpolation over rows
    q = jnp.take(q, src, axis=2)
    attn = jnp.einsum("bhqd,bhkd->bhqk", q, k) * scale
    attn = jax.nn.softmax(attn, axis=-1)
    out = jnp.einsum("bhqk,bhkd->bhqd", attn, v)
    out = out.transpose(0, 2, 1, 3).reshape(B, N, C)
    return out @ params["proj_w"].T + params["proj_b"]


# ---------------------------------------------------------------------------
if __name__ == "__main__":
    B, C, num_heads = 2, 32, 4
    H = W = 4
    N = H * W

    key = jax.random.PRNGKey(0)
    k_params, k_x = jax.random.split(key)
    params = init_attention_dec_params(k_params, C, num_heads)
    x = jax.random.normal(k_x, (B, N, C), jnp.float32)

    fwd = jax.jit(functools.partial(attention_dec_forward, num_heads=num_heads),
                  static_argnums=(2, 3))
    out = jax.block_until_ready(fwd(params, x, H, W))

    ref = reference_forward(params, x, H, W, num_heads=num_heads)
    assert out.shape == (B, N, C)
    # bf16 MXU operands (per perf guidance) -> compare with a modest tolerance.
    err = float(jnp.max(jnp.abs(out - ref)))
    assert jnp.allclose(out, ref, atol=3e-2, rtol=3e-2), f"mismatch vs ref: {err}"
    print("KERNEL_OK")
</pallas_src>

<mosaic_0001>
module attributes {stable_mosaic.version = 11 : i64} {
  func.func @_linear_kernel(%arg0: i32, %arg1: memref<48x32xbf16, #tpu.memory_space<vmem>>, %arg2: memref<32x32xbf16, #tpu.memory_space<vmem>>, %arg3: memref<1x32xf32, #tpu.memory_space<vmem>>, %arg4: memref<48x32xbf16, #tpu.memory_space<vmem>>) attributes {dimension_semantics = [#tpu.dimension_semantics<arbitrary>], iteration_bounds = array<i64: 1>, scalar_prefetch = 0 : i64, scratch_operands = 0 : i64, tpu.core_type = #tpu.core_type<tc>, window_params = [{pipeline_mode = #tpu.pipeline_mode<synchronous>, transform_indices = @transform_0, window_bounds = array<i64: 48, 32>}, {pipeline_mode = #tpu.pipeline_mode<synchronous>, transform_indices = @transform_1, window_bounds = array<i64: 32, 32>}, {pipeline_mode = #tpu.pipeline_mode<synchronous>, transform_indices = @transform_2, window_bounds = array<i64: 1, 32>}, {pipeline_mode = #tpu.pipeline_mode<synchronous>, transform_indices = @transform_3, window_bounds = array<i64: 48, 32>}]} {
    %c0 = arith.constant 0 : index
    %c0_0 = arith.constant 0 : index
    %0 = vector.load %arg1[%c0, %c0_0] : memref<48x32xbf16, #tpu.memory_space<vmem>>, vector<48x32xbf16>
    %c0_1 = arith.constant 0 : index
    %c0_2 = arith.constant 0 : index
    %1 = vector.load %arg2[%c0_1, %c0_2] : memref<32x32xbf16, #tpu.memory_space<vmem>>, vector<32x32xbf16>
    %cst = arith.constant dense<0.000000e+00> : vector<48x32xf32>
    %2 = tpu.matmul %0, %1, %cst {dimension_numbers = #tpu.dot_dimension_numbers<[1], [0], [0], [1], [0, 0, 1, 1], [], []>} : vector<48x32xbf16>, vector<32x32xbf16>, vector<48x32xf32> -> vector<48x32xf32>
    %c0_3 = arith.constant 0 : index
    %c0_4 = arith.constant 0 : index
    %3 = vector.load %arg3[%c0_3, %c0_4] : memref<1x32xf32, #tpu.memory_space<vmem>>, vector<1x32xf32>
    %4 = vector.broadcast %3 : vector<1x32xf32> to vector<48x32xf32>
    %5 = arith.addf %2, %4 : vector<48x32xf32>
    %6 = arith.truncf %5 : vector<48x32xf32> to vector<48x32xbf16>
    %c0_5 = arith.constant 0 : index
    %c0_6 = arith.constant 0 : index
    %7 = vector.load %arg4[%c0_5, %c0_6] : memref<48x32xbf16, #tpu.memory_space<vmem>>, vector<48x32xbf16>
    tpu.vector_store %arg4[%c0_5, %c0_6], %6 {strides = array<i32>} : memref<48x32xbf16, #tpu.memory_space<vmem>>, vector<48x32xbf16>,
    return
  }
  func.func @transform_0(%arg0: i32) -> (i32, i32) {
    %c0_i32 = arith.constant 0 : i32
    %c0_i32_0 = arith.constant 0 : i32
    %c0_i32_1 = arith.constant 0 : i32
    return %c0_i32, %c0_i32_0 : i32, i32
  }
  func.func @transform_1(%arg0: i32) -> (i32, i32) {
    %c0_i32 = arith.constant 0 : i32
    %c0_i32_0 = arith.constant 0 : i32
    %c0_i32_1 = arith.constant 0 : i32
    return %c0_i32, %c0_i32_0 : i32, i32
  }
  func.func @transform_2(%arg0: i32) -> (i32, i32) {
    %c0_i32 = arith.constant 0 : i32
    %c0_i32_0 = arith.constant 0 : i32
    %c0_i32_1 = arith.constant 0 : i32
    return %c0_i32, %c0_i32_0 : i32, i32
  }
  func.func @transform_3(%arg0: i32) -> (i32, i32) {
    %c0_i32 = arith.constant 0 : i32
    %c0_i32_0 = arith.constant 0 : i32
    %c0_i32_1 = arith.constant 0 : i32
    return %c0_i32, %c0_i32_0 : i32, i32
  }
}

module attributes {stable_mosaic.version = 11 : i64} {
  func.func @_expand_kernel(%arg0: i32, %arg1: i32, %arg2: memref<16x1xi32, #tpu.memory_space<vmem>>, %arg3: memref<1x48x32xf32, #tpu.memory_space<vmem>>, %arg4: memref<1x16x32xf32, #tpu.memory_space<vmem>>) attributes {dimension_semantics = [#tpu.dimension_semantics<parallel>, #tpu.dimension_semantics<parallel>], iteration_bounds = array<i64: 2, 1>, scalar_prefetch = 0 : i64, scratch_operands = 0 : i64, tpu.core_type = #tpu.core_type<tc>, window_params = [{transform_indices = @transform_0, window_bounds = array<i64: 16, 1>}, {transform_indices = @transform_1, window_bounds = array<i64: 1, 48, 32>}, {transform_indices = @transform_2, window_bounds = array<i64: 1, 16, 32>}]} {
    %c0 = arith.constant 0 : index
    %c0_0 = arith.constant 0 : index
    %0 = vector.load %arg2[%c0, %c0_0] : memref<16x1xi32, #tpu.memory_space<vmem>>, vector<16x1xi32>
    %1 = tpu.iota {dimensions = array<i32: 1>} : vector<16x48xi32>
    %2 = vector.broadcast %0 : vector<16x1xi32> to vector<16x48xi32>
    %3 = arith.cmpi eq, %1, %2 : vector<16x48xi32>
    %4 = arith.extui %3 : vector<16x48xi1> to vector<16x48xi32>
    %5 = arith.sitofp %4 : vector<16x48xi32> to vector<16x48xf32>
    %c0_1 = arith.constant 0 : index
    %c0_2 = arith.constant 0 : index
    %c0_3 = arith.constant 0 : index
    %6 = vector.load %arg3[%c0_1, %c0_2, %c0_3] : memref<1x48x32xf32, #tpu.memory_space<vmem>>, vector<1x48x32xf32>
    %7 = vector.shape_cast %6 : vector<1x48x32xf32> to vector<48x32xf32>
    %cst = arith.constant dense<0.000000e+00> : vector<16x32xf32>
    %8 = tpu.matmul %5, %7, %cst {dimension_numbers = #tpu.dot_dimension_numbers<[1], [0], [0], [1], [0, 0, 1, 1], [], []>} : vector<16x48xf32>, vector<48x32xf32>, vector<16x32xf32> -> vector<16x32xf32>
    %c0_4 = arith.constant 0 : index
    %c0_5 = arith.constant 0 : index
    %c0_6 = arith.constant 0 : index
    %9 = vector.load %arg4[%c0_4, %c0_5, %c0_6] : memref<1x16x32xf32, #tpu.memory_space<vmem>>, vector<1x16x32xf32>
    %10 = vector.shape_cast %9 : vector<1x16x32xf32> to vector<16x32xf32>
    %11 = vector.shape_cast %8 : vector<16x32xf32> to vector<1x16x32xf32>
    tpu.vector_store %arg4[%c0_4, %c0_5, %c0_6], %11 {strides = array<i32>} : memref<1x16x32xf32, #tpu.memory_space<vmem>>, vector<1x16x32xf32>,
    return
  }
  func.func @transform_0(%arg0: i32, %arg1: i32) -> (i32, i32) {
    %c0_i32 = arith.constant 0 : i32
    %c0_i32_0 = arith.constant 0 : i32
    return %arg1, %c0_i32 : i32, i32
  }
  func.func @transform_1(%arg0: i32, %arg1: i32) -> (i32, i32, i32) {
    %c0_i32 = arith.constant 0 : i32
    %c0_i32_0 = arith.constant 0 : i32
    %c0_i32_1 = arith.constant 0 : i32
    return %arg0, %c0_i32, %c0_i32_0 : i32, i32, i32
  }
  func.func @transform_2(%arg0: i32, %arg1: i32) -> (i32, i32, i32) {
    %c0_i32 = arith.constant 0 : i32
    %c0_i32_0 = arith.constant 0 : i32
    return %arg0, %arg1, %c0_i32 : i32, i32, i32
  }
}

module attributes {stable_mosaic.version = 11 : i64} {
  func.func @_fused_attn_kernel(%arg0: i32, %arg1: i32, %arg2: memref<48x32xbf16, #tpu.memory_space<vmem>>, %arg3: memref<1x128x32xf32, #tpu.memory_space<vmem>>, %arg4: memref<32x32xbf16, #tpu.memory_space<vmem>>, %arg5: memref<1x32xf32, #tpu.memory_space<vmem>>, %arg6: memref<32x32xbf16, #tpu.memory_space<vmem>>, %arg7: memref<1x32xf32, #tpu.memory_space<vmem>>, %arg8: memref<32x32xbf16, #tpu.memory_space<vmem>>, %arg9: memref<1x32xf32, #tpu.memory_space<vmem>>, %arg10: memref<1x48x32xf32, #tpu.memory_space<vmem>>, %arg11: memref<4x48x1xf32, #tpu.memory_space<vmem>>, %arg12: memref<4x48x1xf32, #tpu.memory_space<vmem>>, %arg13: memref<48x32xf32, #tpu.memory_space<vmem>>) attributes {dimension_semantics = [#tpu.dimension_semantics<parallel>, #tpu.dimension_semantics<arbitrary>], iteration_bounds = array<i64: 2, 1>, scalar_prefetch = 0 : i64, scratch_operands = 3 : i64, tpu.core_type = #tpu.core_type<tc>, window_params = [{pipeline_mode = #tpu.pipeline_mode<synchronous>, transform_indices = @transform_0, window_bounds = array<i64: 48, 32>}, {transform_indices = @transform_1, window_bounds = array<i64: 1, 128, 32>}, {pipeline_mode = #tpu.pipeline_mode<synchronous>, transform_indices = @transform_2, window_bounds = array<i64: 32, 32>}, {pipeline_mode = #tpu.pipeline_mode<synchronous>, transform_indices = @transform_3, window_bounds = array<i64: 1, 32>}, {pipeline_mode = #tpu.pipeline_mode<synchronous>, transform_indices = @transform_4, window_bounds = array<i64: 32, 32>}, {pipeline_mode = #tpu.pipeline_mode<synchronous>, transform_indices = @transform_5, window_bounds = array<i64: 1, 32>}, {pipeline_mode = #tpu.pipeline_mode<synchronous>, transform_indices = @transform_6, window_bounds = array<i64: 32, 32>}, {pipeline_mode = #tpu.pipeline_mode<synchronous>, transform_indices = @transform_7, window_bounds = array<i64: 1, 32>}, {transform_indices = @transform_8, window_bounds = array<i64: 1, 48, 32>}]} {
    %c0_i32 = arith.constant 0 : i32
    %0 = arith.cmpi eq, %arg1, %c0_i32 : i32
    %1 = arith.extui %0 : i1 to i32
    %c0_i32_0 = arith.constant 0 : i32
    %2 = arith.cmpi ne, %1, %c0_i32_0 : i32
    scf.if %2 {
      %cst_88 = arith.constant 0xFF800000 : f32
      %161 = vector.broadcast %cst_88 : f32 to vector<4x48x1xf32>
      %c0_89 = arith.constant 0 : index
      %c0_90 = arith.constant 0 : index
      %c0_91 = arith.constant 0 : index
      %162 = vector.load %arg11[%c0_89, %c0_90, %c0_91] : memref<4x48x1xf32, #tpu.memory_space<vmem>>, vector<4x48x1xf32>
      tpu.vector_store %arg11[%c0_89, %c0_90, %c0_91], %161 {strides = array<i32>} : memref<4x48x1xf32, #tpu.memory_space<vmem>>, vector<4x48x1xf32>,
      %cst_92 = arith.constant 0.000000e+00 : f32
      %163 = vector.broadcast %cst_92 : f32 to vector<4x48x1xf32>
      %c0_93 = arith.constant 0 : index
      %c0_94 = arith.constant 0 : index
      %c0_95 = arith.constant 0 : index
      %164 = vector.load %arg12[%c0_93, %c0_94, %c0_95] : memref<4x48x1xf32, #tpu.memory_space<vmem>>, vector<4x48x1xf32>
      tpu.vector_store %arg12[%c0_93, %c0_94, %c0_95], %163 {strides = array<i32>} : memref<4x48x1xf32, #tpu.memory_space<vmem>>, vector<4x48x1xf32>,
      %cst_96 = arith.constant 0.000000e+00 : f32
      %165 = vector.broadcast %cst_96 : f32 to vector<48x32xf32>
      %c0_97 = arith.constant 0 : index
      %c0_98 = arith.constant 0 : index
      %166 = vector.load %arg13[%c0_97, %c0_98] : memref<48x32xf32, #tpu.memory_space<vmem>>, vector<48x32xf32>
      tpu.vector_store %arg13[%c0_97, %c0_98], %165 {strides = array<i32>} : memref<48x32xf32, #tpu.memory_space<vmem>>, vector<48x32xf32>,
    } else {
    }
    %c0 = arith.constant 0 : index
    %c0_1 = arith.constant 0 : index
    %c0_2 = arith.constant 0 : index
    %3 = vector.load %arg3[%c0, %c0_1, %c0_2] : memref<1x128x32xf32, #tpu.memory_space<vmem>>, vector<1x128x32xf32>
    %4 = vector.shape_cast %3 : vector<1x128x32xf32> to vector<128x32xf32>
    %5 = arith.truncf %4 : vector<128x32xf32> to vector<128x32xbf16>
    %c0_3 = arith.constant 0 : index
    %c0_4 = arith.constant 0 : index
    %6 = vector.load %arg4[%c0_3, %c0_4] : memref<32x32xbf16, #tpu.memory_space<vmem>>, vector<32x32xbf16>
    %cst = arith.constant dense<0.000000e+00> : vector<128x32xf32>
    %7 = tpu.matmul %5, %6, %cst {dimension_numbers = #tpu.dot_dimension_numbers<[1], [0], [0], [1], [0, 0, 1, 1], [], []>} : vector<128x32xbf16>, vector<32x32xbf16>, vector<128x32xf32> -> vector<128x32xf32>
    %c0_5 = arith.constant 0 : index
    %c0_6 = arith.constant 0 : index
    %8 = vector.load %arg5[%c0_5, %c0_6] : memref<1x32xf32, #tpu.memory_space<vmem>>, vector<1x32xf32>
    %9 = vector.broadcast %8 : vector<1x32xf32> to vector<128x32xf32>
    %10 = arith.addf %7, %9 : vector<128x32xf32>
    %11 = arith.truncf %10 : vector<128x32xf32> to vector<128x32xbf16>
    %c0_7 = arith.constant 0 : index
    %c0_8 = arith.constant 0 : index
    %12 = vector.load %arg6[%c0_7, %c0_8] : memref<32x32xbf16, #tpu.memory_space<vmem>>, vector<32x32xbf16>
    %cst_9 = arith.constant dense<0.000000e+00> : vector<128x32xf32>
    %13 = tpu.matmul %5, %12, %cst_9 {dimension_numbers = #tpu.dot_dimension_numbers<[1], [0], [0], [1], [0, 0, 1, 1], [], []>} : vector<128x32xbf16>, vector<32x32xbf16>, vector<128x32xf32> -> vector<128x32xf32>
    %c0_10 = arith.constant 0 : index
    %c0_11 = arith.constant 0 : index
    %14 = vector.load %arg7[%c0_10, %c0_11] : memref<1x32xf32, #tpu.memory_space<vmem>>, vector<1x32xf32>
    %15 = vector.broadcast %14 : vector<1x32xf32> to vector<128x32xf32>
    %16 = arith.addf %13, %15 : vector<128x32xf32>
    %17 = arith.truncf %16 : vector<128x32xf32> to vector<128x32xbf16>
    %c128_i32 = arith.constant 128 : i32
    %18 = arith.muli %arg1, %c128_i32 : i32
    %19 = tpu.iota {dimensions = array<i32: 1>} : vector<48x128xi32>
    %20 = vector.broadcast %18 : i32 to vector<48x128xi32>
    %21 = arith.addi %20, %19 : vector<48x128xi32>
    %c16_i32 = arith.constant 16 : i32
    %22 = vector.broadcast %c16_i32 : i32 to vector<48x128xi32>
    %23 = arith.cmpi slt, %21, %22 : vector<48x128xi32>
    %c0_12 = arith.constant 0 : index
    %c0_13 = arith.constant 0 : index
    %24 = vector.load %arg2[%c0_12, %c0_13] : memref<48x32xbf16, #tpu.memory_space<vmem>>, vector<48x8xbf16>
    %25 = vector.extract_strided_slice %11 {offsets = [0, 0], sizes = [128, 8], strides = [1, 1]} : vector<128x32xbf16> to vector<128x8xbf16>
    %cst_14 = arith.constant dense<0.000000e+00> : vector<48x128xf32>
    %26 = tpu.matmul %24, %25, %cst_14 {dimension_numbers = #tpu.dot_dimension_numbers<[1], [1], [0], [0], [0, 0, 1, 0], [], []>} : vector<48x8xbf16>, vector<128x8xbf16>, vector<48x128xf32> -> vector<48x128xf32>
    %cst_15 = arith.constant 0xFF800000 : f32
    %27 = vector.broadcast %cst_15 : f32 to vector<48x128xf32>
    %28 = arith.select %23, %26, %27 : vector<48x128xi1>, vector<48x128xf32>
    %c0_16 = arith.constant 0 : index
    %c0_17 = arith.constant 0 : index
    %c0_18 = arith.constant 0 : index
    %29 = vector.load %arg11[%c0_16, %c0_17, %c0_18] : memref<4x48x1xf32, #tpu.memory_space<vmem>>, vector<1x48x1xf32>
    %30 = vector.shape_cast %29 : vector<1x48x1xf32> to vector<48x1xf32>
    %cst_19 = arith.constant dense<0xFF800000> : vector<48xf32>
    %31 = vector.multi_reduction <maximumf>, %28, %cst_19 [1] : vector<48x128xf32> to vector<48xf32>
    %32 = vector.shape_cast %31 : vector<48xf32> to vector<48x1xf32>
    %33 = arith.maximumf %30, %32 : vector<48x1xf32>
    %34 = arith.subf %30, %33 : vector<48x1xf32>
    %35 = math.exp %34 : vector<48x1xf32>
    %36 = vector.broadcast %33 : vector<48x1xf32> to vector<48x128xf32>
    %37 = arith.subf %28, %36 : vector<48x128xf32>
    %38 = math.exp %37 : vector<48x128xf32>
    %c0_20 = arith.constant 0 : index
    %c0_21 = arith.constant 0 : index
    %c0_22 = arith.constant 0 : index
    %39 = vector.load %arg12[%c0_20, %c0_21, %c0_22] : memref<4x48x1xf32, #tpu.memory_space<vmem>>, vector<1x48x1xf32>
    %40 = vector.shape_cast %39 : vector<1x48x1xf32> to vector<48x1xf32>
    %41 = arith.mulf %35, %40 : vector<48x1xf32>
    %cst_23 = arith.constant dense<0.000000e+00> : vector<48xf32>
    %42 = vector.multi_reduction <add>, %38, %cst_23 [1] : vector<48x128xf32> to vector<48xf32>
    %43 = vector.shape_cast %42 : vector<48xf32> to vector<48x1xf32>
    %44 = arith.addf %41, %43 : vector<48x1xf32>
    %c0_24 = arith.constant 0 : index
    %c0_25 = arith.constant 0 : index
    %c0_26 = arith.constant 0 : index
    %45 = vector.load %arg12[%c0_24, %c0_25, %c0_26] : memref<4x48x1xf32, #tpu.memory_space<vmem>>, vector<1x48x1xf32>
    %46 = vector.shape_cast %45 : vector<1x48x1xf32> to vector<48x1xf32>
    %47 = vector.shape_cast %44 : vector<48x1xf32> to vector<1x48x1xf32>
    tpu.vector_store %arg12[%c0_24, %c0_25, %c0_26], %47 {strides = array<i32>} : memref<4x48x1xf32, #tpu.memory_space<vmem>>, vector<1x48x1xf32>,
    %c0_27 = arith.constant 0 : index
    %c0_28 = arith.constant 0 : index
    %c0_29 = arith.constant 0 : index
    %48 = vector.load %arg11[%c0_27, %c0_28, %c0_29] : memref<4x48x1xf32, #tpu.memory_space<vmem>>, vector<1x48x1xf32>
    %49 = vector.shape_cast %48 : vector<1x48x1xf32> to vector<48x1xf32>
    %50 = vector.shape_cast %33 : vector<48x1xf32> to vector<1x48x1xf32>
    tpu.vector_store %arg11[%c0_27, %c0_28, %c0_29], %50 {strides = array<i32>} : memref<4x48x1xf32, #tpu.memory_space<vmem>>, vector<1x48x1xf32>,
    %51 = arith.truncf %38 : vector<48x128xf32> to vector<48x128xbf16>
    %52 = vector.extract_strided_slice %17 {offsets = [0, 0], sizes = [128, 8], strides = [1, 1]} : vector<128x32xbf16> to vector<128x8xbf16>
    %cst_30 = arith.constant dense<0.000000e+00> : vector<48x8xf32>
    %53 = tpu.matmul %51, %52, %cst_30 {dimension_numbers = #tpu.dot_dimension_numbers<[1], [0], [0], [1], [0, 0, 1, 1], [], []>} : vector<48x128xbf16>, vector<128x8xbf16>, vector<48x8xf32> -> vector<48x8xf32>
    %54 = vector.shape_cast %35 : vector<48x1xf32> to vector<48x1xf32>
    %55 = vector.broadcast %54 : vector<48x1xf32> to vector<48x8xf32>
    %c0_31 = arith.constant 0 : index
    %c8 = arith.constant 8 : index
    %56 = vector.load %arg2[%c0_31, %c8] : memref<48x32xbf16, #tpu.memory_space<vmem>>, vector<48x8xbf16>
    %57 = vector.extract_strided_slice %11 {offsets = [0, 8], sizes = [128, 8], strides = [1, 1]} : vector<128x32xbf16> to vector<128x8xbf16>
    %cst_32 = arith.constant dense<0.000000e+00> : vector<48x128xf32>
    %58 = tpu.matmul %56, %57, %cst_32 {dimension_numbers = #tpu.dot_dimension_numbers<[1], [1], [0], [0], [0, 0, 1, 0], [], []>} : vector<48x8xbf16>, vector<128x8xbf16>, vector<48x128xf32> -> vector<48x128xf32>
    %cst_33 = arith.constant 0xFF800000 : f32
    %59 = vector.broadcast %cst_33 : f32 to vector<48x128xf32>
    %60 = arith.select %23, %58, %59 : vector<48x128xi1>, vector<48x128xf32>
    %c1 = arith.constant 1 : index
    %c0_34 = arith.constant 0 : index
    %c0_35 = arith.constant 0 : index
    %61 = vector.load %arg11[%c1, %c0_34, %c0_35] : memref<4x48x1xf32, #tpu.memory_space<vmem>>, vector<1x48x1xf32>
    %62 = vector.shape_cast %61 : vector<1x48x1xf32> to vector<48x1xf32>
    %cst_36 = arith.constant dense<0xFF800000> : vector<48xf32>
    %63 = vector.multi_reduction <maximumf>, %60, %cst_36 [1] : vector<48x128xf32> to vector<48xf32>
    %64 = vector.shape_cast %63 : vector<48xf32> to vector<48x1xf32>
    %65 = arith.maximumf %62, %64 : vector<48x1xf32>
    %66 = arith.subf %62, %65 : vector<48x1xf32>
    %67 = math.exp %66 : vector<48x1xf32>
    %68 = vector.broadcast %65 : vector<48x1xf32> to vector<48x128xf32>
    %69 = arith.subf %60, %68 : vector<48x128xf32>
    %70 = math.exp %69 : vector<48x128xf32>
    %c1_37 = arith.constant 1 : index
    %c0_38 = arith.constant 0 : index
    %c0_39 = arith.constant 0 : index
    %71 = vector.load %arg12[%c1_37, %c0_38, %c0_39] : memref<4x48x1xf32, #tpu.memory_space<vmem>>, vector<1x48x1xf32>
    %72 = vector.shape_cast %71 : vector<1x48x1xf32> to vector<48x1xf32>
    %73 = arith.mulf %67, %72 : vector<48x1xf32>
    %cst_40 = arith.constant dense<0.000000e+00> : vector<48xf32>
    %74 = vector.multi_reduction <add>, %70, %cst_40 [1] : vector<48x128xf32> to vector<48xf32>
    %75 = vector.shape_cast %74 : vector<48xf32> to vector<48x1xf32>
    %76 = arith.addf %73, %75 : vector<48x1xf32>
    %c1_41 = arith.constant 1 : index
    %c0_42 = arith.constant 0 : index
    %c0_43 = arith.constant 0 : index
    %77 = vector.load %arg12[%c1_41, %c0_42, %c0_43] : memref<4x48x1xf32, #tpu.memory_space<vmem>>, vector<1x48x1xf32>
    %78 = vector.shape_cast %77 : vector<1x48x1xf32> to vector<48x1xf32>
    %79 = vector.shape_cast %76 : vector<48x1xf32> to vector<1x48x1xf32>
    tpu.vector_store %arg12[%c1_41, %c0_42, %c0_43], %79 {strides = array<i32>} : memref<4x48x1xf32, #tpu.memory_space<vmem>>, vector<1x48x1xf32>,
    %c1_44 = arith.constant 1 : index
    %c0_45 = arith.constant 0 : index
    %c0_46 = arith.constant 0 : index
    %80 = vector.load %arg11[%c1_44, %c0_45, %c0_46] : memref<4x48x1xf32, #tpu.memory_space<vmem>>, vector<1x48x1xf32>
    %81 = vector.shape_cast %80 : vector<1x48x1xf32> to vector<48x1xf32>
    %82 = vector.shape_cast %65 : vector<48x1xf32> to vector<1x48x1xf32>
    tpu.vector_store %arg11[%c1_44, %c0_45, %c0_46], %82 {strides = array<i32>} : memref<4x48x1xf32, #tpu.memory_space<vmem>>, vector<1x48x1xf32>,
    %83 = arith.truncf %70 : vector<48x128xf32> to vector<48x128xbf16>
    %84 = vector.extract_strided_slice %17 {offsets = [0, 8], sizes = [128, 8], strides = [1, 1]} : vector<128x32xbf16> to vector<128x8xbf16>
    %cst_47 = arith.constant dense<0.000000e+00> : vector<48x8xf32>
    %85 = tpu.matmul %83, %84, %cst_47 {dimension_numbers = #tpu.dot_dimension_numbers<[1], [0], [0], [1], [0, 0, 1, 1], [], []>} : vector<48x128xbf16>, vector<128x8xbf16>, vector<48x8xf32> -> vector<48x8xf32>
    %86 = vector.shape_cast %67 : vector<48x1xf32> to vector<48x1xf32>
    %87 = vector.broadcast %86 : vector<48x1xf32> to vector<48x8xf32>
    %c0_48 = arith.constant 0 : index
    %c16 = arith.constant 16 : index
    %88 = vector.load %arg2[%c0_48, %c16] : memref<48x32xbf16, #tpu.memory_space<vmem>>, vector<48x8xbf16>
    %89 = vector.extract_strided_slice %11 {offsets = [0, 16], sizes = [128, 8], strides = [1, 1]} : vector<128x32xbf16> to vector<128x8xbf16>
    %cst_49 = arith.constant dense<0.000000e+00> : vector<48x128xf32>
    %90 = tpu.matmul %88, %89, %cst_49 {dimension_numbers = #tpu.dot_dimension_numbers<[1], [1], [0], [0], [0, 0, 1, 0], [], []>} : vector<48x8xbf16>, vector<128x8xbf16>, vector<48x128xf32> -> vector<48x128xf32>
    %cst_50 = arith.constant 0xFF800000 : f32
    %91 = vector.broadcast %cst_50 : f32 to vector<48x128xf32>
    %92 = arith.select %23, %90, %91 : vector<48x128xi1>, vector<48x128xf32>
    %c2 = arith.constant 2 : index
    %c0_51 = arith.constant 0 : index
    %c0_52 = arith.constant 0 : index
    %93 = vector.load %arg11[%c2, %c0_51, %c0_52] : memref<4x48x1xf32, #tpu.memory_space<vmem>>, vector<1x48x1xf32>
    %94 = vector.shape_cast %93 : vector<1x48x1xf32> to vector<48x1xf32>
    %cst_53 = arith.constant dense<0xFF800000> : vector<48xf32>
    %95 = vector.multi_reduction <maximumf>, %92, %cst_53 [1] : vector<48x128xf32> to vector<48xf32>
    %96 = vector.shape_cast %95 : vector<48xf32> to vector<48x1xf32>
    %97 = arith.maximumf %94, %96 : vector<48x1xf32>
    %98 = arith.subf %94, %97 : vector<48x1xf32>
    %99 = math.exp %98 : vector<48x1xf32>
    %100 = vector.broadcast %97 : vector<48x1xf32> to vector<48x128xf32>
    %101 = arith.subf %92, %100 : vector<48x128xf32>
    %102 = math.exp %101 : vector<48x128xf32>
    %c2_54 = arith.constant 2 : index
    %c0_55 = arith.constant 0 : index
    %c0_56 = arith.constant 0 : index
    %103 = vector.load %arg12[%c2_54, %c0_55, %c0_56] : memref<4x48x1xf32, #tpu.memory_space<vmem>>, vector<1x48x1xf32>
    %104 = vector.shape_cast %103 : vector<1x48x1xf32> to vector<48x1xf32>
    %105 = arith.mulf %99, %104 : vector<48x1xf32>
    %cst_57 = arith.constant dense<0.000000e+00> : vector<48xf32>
    %106 = vector.multi_reduction <add>, %102, %cst_57 [1] : vector<48x128xf32> to vector<48xf32>
    %107 = vector.shape_cast %106 : vector<48xf32> to vector<48x1xf32>
    %108 = arith.addf %105, %107 : vector<48x1xf32>
    %c2_58 = arith.constant 2 : index
    %c0_59 = arith.constant 0 : index
    %c0_60 = arith.constant 0 : index
    %109 = vector.load %arg12[%c2_58, %c0_59, %c0_60] : memref<4x48x1xf32, #tpu.memory_space<vmem>>, vector<1x48x1xf32>
    %110 = vector.shape_cast %109 : vector<1x48x1xf32> to vector<48x1xf32>
    %111 = vector.shape_cast %108 : vector<48x1xf32> to vector<1x48x1xf32>
    tpu.vector_store %arg12[%c2_58, %c0_59, %c0_60], %111 {strides = array<i32>} : memref<4x48x1xf32, #tpu.memory_space<vmem>>, vector<1x48x1xf32>,
    %c2_61 = arith.constant 2 : index
    %c0_62 = arith.constant 0 : index
    %c0_63 = arith.constant 0 : index
    %112 = vector.load %arg11[%c2_61, %c0_62, %c0_63] : memref<4x48x1xf32, #tpu.memory_space<vmem>>, vector<1x48x1xf32>
    %113 = vector.shape_cast %112 : vector<1x48x1xf32> to vector<48x1xf32>
    %114 = vector.shape_cast %97 : vector<48x1xf32> to vector<1x48x1xf32>
    tpu.vector_store %arg11[%c2_61, %c0_62, %c0_63], %114 {strides = array<i32>} : memref<4x48x1xf32, #tpu.memory_space<vmem>>, vector<1x48x1xf32>,
    %115 = arith.truncf %102 : vector<48x128xf32> to vector<48x128xbf16>
    %116 = vector.extract_strided_slice %17 {offsets = [0, 16], sizes = [128, 8], strides = [1, 1]} : vector<128x32xbf16> to vector<128x8xbf16>
    %cst_64 = arith.constant dense<0.000000e+00> : vector<48x8xf32>
    %117 = tpu.matmul %115, %116, %cst_64 {dimension_numbers = #tpu.dot_dimension_numbers<[1], [0], [0], [1], [0, 0, 1, 1], [], []>} : vector<48x128xbf16>, vector<128x8xbf16>, vector<48x8xf32> -> vector<48x8xf32>
    %118 = vector.shape_cast %99 : vector<48x1xf32> to vector<48x1xf32>
    %119 = vector.broadcast %118 : vector<48x1xf32> to vector<48x8xf32>
    %c0_65 = arith.constant 0 : index
    %c24 = arith.constant 24 : index
    %120 = vector.load %arg2[%c0_65, %c24] : memref<48x32xbf16, #tpu.memory_space<vmem>>, vector<48x8xbf16>
    %121 = vector.extract_strided_slice %11 {offsets = [0, 24], sizes = [128, 8], strides = [1, 1]} : vector<128x32xbf16> to vector<128x8xbf16>
    %cst_66 = arith.constant dense<0.000000e+00> : vector<48x128xf32>
    %122 = tpu.matmul %120, %121, %cst_66 {dimension_numbers = #tpu.dot_dimension_numbers<[1], [1], [0], [0], [0, 0, 1, 0], [], []>} : vector<48x8xbf16>, vector<128x8xbf16>, vector<48x128xf32> -> vector<48x128xf32>
    %cst_67 = arith.constant 0xFF800000 : f32
    %123 = vector.broadcast %cst_67 : f32 to vector<48x128xf32>
    %124 = arith.select %23, %122, %123 : vector<48x128xi1>, vector<48x128xf32>
    %c3 = arith.constant 3 : index
    %c0_68 = arith.constant 0 : index
    %c0_69 = arith.constant 0 : index
    %125 = vector.load %arg11[%c3, %c0_68, %c0_69] : memref<4x48x1xf32, #tpu.memory_space<vmem>>, vector<1x48x1xf32>
    %126 = vector.shape_cast %125 : vector<1x48x1xf32> to vector<48x1xf32>
    %cst_70 = arith.constant dense<0xFF800000> : vector<48xf32>
    %127 = vector.multi_reduction <maximumf>, %124, %cst_70 [1] : vector<48x128xf32> to vector<48xf32>
    %128 = vector.shape_cast %127 : vector<48xf32> to vector<48x1xf32>
    %129 = arith.maximumf %126, %128 : vector<48x1xf32>
    %130 = arith.subf %126, %129 : vector<48x1xf32>
    %131 = math.exp %130 : vector<48x1xf32>
    %132 = vector.broadcast %129 : vector<48x1xf32> to vector<48x128xf32>
    %133 = arith.subf %124, %132 : vector<48x128xf32>
    %134 = math.exp %133 : vector<48x128xf32>
    %c3_71 = arith.constant 3 : index
    %c0_72 = arith.constant 0 : index
    %c0_73 = arith.constant 0 : index
    %135 = vector.load %arg12[%c3_71, %c0_72, %c0_73] : memref<4x48x1xf32, #tpu.memory_space<vmem>>, vector<1x48x1xf32>
    %136 = vector.shape_cast %135 : vector<1x48x1xf32> to vector<48x1xf32>
    %137 = arith.mulf %131, %136 : vector<48x1xf32>
    %cst_74 = arith.constant dense<0.000000e+00> : vector<48xf32>
    %138 = vector.multi_reduction <add>, %134, %cst_74 [1] : vector<48x128xf32> to vector<48xf32>
    %139 = vector.shape_cast %138 : vector<48xf32> to vector<48x1xf32>
    %140 = arith.addf %137, %139 : vector<48x1xf32>
    %c3_75 = arith.constant 3 : index
    %c0_76 = arith.constant 0 : index
    %c0_77 = arith.constant 0 : index
    %141 = vector.load %arg12[%c3_75, %c0_76, %c0_77] : memref<4x48x1xf32, #tpu.memory_space<vmem>>, vector<1x48x1xf32>
    %142 = vector.shape_cast %141 : vector<1x48x1xf32> to vector<48x1xf32>
    %143 = vector.shape_cast %140 : vector<48x1xf32> to vector<1x48x1xf32>
    tpu.vector_store %arg12[%c3_75, %c0_76, %c0_77], %143 {strides = array<i32>} : memref<4x48x1xf32, #tpu.memory_space<vmem>>, vector<1x48x1xf32>,
    %c3_78 = arith.constant 3 : index
    %c0_79 = arith.constant 0 : index
    %c0_80 = arith.constant 0 : index
    %144 = vector.load %arg11[%c3_78, %c0_79, %c0_80] : memref<4x48x1xf32, #tpu.memory_space<vmem>>, vector<1x48x1xf32>
    %145 = vector.shape_cast %144 : vector<1x48x1xf32> to vector<48x1xf32>
    %146 = vector.shape_cast %129 : vector<48x1xf32> to vector<1x48x1xf32>
    tpu.vector_store %arg11[%c3_78, %c0_79, %c0_80], %146 {strides = array<i32>} : memref<4x48x1xf32, #tpu.memory_space<vmem>>, vector<1x48x1xf32>,
    %147 = arith.truncf %134 : vector<48x128xf32> to vector<48x128xbf16>
    %148 = vector.extract_strided_slice %17 {offsets = [0, 24], sizes = [128, 8], strides = [1, 1]} : vector<128x32xbf16> to vector<128x8xbf16>
    %cst_81 = arith.constant dense<0.000000e+00> : vector<48x8xf32>
    %149 = tpu.matmul %147, %148, %cst_81 {dimension_numbers = #tpu.dot_dimension_numbers<[1], [0], [0], [1], [0, 0, 1, 1], [], []>} : vector<48x128xbf16>, vector<128x8xbf16>, vector<48x8xf32> -> vector<48x8xf32>
    %150 = vector.shape_cast %131 : vector<48x1xf32> to vector<48x1xf32>
    %151 = vector.broadcast %150 : vector<48x1xf32> to vector<48x8xf32>
    %152 = tpu.concatenate %55, %87, %119, %151 in 1 : vector<48x8xf32>, vector<48x8xf32>, vector<48x8xf32>, vector<48x8xf32> -> vector<48x32xf32>
    %c0_82 = arith.constant 0 : index
    %c0_83 = arith.constant 0 : index
    %153 = vector.load %arg13[%c0_82, %c0_83] : memref<48x32xf32, #tpu.memory_space<vmem>>, vector<48x32xf32>
    %154 = arith.mulf %152, %153 : vector<48x32xf32>
    %155 = tpu.concatenate %53, %85, %117, %149 in 1 : vector<48x8xf32>, vector<48x8xf32>, vector<48x8xf32>, vector<48x8xf32> -> vector<48x32xf32>
    %156 = arith.addf %154, %155 : vector<48x32xf32>
    %c0_84 = arith.constant 0 : index
    %c0_85 = arith.constant 0 : index
    %157 = vector.load %arg13[%c0_84, %c0_85] : memref<48x32xf32, #tpu.memory_space<vmem>>, vector<48x32xf32>
    tpu.vector_store %arg13[%c0_84, %c0_85], %156 {strides = array<i32>} : memref<48x32xf32, #tpu.memory_space<vmem>>, vector<48x32xf32>,
    %c0_i32_86 = arith.constant 0 : i32
    %158 = arith.cmpi eq, %arg1, %c0_i32_86 : i32
    %159 = arith.extui %158 : i1 to i32
    %c0_i32_87 = arith.constant 0 : i32
    %160 = arith.cmpi ne, %159, %c0_i32_87 : i32
    scf.if %160 {
      %c0_88 = arith.constant 0 : index
      %c0_89 = arith.constant 0 : index
      %c0_90 = arith.constant 0 : index
      %161 = vector.load %arg12[%c0_88, %c0_89, %c0_90] : memref<4x48x1xf32, #tpu.memory_space<vmem>>, vector<1x48x1xf32>
      %162 = vector.shape_cast %161 : vector<1x48x1xf32> to vector<48x1xf32>
      %163 = vector.shape_cast %162 : vector<48x1xf32> to vector<48x1xf32>
      %164 = vector.broadcast %163 : vector<48x1xf32> to vector<48x8xf32>
      %c1_91 = arith.constant 1 : index
      %c0_92 = arith.constant 0 : index
      %c0_93 = arith.constant 0 : index
      %165 = vector.load %arg12[%c1_91, %c0_92, %c0_93] : memref<4x48x1xf32, #tpu.memory_space<vmem>>, vector<1x48x1xf32>
      %166 = vector.shape_cast %165 : vector<1x48x1xf32> to vector<48x1xf32>
      %167 = vector.shape_cast %166 : vector<48x1xf32> to vector<48x1xf32>
      %168 = vector.broadcast %167 : vector<48x1xf32> to vector<48x8xf32>
      %c2_94 = arith.constant 2 : index
      %c0_95 = arith.constant 0 : index
      %c0_96 = arith.constant 0 : index
      %169 = vector.load %arg12[%c2_94, %c0_95, %c0_96] : memref<4x48x1xf32, #tpu.memory_space<vmem>>, vector<1x48x1xf32>
      %170 = vector.shape_cast %169 : vector<1x48x1xf32> to vector<48x1xf32>
      %171 = vector.shape_cast %170 : vector<48x1xf32> to vector<48x1xf32>
      %172 = vector.broadcast %171 : vector<48x1xf32> to vector<48x8xf32>
      %c3_97 = arith.constant 3 : index
      %c0_98 = arith.constant 0 : index
      %c0_99 = arith.constant 0 : index
      %173 = vector.load %arg12[%c3_97, %c0_98, %c0_99] : memref<4x48x1xf32, #tpu.memory_space<vmem>>, vector<1x48x1xf32>
      %174 = vector.shape_cast %173 : vector<1x48x1xf32> to vector<48x1xf32>
      %175 = vector.shape_cast %174 : vector<48x1xf32> to vector<48x1xf32>
      %176 = vector.broadcast %175 : vector<48x1xf32> to vector<48x8xf32>
      %177 = tpu.concatenate %164, %168, %172, %176 in 1 : vector<48x8xf32>, vector<48x8xf32>, vector<48x8xf32>, vector<48x8xf32> -> vector<48x32xf32>
      %c0_100 = arith.constant 0 : index
      %c0_101 = arith.constant 0 : index
      %178 = vector.load %arg13[%c0_100, %c0_101] : memref<48x32xf32, #tpu.memory_space<vmem>>, vector<48x32xf32>
      %179 = tpu.reciprocal %177 : vector<48x32xf32> -> vector<48x32xf32>
      %180 = arith.mulf %178, %179 : vector<48x32xf32>
      %181 = arith.truncf %180 : vector<48x32xf32> to vector<48x32xbf16>
      %c0_102 = arith.constant 0 : index
      %c0_103 = arith.constant 0 : index
      %182 = vector.load %arg8[%c0_102, %c0_103] : memref<32x32xbf16, #tpu.memory_space<vmem>>, vector<32x32xbf16>
      %cst_104 = arith.constant dense<0.000000e+00> : vector<48x32xf32>
      %183 = tpu.matmul %181, %182, %cst_104 {dimension_numbers = #tpu.dot_dimension_numbers<[1], [0], [0], [1], [0, 0, 1, 1], [], []>} : vector<48x32xbf16>, vector<32x32xbf16>, vector<48x32xf32> -> vector<48x32xf32>
      %c0_105 = arith.constant 0 : index
      %c0_106 = arith.constant 0 : index
      %184 = vector.load %arg9[%c0_105, %c0_106] : memref<1x32xf32, #tpu.memory_space<vmem>>, vector<1x32xf32>
      %185 = vector.broadcast %184 : vector<1x32xf32> to vector<48x32xf32>
      %186 = arith.addf %183, %185 : vector<48x32xf32>
      %c0_107 = arith.constant 0 : index
      %c0_108 = arith.constant 0 : index
      %c0_109 = arith.constant 0 : index
      %187 = vector.load %arg10[%c0_107, %c0_108, %c0_109] : memref<1x48x32xf32, #tpu.memory_space<vmem>>, vector<1x48x32xf32>
      %188 = vector.shape_cast %187 : vector<1x48x32xf32> to vector<48x32xf32>
      %189 = vector.shape_cast %186 : vector<48x32xf32> to vector<1x48x32xf32>
      tpu.vector_store %arg10[%c0_107, %c0_108, %c0_109], %189 {strides = array<i32>} : memref<1x48x32xf32, #tpu.memory_space<vmem>>, vector<1x48x32xf32>,
    } else {
    }
    return
  }
  func.func @transform_0(%arg0: i32, %arg1: i32) -> (i32, i32) {
    %c0_i32 = arith.constant 0 : i32
    %c0_i32_0 = arith.constant 0 : i32
    %c0_i32_1 = arith.constant 0 : i32
    return %c0_i32, %c0_i32_0 : i32, i32
  }
  func.func @transform_1(%arg0: i32, %arg1: i32) -> (i32, i32, i32) {
    %c0_i32 = arith.constant 0 : i32
    %c0_i32_0 = arith.constant 0 : i32
    return %arg0, %arg1, %c0_i32 : i32, i32, i32
  }
  func.func @transform_2(%arg0: i32, %arg1: i32) -> (i32, i32) {
    %c0_i32 = arith.constant 0 : i32
    %c0_i32_0 = arith.constant 0 : i32
    %c0_i32_1 = arith.constant 0 : i32
    return %c0_i32, %c0_i32_0 : i32, i32
  }
  func.func @transform_3(%arg0: i32, %arg1: i32) -> (i32, i32) {
    %c0_i32 = arith.constant 0 : i32
    %c0_i32_0 = arith.constant 0 : i32
    %c0_i32_1 = arith.constant 0 : i32
    return %c0_i32, %c0_i32_0 : i32, i32
  }
  func.func @transform_4(%arg0: i32, %arg1: i32) -> (i32, i32) {
    %c0_i32 = arith.constant 0 : i32
    %c0_i32_0 = arith.constant 0 : i32
    %c0_i32_1 = arith.constant 0 : i32
    return %c0_i32, %c0_i32_0 : i32, i32
  }
  func.func @transform_5(%arg0: i32, %arg1: i32) -> (i32, i32) {
    %c0_i32 = arith.constant 0 : i32
    %c0_i32_0 = arith.constant 0 : i32
    %c0_i32_1 = arith.constant 0 : i32
    return %c0_i32, %c0_i32_0 : i32, i32
  }
  func.func @transform_6(%arg0: i32, %arg1: i32) -> (i32, i32) {
    %c0_i32 = arith.constant 0 : i32
    %c0_i32_0 = arith.constant 0 : i32
    %c0_i32_1 = arith.constant 0 : i32
    return %c0_i32, %c0_i32_0 : i32, i32
  }
  func.func @transform_7(%arg0: i32, %arg1: i32) -> (i32, i32) {
    %c0_i32 = arith.constant 0 : i32
    %c0_i32_0 = arith.constant 0 : i32
    %c0_i32_1 = arith.constant 0 : i32
    return %c0_i32, %c0_i32_0 : i32, i32
  }
  func.func @transform_8(%arg0: i32, %arg1: i32) -> (i32, i32, i32) {
    %c0_i32 = arith.constant 0 : i32
    %c0_i32_0 = arith.constant 0 : i32
    %c0_i32_1 = arith.constant 0 : i32
    return %arg0, %c0_i32, %c0_i32_0 : i32, i32, i32
  }
}

</mosaic_0001>

<llo_original>
// kernel: attention_dec_forward.5
$region0: #{attention_dec_forward.5}
  #allocation0 [shape = 'u32[]', space=smem, size = 0x4, offset = 0x4, fixed_abs, tag = 'smem constant byte address 0x4 - core index']
  #allocation1 [shape = 'u32[144,128]{1,0:T(1,128)}', space=vmem, size = 0x12000, scoped, tag = 'internal scratch']
  %s0 = inlined_call_operand.vmem [shape: s32[16,1], index: 0, kind: input, shape index: {}]
  %s1 = inlined_call_operand.hbm [shape: f32[2,48,32], index: 1, kind: input, shape index: {}]
  %s2 = inlined_call_operand.hbm [shape: f32[2,16,32], index: 2, kind: output, shape index: {}]
  %s3 = sld [smem:[#allocation0]]
  $region45: #{attention_dec_forward.5} parent=0
    _
  %s5 = ssub.s32 1, %s3
  %s6 = scalar_select 0, %s5, %s3
  $region1: #{attention_dec_forward.5} parent=0
    #allocation2 [shape = 'u8[49152]{0}', space=vmem, size = 0xc000, scoped, tag = 'input window, operand 1']
    #allocation3 [shape = 's32[2]{0}', space=sflag, size = 0x8, scoped, tag = 'scoped memory for attention_dec_forward.5']
    #allocation4 [shape = 's32[2]{0}', space=sflag, size = 0x8, scoped, tag = 'scoped memory for attention_dec_forward.5']
    #allocation5 [shape = 'u8[16384]{0}', space=vmem, size = 0x4000, scoped, tag = 'output window, operand 0']
    %7 = vsyncpa [#allocation3], 0
    %s8 = scalar_lea.sflag [#allocation3], 1
    %9 = vsyncpa %s8, 0
    %10 = vsyncpa [#allocation4], 0
    %s11 = scalar_lea.sflag [#allocation4], 1
    %12 = vsyncpa %s11, 0
    loop: start=0, step=1, limit=4
    $region2: #{attention_dec_forward.5} parent=1 // loop_pre_header
      _
    $region3: #{attention_dec_forward.5} parent=1 // loop_header
      %s14 = sphi 0, %s18
      %p15 = scmp.ge.s32.totalorder %s14, 4
      %s21 = sphi 0, %s33
      %s22 = sphi 0, %s29
      %s23 = sphi 0, %s21
      %s24 = sphi 0, %s22
      %s25 = sphi 0, %s23
      %s26 = sphi 0, %s24
      %s36 = sphi 0, %s38
      %s39 = sphi 0, %s36
      %s40 = sphi 0, %s39
      %s56 = sphi 0, %s40
      %s62 = sphi 0, %s64
      %s65 = sphi 0, %s62
      %s66 = sphi 0, %s65
      %s82 = sphi 0, %s66
      %s90 = sphi 0, %s92
      %s93 = sphi 0, %s90
      %s94 = sphi 0, %s93
      %s110 = sphi 0, %s94
    $region4: #{attention_dec_forward.5} parent=1 // loop_header_branch
      %17 = sbr.rel (%p15) target = $region8
    $region5: #{attention_dec_forward.5} parent=1 // loop_body
      %s19 = ssub.s32 %s14, 1
      %s20 = ssub.s32 %s14, 2
      %s27 = sadd.s32 1, %s22
      %p28 = scmp.ge.s32.totalorder %s27, 1
      %s29 = scalar_select %p28, 0, %s27
      %s30 = sadd.s32 1, %s21
      %s31 = scalar_select %p28, %s30, %s21
      %p32 = scmp.ge.s32.totalorder %s31, 2
      %s33 = scalar_select %p32, 0, %s31
      %s34 = ssub.s32 %s22, %s29
      %p35 = scmp.eq.s32.totalorder %s34, 0
      %s37 = sadd.s32 %s36, 1
      %s38 = scalar_select %p35, %s36, %s37
      %p41 = pneg %p35
      %p42 = scmp.eq.s32.totalorder %s14, 1
      %p43 = por %p41, %p42
      %p44 = scmp.ne.s32.totalorder %s36, %s39
      %p45 = scmp.eq.s32.totalorder %s14, 0
      %p46 = por %p44, %p45
      %p47 = scmp.ne.s32.totalorder %s36, %s39
      %p48 = scmp.eq.s32.totalorder %s19, 1
      %p49 = por %p47, %p48
      %p50 = scmp.ne.s32.totalorder %s39, %s40
      %p51 = scmp.eq.s32.totalorder %s19, 0
      %p52 = por %p50, %p51
      %p53 = scmp.ne.s32.totalorder %s39, %s40
      %p54 = scmp.eq.s32.totalorder %s20, 1
      %p55 = por %p53, %p54
      %p57 = scmp.ne.s32.totalorder %s40, %s56
      %p58 = scmp.eq.s32.totalorder %s20, 0
      %p59 = por %p57, %p58
      %s60 = ssub.s32 %s21, %s33
      %p61 = scmp.eq.s32.totalorder %s60, 0
      %s63 = sadd.s32 %s62, 1
      %s64 = scalar_select %p61, %s62, %s63
      %p67 = pneg %p61
      %p68 = scmp.eq.s32.totalorder %s14, 1
      %p69 = por %p67, %p68
      %p70 = scmp.ne.s32.totalorder %s62, %s65
      %p71 = scmp.eq.s32.totalorder %s14, 0
      %p72 = por %p70, %p71
      %p73 = scmp.ne.s32.totalorder %s62, %s65
      %p74 = scmp.eq.s32.totalorder %s19, 1
      %p75 = por %p73, %p74
      %p76 = scmp.ne.s32.totalorder %s65, %s66
      %p77 = scmp.eq.s32.totalorder %s19, 0
      %p78 = por %p76, %p77
      %p79 = scmp.ne.s32.totalorder %s65, %s66
      %p80 = scmp.eq.s32.totalorder %s20, 1
      %p81 = por %p79, %p80
      %p83 = scmp.ne.s32.totalorder %s66, %s82
      %p84 = scmp.eq.s32.totalorder %s20, 0
      %p85 = por %p83, %p84
      %s86 = ssub.s32 %s21, %s33
      %s87 = ssub.s32 %s22, %s29
      %s88 = sor.u32 %s86, %s87
      %p89 = scmp.eq.s32.totalorder %s88, 0
      %s91 = sadd.s32 %s90, 1
      %s92 = scalar_select %p89, %s90, %s91
      %p95 = pneg %p89
      %p96 = scmp.eq.s32.totalorder %s14, 1
      %p97 = por %p95, %p96
      %p98 = scmp.ne.s32.totalorder %s90, %s93
      %p99 = scmp.eq.s32.totalorder %s14, 0
      %p100 = por %p98, %p99
      %p101 = scmp.ne.s32.totalorder %s90, %s93
      %p102 = scmp.eq.s32.totalorder %s19, 1
      %p103 = por %p101, %p102
      %p104 = scmp.ne.s32.totalorder %s93, %s94
      %p105 = scmp.eq.s32.totalorder %s19, 0
      %p106 = por %p104, %p105
      %p107 = scmp.ne.s32.totalorder %s93, %s94
      %p108 = scmp.eq.s32.totalorder %s20, 1
      %p109 = por %p107, %p108
      %p111 = scmp.ne.s32.totalorder %s94, %s110
      %p112 = scmp.eq.s32.totalorder %s20, 0
      %p113 = por %p111, %p112
      %p114 = scmp.le.s32.totalorder 1, %s14
      %p115 = scmp.lt.s32.totalorder %s14, 3
      %p116 = pnand %p114, %p115
      %p117 = pneg %p116
      // Predicated region
      $region9: #{attention_dec_forward.5} parent=5 // pred_check
        _
      $region10: #{attention_dec_forward.5} parent=5 // pred_check_branch
        %119 = sbr.rel (%p116) target = $region12
      $region11: #{attention_dec_forward.5} parent=5 // pred_region
        %s120 = ssub.s32 %s14, 1
        // Predicated region
        $region13: #{attention_dec_forward.5} parent=11 // pred_check
          %p121 = pneg %p52
        $region14: #{attention_dec_forward.5} parent=11 // pred_check_branch
          %123 = sbr.rel (%p121) target = $region16
        $region15: #{attention_dec_forward.5} parent=11 // pred_region
          %s124 = smul.u32 2, %s24
          %p125 = scmp.lt.s32.totalorder %s124, 1
          %s126 = scalar_select %p125, %s124, 1
          %s127 = smul.addr %s126, 8
          %s128 = scalar_lea.vmem %s0, %s127
          %s129 = smul.u32 2, %s24
        $region16: #{attention_dec_forward.5} parent=11 // pred_fallthru
          _
      $region12: #{attention_dec_forward.5} parent=5 // pred_fallthru
        _
      %p130 = scmp.lt.s32.totalorder %s14, 2
      // Predicated region
      $region17: #{attention_dec_forward.5} parent=5 // pred_check
        %p131 = pneg %p130
      $region18: #{attention_dec_forward.5} parent=5 // pred_check_branch
        %133 = sbr.rel (%p131) target = $region20
      $region19: #{attention_dec_forward.5} parent=5 // pred_region
        // Predicated region
        $region21: #{attention_dec_forward.5} parent=19 // pred_check
          %p134 = pneg %p72
        $region22: #{attention_dec_forward.5} parent=19 // pred_check_branch
          %136 = sbr.rel (%p134) target = $region24
        $region23: #{attention_dec_forward.5} parent=19 // pred_region
          %s137 = sand.u32 %s62, 1
          %s138 = scalar_lea.sflag [#allocation3], %s137
          %s139 = sand.u32 %s62, 1
          %s140 = smul.addr %s139, 48
          %s141 = scalar_lea.vmem [#allocation2], %s140
          %s143 = ssub.s32 768, 768
          %144 = vsyncadd %s138, %s143
          %s145 = smul.addr %s21, 6
          %s146 = smul.addr %s145, 128
          %s147 = scalar_lea.hbm %s1, %s146
          %s148 = sshll.u32 %s141, 4
          %s149 = int_to_ptr.vmem [resolvable:$true] %s148
          %154 = dma.hbm_to_vmem [thread:$0]  %s147, 768, %s149, %s138, 128, 128, 8
        $region24: #{attention_dec_forward.5} parent=19 // pred_fallthru
          _
      $region20: #{attention_dec_forward.5} parent=5 // pred_fallthru
        _
      %p155 = scmp.le.s32.totalorder 1, %s14
      %p156 = scmp.lt.s32.totalorder %s14, 3
      %p157 = pnand %p155, %p156
      %p158 = pneg %p157
      // Predicated region
      $region25: #{attention_dec_forward.5} parent=5 // pred_check
        _
      $region26: #{attention_dec_forward.5} parent=5 // pred_check_branch
        %160 = sbr.rel (%p157) target = $region28
      $region27: #{attention_dec_forward.5} parent=5 // pred_region
        %s161 = ssub.s32 %s14, 1
        %s162 = sand.u32 %s65, 1
        %s163 = scalar_lea.sflag [#allocation3], %s162
        %s164 = sand.u32 %s65, 1
        %s165 = smul.addr %s164, 48
        %s166 = scalar_lea.vmem [#allocation2], %s165
        // Predicated region
        $region29: #{attention_dec_forward.5} parent=27 // pred_check
          %p167 = pneg %p78
        $region30: #{attention_dec_forward.5} parent=27 // pred_check_branch
          %169 = sbr.rel (%p167) target = $region32
        $region31: #{attention_dec_forward.5} parent=27 // pred_region
          %170 = dma.done %s163, 768
        $region32: #{attention_dec_forward.5} parent=27 // pred_fallthru
          _
        %s171 = smul.u32 2, %s24
        %p172 = scmp.lt.s32.totalorder %s171, 1
        %s173 = scalar_select %p172, %s171, 1
        %s174 = smul.addr %s173, 8
        %s175 = scalar_lea.vmem %s0, %s174
        %p176 = pneg %p52
        %p177 = pneg %p49
        %s178 = sand.u32 %s65, 1
        %s179 = scalar_lea.sflag [#allocation3], %s178
        %s180 = sand.u32 %s65, 1
        %s181 = smul.addr %s180, 48
        %s182 = scalar_lea.vmem [#allocation2], %s181
        %p183 = pneg %p78
        %p184 = pneg %p75
        %p185 = pneg %p106
        %p186 = pneg %p103
        %s187 = sand.u32 %s93, 1
        %s188 = scalar_lea.sflag [#allocation4], %s187
        %s189 = sand.u32 %s93, 1
        %s190 = smul.addr %s189, 16
        %s191 = scalar_lea.vmem [#allocation5], %s190
        %s192 = smul.u32 2, %s24
        %p193 = scmp.lt.s32.totalorder %s192, 1
        %s194 = scalar_select %p193, %s192, 1
        %s195 = smul.addr %s194, 8
        %s196 = scalar_lea.vmem %s0, %s195
        %s197 = smul.u32 2, %s24
        %s198 = smul.u32 2, %s24
        %v199 = vld [vmem:[%s196] sm:$0xff]
        %v200 = vld [vmem:[%s196 + $0x8] sm:$0xff]
        %v201 = vlaneseq
        %v202 = vand.u32 %v201, 127
        %203 = vset.pattern.permute.xlu0 0
        %204 = vperm.xlu0 %203, %v199
        %v205 = vpop.permute.xlu0 %204
        %206 = vset.pattern.permute.xlu0 0
        %207 = vperm.xlu0 %206, %v200
        %v208 = vpop.permute.xlu0 %207
        %vm209 = vcmp.eq.s32.totalorder %v202, %v205
        %vm210 = vcmp.eq.s32.totalorder %v202, %v208
        %v211 = vsel %vm209, 1, 0
        %v212 = vsel %vm210, 1, 0
        %v213 = vcvt.s32.f32 %v211
        %v214 = vcvt.s32.f32 %v212
        %v215 = vld [vmem:[%s166] sm:$0xff]
        %v216 = vld [vmem:[%s166 + $0x8] sm:$0xff]
        %v217 = vld [vmem:[%s166 + $0x10] sm:$0xff]
        %v218 = vld [vmem:[%s166 + $0x18] sm:$0xff]
        %v219 = vld [vmem:[%s166 + $0x20] sm:$0xff]
        %v220 = vld [vmem:[%s166 + $0x28] sm:$0xff]
        %vm221 = vcmask 392192
        %v223 = vsel %vm221, %v213, 0
        %v226 = vsel %vm221, %v214, 0
        %228 = vmatprep.subr.mxu0 0.0
        %229 = vmatpush1.msra.mxu0 %v215
        %230 = vmatprep.subr.mxu0 0.0
        %231 = vmatpush1.msra.mxu0 %v216
        %232 = vmatprep.subr.mxu0 0.0
        %233 = vmatpush1.msra.mxu0 %v217
        %234 = vmatprep.subr.mxu0 0.0
        %235 = vmatpush1.msra.mxu0 %v218
        %236 = vmatprep.subr.mxu0 0.0
        %237 = vmatpush1.msra.mxu0 %v219
        %238 = vmatprep.subr.mxu0 0.0
        %239 = vmatpush1.msra.mxu0 %v220
        %240 = vmatprep.subr.mxu0 0.0
        %241 = vmatpush1.msra.mxu0 0.0
        %242 = vmatprep.subr.mxu0 0.0
        %243 = vmatpush1.msra.mxu0 0.0
        %244 = vmatprep.subr.mxu0 0.0
        %245 = vmatpush1.msra.mxu0 0.0
        %246 = vmatprep.subr.mxu0 0.0
        %247 = vmatpush1.msra.mxu0 0.0
        %248 = vmatprep.subr.mxu0 0.0
        %249 = vmatpush1.msra.mxu0 0.0
        %250 = vmatprep.subr.mxu0 0.0
        %251 = vmatpush1.msra.mxu0 0.0
        %252 = vmatprep.subr.mxu0 0.0
        %253 = vmatpush1.msra.mxu0 0.0
        %254 = vmatprep.subr.mxu0 0.0
        %255 = vmatpush1.msra.mxu0 0.0
        %256 = vmatprep.subr.mxu0 0.0
        %257 = vmatpush1.msra.mxu0 0.0
        %258 = vmatprep.subr.mxu0 0.0
        %259 = vmatpush1.msra.mxu0 0.0
        %260 = vmatprep.subr.mxu0 0.0
        %261 = vmatpush1.msra.mxu0 0.0
        %262 = vmatprep.subr.mxu0 0.0
        %263 = vmatpush1.msra.mxu0 0.0
        %264 = vmatprep.subr.mxu0 0.0
        %265 = vmatpush1.msra.mxu0 0.0
        %266 = vmatprep.subr.mxu0 0.0
        %267 = vmatpush1.msra.mxu0 0.0
        %268 = vmatprep.subr.mxu0 0.0
        %269 = vmatpush1.msra.mxu0 0.0
        %270 = vmatprep.subr.mxu0 0.0
        %271 = vmatpush1.msra.mxu0 0.0
        %272 = vmatprep.subr.mxu0 0.0
        %273 = vmatpush1.msra.mxu0 0.0
        %274 = vmatprep.subr.mxu0 0.0
        %275 = vmatpush1.msra.mxu0 0.0
        %276 = vmatprep.subr.mxu0 0.0
        %277 = vmatpush1.msra.mxu0 0.0
        %278 = vmatprep.subr.mxu0 0.0
        %279 = vmatpush1.msra.mxu0 0.0
        %280 = vmatprep.subr.mxu0 0.0
        %281 = vmatpush1.msra.mxu0 0.0
        %282 = vmatprep.subr.mxu0 0.0
        %283 = vmatpush1.msra.mxu0 0.0
        %284 = vmatprep.subr.mxu0 0.0
        %285 = vmatpush1.msra.mxu0 0.0
        %286 = vmatprep.subr.mxu0 0.0
        %287 = vmatpush1.msra.mxu0 0.0
        %288 = vmatprep.subr.mxu0 0.0
        %289 = vmatpush1.msra.mxu0 0.0
        %290 = vmatprep.subr.mxu0 0.0
        %291 = vmatpush1.msra.mxu0 0.0
        %292 = vmatprep.mubr.f32.mxu0 0.0
        %293 = vmatmul.mubr.f32.gmra.mrb[0].mxu0 %v223
        %v294 = vpop.f32.mrb[0].mxu0
        %v295 = vadd.f32 0.0, %v294
        %v296 = vpop.f32.mrb[0].mxu0
        %297 = vmatprep.mubr.f32.mxu0 0.0
        %298 = vmatmul.mubr.f32.gmra.mrb[0].mxu0 %v226
        %v299 = vpop.f32.mrb[0].mxu0
        %v300 = vadd.f32 0.0, %v299
        %v301 = vpop.f32.mrb[0].mxu0
        %302 = vdwg.mxu0
        %vm303 = vcmask 261120
        %304 = vst.msk [vmem:[%s191] sm:$0xff] %vm303, %v295
        %305 = vst.msk [vmem:[%s191 + $0x8] sm:$0xff] %vm303, %v300
        %s306 = sand.u32 %s93, 1
        %s307 = scalar_lea.sflag [#allocation4], %s306
        %s308 = sand.u32 %s93, 1
        %s309 = smul.addr %s308, 16
        %s310 = scalar_lea.vmem [#allocation5], %s309
        // Predicated region
        $region33: #{attention_dec_forward.5} parent=27 // pred_check
          %p311 = pneg %p103
        $region34: #{attention_dec_forward.5} parent=27 // pred_check_branch
          %313 = sbr.rel (%p311) target = $region36
        $region35: #{attention_dec_forward.5} parent=27 // pred_region
          %s314 = smul.u32 2, %s24
          %s316 = ssub.s32 256, 256
          %317 = vsyncadd %s307, %s316
          %s318 = smul.addr %s23, 2
          %s319 = sadd.s32 %s314, %s318
          %s320 = smul.addr %s319, 128
          %s321 = scalar_lea.hbm %s2, %s320
          %s322 = sshll.u32 %s310, 4
          %s323 = int_to_ptr.vmem [resolvable:$true] %s322
          %328 = dma.vmem_to_hbm [thread:$0]  %s323, 256, %s321, %s307, 128, 128, 8
        $region36: #{attention_dec_forward.5} parent=27 // pred_fallthru
          _
      $region28: #{attention_dec_forward.5} parent=5 // pred_fallthru
        _
      %p329 = scmp.le.s32.totalorder 2, %s14
      // Predicated region
      $region37: #{attention_dec_forward.5} parent=5 // pred_check
        %p330 = pneg %p329
      $region38: #{attention_dec_forward.5} parent=5 // pred_check_branch
        %332 = sbr.rel (%p330) target = $region40
      $region39: #{attention_dec_forward.5} parent=5 // pred_region
        %s333 = ssub.s32 %s14, 2
        // Predicated region
        $region41: #{attention_dec_forward.5} parent=39 // pred_check
          %p334 = pneg %p109
        $region42: #{attention_dec_forward.5} parent=39 // pred_check_branch
          %336 = sbr.rel (%p334) target = $region44
        $region43: #{attention_dec_forward.5} parent=39 // pred_region
          %s337 = sand.u32 %s94, 1
          %s338 = scalar_lea.sflag [#allocation4], %s337
          %s339 = sand.u32 %s94, 1
          %s340 = smul.addr %s339, 16
          %s341 = scalar_lea.vmem [#allocation5], %s340
          %342 = dma.done %s338, 256
        $region44: #{attention_dec_forward.5} parent=39 // pred_fallthru
          _
      $region40: #{attention_dec_forward.5} parent=5 // pred_fallthru
        _
    $region6: #{attention_dec_forward.5} parent=1 // loop_footer
      %s18 = sadd.s32 1, %s14
    $region7: #{attention_dec_forward.5} parent=1 // loop_footer_branch
      %13 = sbr.rel target = $region3
    $region8: #{attention_dec_forward.5} parent=1 // loop_exit
      _
    %343 = vsyncpa [#allocation3], 1
    %s344 = scalar_lea.sflag [#allocation3], 1
    %345 = vsyncpa %s344, 1
    %346 = vsyncpa [#allocation4], 1
    %s347 = scalar_lea.sflag [#allocation4], 1
    %348 = vsyncpa %s347, 1

// kernel: attention_dec_forward.3
$region0: #{attention_dec_forward.3}
  #allocation0 [shape = 'u32[]', space=smem, size = 0x4, offset = 0x4, fixed_abs, tag = 'smem constant byte address 0x4 - core index']
  #allocation1 [shape = 'u32[144,128]{1,0:T(1,128)}', space=vmem, size = 0x12000, scoped, tag = 'internal scratch']
  %s0 = inlined_call_operand.vmem [shape: bf16[48,32], index: 0, kind: input, shape index: {}]
  %s1 = inlined_call_operand.vmem [shape: bf16[32,32], index: 1, kind: input, shape index: {}]
  %s2 = inlined_call_operand.vmem [shape: f32[1,32], index: 2, kind: input, shape index: {}]
  %s3 = inlined_call_operand.hbm [shape: bf16[48,32], index: 3, kind: output, shape index: {}]
  %s4 = sld [smem:[#allocation0]]
  $region22: #{attention_dec_forward.3} parent=0
    _
  %s6 = ssub.s32 1, %s4
  %s7 = scalar_select 0, %s6, %s4
  $region1: #{attention_dec_forward.3} parent=0
    #allocation2 [shape = 'u8[12288]{0}', space=vmem, size = 0x3000, scoped, tag = 'output window, operand 0, single buffered']
    #allocation3 [shape = 's32[1]{0}', space=sflag, size = 0x4, scoped, tag = 'scoped memory for attention_dec_forward.3']
    %8 = vsyncpa [#allocation3], 0
    // Predicated region
    $region2: #{attention_dec_forward.3} parent=1 // pred_check
      _
    $region3: #{attention_dec_forward.3} parent=1 // pred_check_branch
      %10 = sbr.rel (0) target = $region5
    $region4: #{attention_dec_forward.3} parent=1 // pred_region
      _
    $region5: #{attention_dec_forward.3} parent=1 // pred_fallthru
      _
    // Predicated region
    $region6: #{attention_dec_forward.3} parent=1 // pred_check
      _
    $region7: #{attention_dec_forward.3} parent=1 // pred_check_branch
      %12 = sbr.rel (0) target = $region9
    $region8: #{attention_dec_forward.3} parent=1 // pred_region
      _
    $region9: #{attention_dec_forward.3} parent=1 // pred_fallthru
      _
    // Predicated region
    $region10: #{attention_dec_forward.3} parent=1 // pred_check
      _
    $region11: #{attention_dec_forward.3} parent=1 // pred_check_branch
      %14 = sbr.rel (0) target = $region13
    $region12: #{attention_dec_forward.3} parent=1 // pred_region
      _
    $region13: #{attention_dec_forward.3} parent=1 // pred_fallthru
      _
    %v16 = vld [vmem:[%s0] sm:$0xf]
    %v17 = vld [vmem:[%s0 + $0x4] sm:$0xf]
    %v18 = vld [vmem:[%s0 + $0x8] sm:$0xf]
    %v19 = vld [vmem:[%s0 + $0xc] sm:$0xf]
    %v20 = vld [vmem:[%s0 + $0x10] sm:$0xf]
    %v21 = vld [vmem:[%s0 + $0x14] sm:$0xf]
    %v22 = vld [vmem:[%s1] sm:$0xf]
    %v23 = vld [vmem:[%s1 + $0x4] sm:$0xf]
    %v24 = vld [vmem:[%s1 + $0x8] sm:$0xf]
    %v25 = vld [vmem:[%s1 + $0xc] sm:$0xf]
    %v26 = vld [vmem:[%s2] sm:$0x1]
    %v28 = vlaneseq
    %v29 = vshrl.u32 %v28, 7
    %v30 = vsub.s32 0, %v29
    %v31 = vrot.slane %v26, %v30
    %v39 = vunpack.c.l.b16 %v16
    %v40 = vunpack.c.l.b16 %v17
    %v41 = vunpack.c.l.b16 %v18
    %v42 = vunpack.c.l.b16 %v19
    %v43 = vunpack.c.l.b16 %v20
    %v44 = vunpack.c.l.b16 %v21
    %v45 = vpack.c.b16 %v40, %v39
    %v46 = vpack.c.b16 %v42, %v41
    %v47 = vpack.c.b16 %v44, %v43
    %v52 = vunpack.c.l.b16 %v22
    %v53 = vunpack.c.l.b16 %v23
    %v54 = vunpack.c.l.b16 %v24
    %v55 = vunpack.c.l.b16 %v25
    %v56 = vpack.c.b16 %v53, %v52
    %v57 = vpack.c.b16 %v55, %v54
    %vm60 = vcmask 261120
    %v62 = vsel %vm60, %v45, 0
    %v65 = vsel %vm60, %v46, 0
    %v68 = vsel %vm60, %v47, 0
    %70 = vmatprep.subr.bf16.mxu0 0
    %71 = vmatpush1.bf16.msra.mxu0 %v56
    %72 = vmatprep.subr.bf16.mxu0 0
    %73 = vmatpush1.bf16.msra.mxu0 %v57
    %74 = vmatprep.subr.bf16.mxu0 0
    %75 = vmatpush1.bf16.msra.mxu0 0
    %76 = vmatprep.subr.bf16.mxu0 0
    %77 = vmatpush1.bf16.msra.mxu0 0
    %78 = vmatprep.subr.bf16.mxu0 0
    %79 = vmatpush1.bf16.msra.mxu0 0
    %80 = vmatprep.subr.bf16.mxu0 0
    %81 = vmatpush1.bf16.msra.mxu0 0
    %82 = vmatprep.subr.bf16.mxu0 0
    %83 = vmatpush1.bf16.msra.mxu0 0
    %84 = vmatprep.subr.bf16.mxu0 0
    %85 = vmatpush1.bf16.msra.mxu0 0
    %86 = vmatprep.subr.bf16.mxu0 0
    %87 = vmatpush1.bf16.msra.mxu0 0
    %88 = vmatprep.subr.bf16.mxu0 0
    %89 = vmatpush1.bf16.msra.mxu0 0
    %90 = vmatprep.subr.bf16.mxu0 0
    %91 = vmatpush1.bf16.msra.mxu0 0
    %92 = vmatprep.subr.bf16.mxu0 0
    %93 = vmatpush1.bf16.msra.mxu0 0
    %94 = vmatprep.subr.bf16.mxu0 0
    %95 = vmatpush1.bf16.msra.mxu0 0
    %96 = vmatprep.subr.bf16.mxu0 0
    %97 = vmatpush1.bf16.msra.mxu0 0
    %98 = vmatprep.subr.bf16.mxu0 0
    %99 = vmatpush1.bf16.msra.mxu0 0
    %100 = vmatprep.subr.bf16.mxu0 0
    %101 = vmatpush1.bf16.msra.mxu0 0
    %102 = vmatprep.mubr.bf16.mxu0 0
    %103 = vmatmul.mubr.bf16.gmra.mrb[0].mxu0 %v62
    %v104 = vpop.f32.mrb[0].mxu0
    %v105 = vadd.f32 %v31, %v104
    %v106 = vpop.f32.mrb[0].mxu0
    %v107 = vpop.f32.mrb[0].mxu0
    %v108 = vadd.f32 %v31, %v107
    %v109 = vpop.f32.mrb[0].mxu0
    %110 = vmatprep.mubr.bf16.mxu0 0
    %111 = vmatmul.mubr.bf16.gmra.mrb[0].mxu0 %v65
    %v112 = vpop.f32.mrb[0].mxu0
    %v113 = vadd.f32 %v31, %v112
    %v114 = vpop.f32.mrb[0].mxu0
    %v115 = vpop.f32.mrb[0].mxu0
    %v116 = vadd.f32 %v31, %v115
    %v117 = vpop.f32.mrb[0].mxu0
    %118 = vmatprep.mubr.bf16.mxu0 0
    %119 = vmatmul.mubr.bf16.gmra.mrb[0].mxu0 %v68
    %v120 = vpop.f32.mrb[0].mxu0
    %v121 = vadd.f32 %v31, %v120
    %v122 = vpop.f32.mrb[0].mxu0
    %v123 = vpop.f32.mrb[0].mxu0
    %v124 = vadd.f32 %v31, %v123
    %v125 = vpop.f32.mrb[0].mxu0
    %126 = vdwg.mxu0
    %v127 = vpack.c.bf16 %v108, %v105
    %v128 = vpack.c.bf16 %v116, %v113
    %v129 = vpack.c.bf16 %v124, %v121
    %v133 = vunpack.c.l.b16 %v127
    %v134 = vunpack.c.h.b16 %v127
    %v135 = vunpack.c.l.b16 %v128
    %v136 = vunpack.c.h.b16 %v128
    %v137 = vunpack.c.l.b16 %v129
    %v138 = vunpack.c.h.b16 %v129
    %v139 = vpack.c.b16 %v133, %v133
    %v140 = vpack.c.b16 %v134, %v134
    %v141 = vpack.c.b16 %v135, %v135
    %v142 = vpack.c.b16 %v136, %v136
    %v143 = vpack.c.b16 %v137, %v137
    %v144 = vpack.c.b16 %v138, %v138
    %vm151 = vcmask 257024
    %152 = vst.msk [vmem:[#allocation2] sm:$0xf] %vm151, %v139
    %153 = vst.msk [vmem:[#allocation2 + $0x4] sm:$0xf] %vm151, %v140
    %154 = vst.msk [vmem:[#allocation2 + $0x8] sm:$0xf] %vm151, %v141
    %155 = vst.msk [vmem:[#allocation2 + $0xc] sm:$0xf] %vm151, %v142
    %156 = vst.msk [vmem:[#allocation2 + $0x10] sm:$0xf] %vm151, %v143
    %157 = vst.msk [vmem:[#allocation2 + $0x14] sm:$0xf] %vm151, %v144
    // Predicated region
    $region14: #{attention_dec_forward.3} parent=1 // pred_check
      _
    $region15: #{attention_dec_forward.3} parent=1 // pred_check_branch
      %159 = sbr.rel (0) target = $region17
    $region16: #{attention_dec_forward.3} parent=1 // pred_region
      %s161 = ssub.s32 384, 384
      %162 = vsyncadd [#allocation3], %s161
      %s163 = sshll.u32 [#allocation2], 4
      %s164 = int_to_ptr.vmem [resolvable:$true] %s163
      %169 = dma.vmem_to_hbm [thread:$0]  %s164, 384, %s3, [#allocation3], 64, 64, 4
    $region17: #{attention_dec_forward.3} parent=1 // pred_fallthru
      _
    // Predicated region
    $region18: #{attention_dec_forward.3} parent=1 // pred_check
      _
    $region19: #{attention_dec_forward.3} parent=1 // pred_check_branch
      %171 = sbr.rel (0) target = $region21
    $region20: #{attention_dec_forward.3} parent=1 // pred_region
      %172 = dma.done [#allocation3], 384
    $region21: #{attention_dec_forward.3} parent=1 // pred_fallthru
      _
    %173 = vsyncpa [#allocation3], 1

// kernel: attention_dec_forward.4
$region0: #{attention_dec_forward.4}
  #allocation0 [shape = 'u32[]', space=smem, size = 0x4, offset = 0x4, fixed_abs, tag = 'smem constant byte address 0x4 - core index']
  #allocation1 [shape = 'u32[144,128]{1,0:T(1,128)}', space=vmem, size = 0x12000, scoped, tag = 'internal scratch']
  #allocation2 [shape = 'f32[4,48,1]{2,1,0:T(8,128)}', space=vmem, size = 0x18000, scoped, tag = 'scratch operand']
  #allocation3 [shape = 'f32[4,48,1]{2,1,0:T(8,128)}', space=vmem, size = 0x18000, scoped, tag = 'scratch operand']
  #allocation4 [shape = 'f32[48,32]{1,0:T(8,128)}', space=vmem, size = 0x6000, scoped, tag = 'scratch operand']
  %s0 = inlined_call_operand.hbm [shape: bf16[48,32], index: 0, kind: input, shape index: {}]
  %s1 = inlined_call_operand.hbm [shape: f32[2,128,32], index: 1, kind: input, shape index: {}]
  %s2 = inlined_call_operand.hbm [shape: bf16[32,32], index: 2, kind: input, shape index: {}]
  %s3 = inlined_call_operand.hbm [shape: f32[1,32], index: 3, kind: input, shape index: {}]
  %s4 = inlined_call_operand.hbm [shape: bf16[32,32], index: 4, kind: input, shape index: {}]
  %s5 = inlined_call_operand.hbm [shape: f32[1,32], index: 5, kind: input, shape index: {}]
  %s6 = inlined_call_operand.hbm [shape: bf16[32,32], index: 6, kind: input, shape index: {}]
  %s7 = inlined_call_operand.hbm [shape: f32[1,32], index: 7, kind: input, shape index: {}]
  %s8 = inlined_call_operand.hbm [shape: f32[2,48,32], index: 8, kind: output, shape index: {}]
  %s9 = sld [smem:[#allocation0]]
  $region105: #{attention_dec_forward.4} parent=0
    _
  %s11 = ssub.s32 1, %s9
  %s12 = scalar_select 0, %s11, %s9
  $region1: #{attention_dec_forward.4} parent=0
    #allocation5 [shape = 'u8[12288]{0}', space=vmem, size = 0x3000, scoped, tag = 'input window, operand 0, single buffered']
    #allocation6 [shape = 's32[2]{0}', space=sflag, size = 0x8, scoped, tag = 'scoped memory for attention_dec_forward.4']
    #allocation7 [shape = 's32[2]{0}', space=sflag, size = 0x8, scoped, tag = 'scoped memory for attention_dec_forward.4']
    #allocation8 [shape = 'u8[131072]{0}', space=vmem, size = 0x20000, scoped, tag = 'input window, operand 1']
    #allocation9 [shape = 's32[2]{0}', space=sflag, size = 0x8, scoped, tag = 'scoped memory for attention_dec_forward.4']
    #allocation10 [shape = 'u8[8192]{0}', space=vmem, size = 0x2000, scoped, tag = 'input window, operand 2, single buffered']
    #allocation11 [shape = 'u8[512]{0}', space=vmem, size = 0x400, scoped, tag = 'input window, operand 3, single buffered']
    #allocation12 [shape = 's32[1]{0}', space=sflag, size = 0x4, scoped, tag = 'scoped memory for attention_dec_forward.4']
    #allocation13 [shape = 'u8[8192]{0}', space=vmem, size = 0x2000, scoped, tag = 'input window, operand 4, single buffered']
    #allocation14 [shape = 'u8[512]{0}', space=vmem, size = 0x400, scoped, tag = 'input window, operand 5, single buffered']
    #allocation15 [shape = 's32[1]{0}', space=sflag, size = 0x4, scoped, tag = 'scoped memory for attention_dec_forward.4']
    #allocation16 [shape = 'u8[8192]{0}', space=vmem, size = 0x2000, scoped, tag = 'input window, operand 6, single buffered']
    #allocation17 [shape = 'u8[512]{0}', space=vmem, size = 0x400, scoped, tag = 'input window, operand 7, single buffered']
    #allocation18 [shape = 's32[1]{0}', space=sflag, size = 0x4, scoped, tag = 'scoped memory for attention_dec_forward.4']
    #allocation19 [shape = 'u8[49152]{0}', space=vmem, size = 0xc000, scoped, tag = 'output window, operand 0']
    %13 = vsyncpa [#allocation6], 0
    %14 = vsyncpa [#allocation9], 0
    %s15 = scalar_lea.sflag [#allocation9], 1
    %16 = vsyncpa %s15, 0
    %17 = vsyncpa [#allocation12], 0
    %18 = vsyncpa [#allocation15], 0
    %19 = vsyncpa [#allocation18], 0
    %20 = vsyncpa [#allocation7], 0
    %s21 = scalar_lea.sflag [#allocation7], 1
    %22 = vsyncpa %s21, 0
    loop: start=0, step=1, limit=4
    $region2: #{attention_dec_forward.4} parent=1 // loop_pre_header
      _
    $region3: #{attention_dec_forward.4} parent=1 // loop_header
      %s24 = sphi 0, %s28
      %p25 = scmp.ge.s32.totalorder %s24, 4
      %s31 = sphi 0, %s43
      %s32 = sphi 0, %s39
      %s33 = sphi 0, %s31
      %s34 = sphi 0, %s32
      %s35 = sphi 0, %s33
      %s36 = sphi 0, %s34
      %s44 = sphi 0, %s44
      %s46 = sphi 0, %s44
      %s47 = sphi 0, %s46
      %s61 = sphi 0, %s47
      %s69 = sphi 0, %s71
      %s72 = sphi 0, %s69
      %s73 = sphi 0, %s72
      %s89 = sphi 0, %s73
      %s93 = sphi 0, %s93
      %s95 = sphi 0, %s93
      %s96 = sphi 0, %s95
      %s110 = sphi 0, %s96
      %s114 = sphi 0, %s114
      %s116 = sphi 0, %s114
      %s117 = sphi 0, %s116
      %s131 = sphi 0, %s117
      %s135 = sphi 0, %s135
      %s137 = sphi 0, %s135
      %s138 = sphi 0, %s137
      %s152 = sphi 0, %s138
      %s156 = sphi 0, %s156
      %s158 = sphi 0, %s156
      %s159 = sphi 0, %s158
      %s173 = sphi 0, %s159
      %s177 = sphi 0, %s177
      %s179 = sphi 0, %s177
      %s180 = sphi 0, %s179
      %s194 = sphi 0, %s180
      %s198 = sphi 0, %s198
      %s200 = sphi 0, %s198
      %s201 = sphi 0, %s200
      %s215 = sphi 0, %s201
      %s221 = sphi 0, %s223
      %s224 = sphi 0, %s221
      %s225 = sphi 0, %s224
      %s241 = sphi 0, %s225
    $region4: #{attention_dec_forward.4} parent=1 // loop_header_branch
      %27 = sbr.rel (%p25) target = $region8
    $region5: #{attention_dec_forward.4} parent=1 // loop_body
      %s29 = ssub.s32 %s24, 1
      %s30 = ssub.s32 %s24, 2
      %s37 = sadd.s32 1, %s32
      %p38 = scmp.ge.s32.totalorder %s37, 1
      %s39 = scalar_select %p38, 0, %s37
      %s40 = sadd.s32 1, %s31
      %s41 = scalar_select %p38, %s40, %s31
      %p42 = scmp.ge.s32.totalorder %s41, 2
      %s43 = scalar_select %p42, 0, %s41
      %s45 = sadd.s32 %s44, 1
      %p48 = scmp.eq.s32.totalorder %s24, 1
      %p49 = scmp.ne.s32.totalorder %s44, %s46
      %p50 = scmp.eq.s32.totalorder %s24, 0
      %p51 = por %p49, %p50
      %p52 = scmp.ne.s32.totalorder %s44, %s46
      %p53 = scmp.eq.s32.totalorder %s29, 1
      %p54 = por %p52, %p53
      %p55 = scmp.ne.s32.totalorder %s46, %s47
      %p56 = scmp.eq.s32.totalorder %s29, 0
      %p57 = por %p55, %p56
      %p58 = scmp.ne.s32.totalorder %s46, %s47
      %p59 = scmp.eq.s32.totalorder %s30, 1
      %p60 = por %p58, %p59
      %p62 = scmp.ne.s32.totalorder %s47, %s61
      %p63 = scmp.eq.s32.totalorder %s30, 0
      %p64 = por %p62, %p63
      %s65 = ssub.s32 %s31, %s43
      %s66 = ssub.s32 %s32, %s39
      %s67 = sor.u32 %s65, %s66
      %p68 = scmp.eq.s32.totalorder %s67, 0
      %s70 = sadd.s32 %s69, 1
      %s71 = scalar_select %p68, %s69, %s70
      %p74 = pneg %p68
      %p75 = scmp.eq.s32.totalorder %s24, 1
      %p76 = por %p74, %p75
      %p77 = scmp.ne.s32.totalorder %s69, %s72
      %p78 = scmp.eq.s32.totalorder %s24, 0
      %p79 = por %p77, %p78
      %p80 = scmp.ne.s32.totalorder %s69, %s72
      %p81 = scmp.eq.s32.totalorder %s29, 1
      %p82 = por %p80, %p81
      %p83 = scmp.ne.s32.totalorder %s72, %s73
      %p84 = scmp.eq.s32.totalorder %s29, 0
      %p85 = por %p83, %p84
      %p86 = scmp.ne.s32.totalorder %s72, %s73
      %p87 = scmp.eq.s32.totalorder %s30, 1
      %p88 = por %p86, %p87
      %p90 = scmp.ne.s32.totalorder %s73, %s89
      %p91 = scmp.eq.s32.totalorder %s30, 0
      %p92 = por %p90, %p91
      %s94 = sadd.s32 %s93, 1
      %p97 = scmp.eq.s32.totalorder %s24, 1
      %p98 = scmp.ne.s32.totalorder %s93, %s95
      %p99 = scmp.eq.s32.totalorder %s24, 0
      %p100 = por %p98, %p99
      %p101 = scmp.ne.s32.totalorder %s93, %s95
      %p102 = scmp.eq.s32.totalorder %s29, 1
      %p103 = por %p101, %p102
      %p104 = scmp.ne.s32.totalorder %s95, %s96
      %p105 = scmp.eq.s32.totalorder %s29, 0
      %p106 = por %p104, %p105
      %p107 = scmp.ne.s32.totalorder %s95, %s96
      %p108 = scmp.eq.s32.totalorder %s30, 1
      %p109 = por %p107, %p108
      %p111 = scmp.ne.s32.totalorder %s96, %s110
      %p112 = scmp.eq.s32.totalorder %s30, 0
      %p113 = por %p111, %p112
      %s115 = sadd.s32 %s114, 1
      %p118 = scmp.eq.s32.totalorder %s24, 1
      %p119 = scmp.ne.s32.totalorder %s114, %s116
      %p120 = scmp.eq.s32.totalorder %s24, 0
      %p121 = por %p119, %p120
      %p122 = scmp.ne.s32.totalorder %s114, %s116
      %p123 = scmp.eq.s32.totalorder %s29, 1
      %p124 = por %p122, %p123
      %p125 = scmp.ne.s32.totalorder %s116, %s117
      %p126 = scmp.eq.s32.totalorder %s29, 0
      %p127 = por %p125, %p126
      %p128 = scmp.ne.s32.totalorder %s116, %s117
      %p129 = scmp.eq.s32.totalorder %s30, 1
      %p130 = por %p128, %p129
      %p132 = scmp.ne.s32.totalorder %s117, %s131
      %p133 = scmp.eq.s32.totalorder %s30, 0
      %p134 = por %p132, %p133
      %s136 = sadd.s32 %s135, 1
      %p139 = scmp.eq.s32.totalorder %s24, 1
      %p140 = scmp.ne.s32.totalorder %s135, %s137
      %p141 = scmp.eq.s32.totalorder %s24, 0
      %p142 = por %p140, %p141
      %p143 = scmp.ne.s32.totalorder %s135, %s137
      %p144 = scmp.eq.s32.totalorder %s29, 1
      %p145 = por %p143, %p144
      %p146 = scmp.ne.s32.totalorder %s137, %s138
      %p147 = scmp.eq.s32.totalorder %s29, 0
      %p148 = por %p146, %p147
      %p149 = scmp.ne.s32.totalorder %s137, %s138
      %p150 = scmp.eq.s32.totalorder %s30, 1
      %p151 = por %p149, %p150
      %p153 = scmp.ne.s32.totalorder %s138, %s152
      %p154 = scmp.eq.s32.totalorder %s30, 0
      %p155 = por %p153, %p154
      %s157 = sadd.s32 %s156, 1
      %p160 = scmp.eq.s32.totalorder %s24, 1
      %p161 = scmp.ne.s32.totalorder %s156, %s158
      %p162 = scmp.eq.s32.totalorder %s24, 0
      %p163 = por %p161, %p162
      %p164 = scmp.ne.s32.totalorder %s156, %s158
      %p165 = scmp.eq.s32.totalorder %s29, 1
      %p166 = por %p164, %p165
      %p167 = scmp.ne.s32.totalorder %s158, %s159
      %p168 = scmp.eq.s32.totalorder %s29, 0
      %p169 = por %p167, %p168
      %p170 = scmp.ne.s32.totalorder %s158, %s159
      %p171 = scmp.eq.s32.totalorder %s30, 1
      %p172 = por %p170, %p171
      %p174 = scmp.ne.s32.totalorder %s159, %s173
      %p175 = scmp.eq.s32.totalorder %s30, 0
      %p176 = por %p174, %p175
      %s178 = sadd.s32 %s177, 1
      %p181 = scmp.eq.s32.totalorder %s24, 1
      %p182 = scmp.ne.s32.totalorder %s177, %s179
      %p183 = scmp.eq.s32.totalorder %s24, 0
      %p184 = por %p182, %p183
      %p185 = scmp.ne.s32.totalorder %s177, %s179
      %p186 = scmp.eq.s32.totalorder %s29, 1
      %p187 = por %p185, %p186
      %p188 = scmp.ne.s32.totalorder %s179, %s180
      %p189 = scmp.eq.s32.totalorder %s29, 0
      %p190 = por %p188, %p189
      %p191 = scmp.ne.s32.totalorder %s179, %s180
      %p192 = scmp.eq.s32.totalorder %s30, 1
      %p193 = por %p191, %p192
      %p195 = scmp.ne.s32.totalorder %s180, %s194
      %p196 = scmp.eq.s32.totalorder %s30, 0
      %p197 = por %p195, %p196
      %s199 = sadd.s32 %s198, 1
      %p202 = scmp.eq.s32.totalorder %s24, 1
      %p203 = scmp.ne.s32.totalorder %s198, %s200
      %p204 = scmp.eq.s32.totalorder %s24, 0
      %p205 = por %p203, %p204
      %p206 = scmp.ne.s32.totalorder %s198, %s200
      %p207 = scmp.eq.s32.totalorder %s29, 1
      %p208 = por %p206, %p207
      %p209 = scmp.ne.s32.totalorder %s200, %s201
      %p210 = scmp.eq.s32.totalorder %s29, 0
      %p211 = por %p209, %p210
      %p212 = scmp.ne.s32.totalorder %s200, %s201
      %p213 = scmp.eq.s32.totalorder %s30, 1
      %p214 = por %p212, %p213
      %p216 = scmp.ne.s32.totalorder %s201, %s215
      %p217 = scmp.eq.s32.totalorder %s30, 0
      %p218 = por %p216, %p217
      %s219 = ssub.s32 %s31, %s43
      %p220 = scmp.eq.s32.totalorder %s219, 0
      %s222 = sadd.s32 %s221, 1
      %s223 = scalar_select %p220, %s221, %s222
      %p226 = pneg %p220
      %p227 = scmp.eq.s32.totalorder %s24, 1
      %p228 = por %p226, %p227
      %p229 = scmp.ne.s32.totalorder %s221, %s224
      %p230 = scmp.eq.s32.totalorder %s24, 0
      %p231 = por %p229, %p230
      %p232 = scmp.ne.s32.totalorder %s221, %s224
      %p233 = scmp.eq.s32.totalorder %s29, 1
      %p234 = por %p232, %p233
      %p235 = scmp.ne.s32.totalorder %s224, %s225
      %p236 = scmp.eq.s32.totalorder %s29, 0
      %p237 = por %p235, %p236
      %p238 = scmp.ne.s32.totalorder %s224, %s225
      %p239 = scmp.eq.s32.totalorder %s30, 1
      %p240 = por %p238, %p239
      %p242 = scmp.ne.s32.totalorder %s225, %s241
      %p243 = scmp.eq.s32.totalorder %s30, 0
      %p244 = por %p242, %p243
      %p245 = scmp.le.s32.totalorder 1, %s24
      %p246 = scmp.lt.s32.totalorder %s24, 3
      %p247 = pnand %p245, %p246
      %p248 = pneg %p247
      // Predicated region
      $region9: #{attention_dec_forward.4} parent=5 // pred_check
        _
      $region10: #{attention_dec_forward.4} parent=5 // pred_check_branch
        %250 = sbr.rel (%p247) target = $region12
      $region11: #{attention_dec_forward.4} parent=5 // pred_region
        %s251 = ssub.s32 %s24, 1
        // Predicated region
        $region13: #{attention_dec_forward.4} parent=11 // pred_check
          %p252 = pneg %p57
        $region14: #{attention_dec_forward.4} parent=11 // pred_check_branch
          %254 = sbr.rel (%p252) target = $region16
        $region15: #{attention_dec_forward.4} parent=11 // pred_region
          %s256 = ssub.s32 384, 384
          %257 = vsyncadd [#allocation6], %s256
          %s258 = sshll.u32 [#allocation5], 4
          %s259 = int_to_ptr.vmem [resolvable:$true] %s258
          %264 = dma.hbm_to_vmem [thread:$0]  %s0, 384, %s259, [#allocation6], 64, 64, 4
        $region16: #{attention_dec_forward.4} parent=11 // pred_fallthru
          _
        // Predicated region
        $region17: #{attention_dec_forward.4} parent=11 // pred_check
          %p265 = pneg %p106
        $region18: #{attention_dec_forward.4} parent=11 // pred_check_branch
          %267 = sbr.rel (%p265) target = $region20
        $region19: #{attention_dec_forward.4} parent=11 // pred_region
          %s269 = ssub.s32 256, 256
          %270 = vsyncadd [#allocation9], %s269
          %s271 = sshll.u32 [#allocation10], 4
          %s272 = int_to_ptr.vmem [resolvable:$true] %s271
          %277 = dma.hbm_to_vmem [thread:$0]  %s2, 256, %s272, [#allocation9], 64, 64, 4
        $region20: #{attention_dec_forward.4} parent=11 // pred_fallthru
          _
        // Predicated region
        $region21: #{attention_dec_forward.4} parent=11 // pred_check
          %p278 = pneg %p127
        $region22: #{attention_dec_forward.4} parent=11 // pred_check_branch
          %280 = sbr.rel (%p278) target = $region24
        $region23: #{attention_dec_forward.4} parent=11 // pred_region
          %s282 = ssub.s32 16, 16
          %283 = vsyncadd [#allocation12], %s282
          %s285 = sshll.u32 [#allocation11], 4
          %s286 = int_to_ptr.vmem [resolvable:$true] %s285
          %288 = dma.hbm_to_vmem [thread:$0]  %s3, 16, %s286, [#allocation12]
        $region24: #{attention_dec_forward.4} parent=11 // pred_fallthru
          _
        // Predicated region
        $region25: #{attention_dec_forward.4} parent=11 // pred_check
          %p289 = pneg %p148
        $region26: #{attention_dec_forward.4} parent=11 // pred_check_branch
          %291 = sbr.rel (%p289) target = $region28
        $region27: #{attention_dec_forward.4} parent=11 // pred_region
          %s293 = ssub.s32 256, 256
          %294 = vsyncadd [#allocation12], %s293
          %s295 = sshll.u32 [#allocation13], 4
          %s296 = int_to_ptr.vmem [resolvable:$true] %s295
          %301 = dma.hbm_to_vmem [thread:$0]  %s4, 256, %s296, [#allocation12], 64, 64, 4
        $region28: #{attention_dec_forward.4} parent=11 // pred_fallthru
          _
        // Predicated region
        $region29: #{attention_dec_forward.4} parent=11 // pred_check
          %p302 = pneg %p169
        $region30: #{attention_dec_forward.4} parent=11 // pred_check_branch
          %304 = sbr.rel (%p302) target = $region32
        $region31: #{attention_dec_forward.4} parent=11 // pred_region
          %s306 = ssub.s32 16, 16
          %307 = vsyncadd [#allocation15], %s306
          %s309 = sshll.u32 [#allocation14], 4
          %s310 = int_to_ptr.vmem [resolvable:$true] %s309
          %312 = dma.hbm_to_vmem [thread:$0]  %s5, 16, %s310, [#allocation15]
        $region32: #{attention_dec_forward.4} parent=11 // pred_fallthru
          _
        // Predicated region
        $region33: #{attention_dec_forward.4} parent=11 // pred_check
          %p313 = pneg %p190
        $region34: #{attention_dec_forward.4} parent=11 // pred_check_branch
          %315 = sbr.rel (%p313) target = $region36
        $region35: #{attention_dec_forward.4} parent=11 // pred_region
          %s317 = ssub.s32 256, 256
          %318 = vsyncadd [#allocation15], %s317
          %s319 = sshll.u32 [#allocation16], 4
          %s320 = int_to_ptr.vmem [resolvable:$true] %s319
          %325 = dma.hbm_to_vmem [thread:$0]  %s6, 256, %s320, [#allocation15], 64, 64, 4
        $region36: #{attention_dec_forward.4} parent=11 // pred_fallthru
          _
        // Predicated region
        $region37: #{attention_dec_forward.4} parent=11 // pred_check
          %p326 = pneg %p211
        $region38: #{attention_dec_forward.4} parent=11 // pred_check_branch
          %328 = sbr.rel (%p326) target = $region40
        $region39: #{attention_dec_forward.4} parent=11 // pred_region
          %s330 = ssub.s32 16, 16
          %331 = vsyncadd [#allocation18], %s330
          %s333 = sshll.u32 [#allocation17], 4
          %s334 = int_to_ptr.vmem [resolvable:$true] %s333
          %336 = dma.hbm_to_vmem [thread:$0]  %s7, 16, %s334, [#allocation18]
        $region40: #{attention_dec_forward.4} parent=11 // pred_fallthru
          _
      $region12: #{attention_dec_forward.4} parent=5 // pred_fallthru
        _
      %p337 = scmp.lt.s32.totalorder %s24, 2
      // Predicated region
      $region41: #{attention_dec_forward.4} parent=5 // pred_check
        %p338 = pneg %p337
      $region42: #{attention_dec_forward.4} parent=5 // pred_check_branch
        %340 = sbr.rel (%p338) target = $region44
      $region43: #{attention_dec_forward.4} parent=5 // pred_region
        // Predicated region
        $region45: #{attention_dec_forward.4} parent=43 // pred_check
          %p341 = pneg %p79
        $region46: #{attention_dec_forward.4} parent=43 // pred_check_branch
          %343 = sbr.rel (%p341) target = $region48
        $region47: #{attention_dec_forward.4} parent=43 // pred_region
          %s344 = sand.u32 %s24, 1
          %s345 = scalar_lea.sflag [#allocation9], %s344
          %s346 = sand.u32 %s69, 1
          %s347 = smul.addr %s346, 128
          %s348 = scalar_lea.vmem [#allocation8], %s347
          %s349 = smul.u32 16, %s32
          %s351 = ssub.s32 2048, 2048
          %352 = vsyncadd %s345, %s351
          %s353 = smul.addr %s31, 16
          %s354 = sadd.s32 %s349, %s353
          %s355 = smul.addr %s354, 128
          %s356 = scalar_lea.hbm %s1, %s355
          %s357 = sshll.u32 %s348, 4
          %s358 = int_to_ptr.vmem [resolvable:$true] %s357
          %363 = dma.hbm_to_vmem [thread:$0]  %s356, 2048, %s358, %s345, 128, 128, 8
        $region48: #{attention_dec_forward.4} parent=43 // pred_fallthru
          _
      $region44: #{attention_dec_forward.4} parent=5 // pred_fallthru
        _
      %p364 = scmp.le.s32.totalorder 1, %s24
      %p365 = scmp.lt.s32.totalorder %s24, 3
      %p366 = pnand %p364, %p365
      %p367 = pneg %p366
      // Predicated region
      $region49: #{attention_dec_forward.4} parent=5 // pred_check
        _
      $region50: #{attention_dec_forward.4} parent=5 // pred_check_branch
        %369 = sbr.rel (%p366) target = $region52
      $region51: #{attention_dec_forward.4} parent=5 // pred_region
        %s370 = ssub.s32 %s24, 1
        // Predicated region
        $region53: #{attention_dec_forward.4} parent=51 // pred_check
          %p371 = pneg %p57
        $region54: #{attention_dec_forward.4} parent=51 // pred_check_branch
          %373 = sbr.rel (%p371) target = $region56
        $region55: #{attention_dec_forward.4} parent=51 // pred_region
          %374 = dma.done [#allocation6], 384
        $region56: #{attention_dec_forward.4} parent=51 // pred_fallthru
          _
        %s375 = sand.u32 %s29, 1
        %s376 = scalar_lea.sflag [#allocation9], %s375
        %s377 = sand.u32 %s72, 1
        %s378 = smul.addr %s377, 128
        %s379 = scalar_lea.vmem [#allocation8], %s378
        // Predicated region
        $region57: #{attention_dec_forward.4} parent=51 // pred_check
          %p380 = pneg %p85
        $region58: #{attention_dec_forward.4} parent=51 // pred_check_branch
          %382 = sbr.rel (%p380) target = $region60
        $region59: #{attention_dec_forward.4} parent=51 // pred_region
          %383 = dma.done %s376, 2048
        $region60: #{attention_dec_forward.4} parent=51 // pred_fallthru
          _
        // Predicated region
        $region61: #{attention_dec_forward.4} parent=51 // pred_check
          %p384 = pneg %p106
        $region62: #{attention_dec_forward.4} parent=51 // pred_check_branch
          %386 = sbr.rel (%p384) target = $region64
        $region63: #{attention_dec_forward.4} parent=51 // pred_region
          %387 = dma.done [#allocation9], 256
        $region64: #{attention_dec_forward.4} parent=51 // pred_fallthru
          _
        // Predicated region
        $region65: #{attention_dec_forward.4} parent=51 // pred_check
          %p388 = pneg %p127
        $region66: #{attention_dec_forward.4} parent=51 // pred_check_branch
          %390 = sbr.rel (%p388) target = $region68
        $region67: #{attention_dec_forward.4} parent=51 // pred_region
          %391 = dma.done [#allocation12], 16
        $region68: #{attention_dec_forward.4} parent=51 // pred_fallthru
          _
        // Predicated region
        $region69: #{attention_dec_forward.4} parent=51 // pred_check
          %p392 = pneg %p148
        $region70: #{attention_dec_forward.4} parent=51 // pred_check_branch
          %394 = sbr.rel (%p392) target = $region72
        $region71: #{attention_dec_forward.4} parent=51 // pred_region
          %395 = dma.done [#allocation12], 256
        $region72: #{attention_dec_forward.4} parent=51 // pred_fallthru
          _
        // Predicated region
        $region73: #{attention_dec_forward.4} parent=51 // pred_check
          %p396 = pneg %p169
        $region74: #{attention_dec_forward.4} parent=51 // pred_check_branch
          %398 = sbr.rel (%p396) target = $region76
        $region75: #{attention_dec_forward.4} parent=51 // pred_region
          %399 = dma.done [#allocation15], 16
        $region76: #{attention_dec_forward.4} parent=51 // pred_fallthru
          _
        // Predicated region
        $region77: #{attention_dec_forward.4} parent=51 // pred_check
          %p400 = pneg %p190
        $region78: #{attention_dec_forward.4} parent=51 // pred_check_branch
          %402 = sbr.rel (%p400) target = $region80
        $region79: #{attention_dec_forward.4} parent=51 // pred_region
          %403 = dma.done [#allocation15], 256
        $region80: #{attention_dec_forward.4} parent=51 // pred_fallthru
          _
        // Predicated region
        $region81: #{attention_dec_forward.4} parent=51 // pred_check
          %p404 = pneg %p211
        $region82: #{attention_dec_forward.4} parent=51 // pred_check_branch
          %406 = sbr.rel (%p404) target = $region84
        $region83: #{attention_dec_forward.4} parent=51 // pred_region
          %407 = dma.done [#allocation18], 16
        $region84: #{attention_dec_forward.4} parent=51 // pred_fallthru
          _
        %p408 = pneg %p57
        %p409 = pneg %p54
        %s410 = sand.u32 %s29, 1
        %s411 = scalar_lea.sflag [#allocation9], %s410
        %s412 = sand.u32 %s72, 1
        %s413 = smul.addr %s412, 128
        %s414 = scalar_lea.vmem [#allocation8], %s413
        %p415 = pneg %p85
        %p416 = pneg %p82
        %p417 = pneg %p106
        %p418 = pneg %p103
        %p419 = pneg %p127
        %p420 = pneg %p124
        %p421 = pneg %p148
        %p422 = pneg %p145
        %p423 = pneg %p169
        %p424 = pneg %p166
        %p425 = pneg %p190
        %p426 = pneg %p187
        %p427 = pneg %p211
        %p428 = pneg %p208
        %p429 = pneg %p237
        %p430 = pneg %p234
        %s431 = sand.u32 %s224, 1
        %s432 = scalar_lea.sflag [#allocation7], %s431
        %s433 = sand.u32 %s224, 1
        %s434 = smul.addr %s433, 48
        %s435 = scalar_lea.vmem [#allocation19], %s434
        %s436 = smul.u32 16, %s34
        %p438 = scmp.eq.s32.totalorder %s34, 0
        // Predicated region
        $region85: #{attention_dec_forward.4} parent=51 // pred_check
          %p439 = pneg %p438
        $region86: #{attention_dec_forward.4} parent=51 // pred_check_branch
          %441 = sbr.rel (%p439) target = $region88
        $region87: #{attention_dec_forward.4} parent=51 // pred_region
          %vm442 = vcmask 7168
          %443 = vst.msk [vmem:[#allocation2] sm:$0xff] %vm442, -inf
          %444 = vst.msk [vmem:[#allocation2 + $0x8] sm:$0xff] %vm442, -inf
          %445 = vst.msk [vmem:[#allocation2 + $0x10] sm:$0xff] %vm442, -inf
          %446 = vst.msk [vmem:[#allocation2 + $0x18] sm:$0xff] %vm442, -inf
          %447 = vst.msk [vmem:[#allocation2 + $0x20] sm:$0xff] %vm442, -inf
          %448 = vst.msk [vmem:[#allocation2 + $0x28] sm:$0xff] %vm442, -inf
          %449 = vst.msk [vmem:[#allocation2 + $0x30] sm:$0xff] %vm442, -inf
          %450 = vst.msk [vmem:[#allocation2 + $0x38] sm:$0xff] %vm442, -inf
          %451 = vst.msk [vmem:[#allocation2 + $0x40] sm:$0xff] %vm442, -inf
          %452 = vst.msk [vmem:[#allocation2 + $0x48] sm:$0xff] %vm442, -inf
          %453 = vst.msk [vmem:[#allocation2 + $0x50] sm:$0xff] %vm442, -inf
          %454 = vst.msk [vmem:[#allocation2 + $0x58] sm:$0xff] %vm442, -inf
          %455 = vst.msk [vmem:[#allocation2 + $0x60] sm:$0xff] %vm442, -inf
          %456 = vst.msk [vmem:[#allocation2 + $0x68] sm:$0xff] %vm442, -inf
          %457 = vst.msk [vmem:[#allocation2 + $0x70] sm:$0xff] %vm442, -inf
          %458 = vst.msk [vmem:[#allocation2 + $0x78] sm:$0xff] %vm442, -inf
          %459 = vst.msk [vmem:[#allocation2 + $0x80] sm:$0xff] %vm442, -inf
          %460 = vst.msk [vmem:[#allocation2 + $0x88] sm:$0xff] %vm442, -inf
          %461 = vst.msk [vmem:[#allocation2 + $0x90] sm:$0xff] %vm442, -inf
          %462 = vst.msk [vmem:[#allocation2 + $0x98] sm:$0xff] %vm442, -inf
          %463 = vst.msk [vmem:[#allocation2 + $0xa0] sm:$0xff] %vm442, -inf
          %464 = vst.msk [vmem:[#allocation2 + $0xa8] sm:$0xff] %vm442, -inf
          %465 = vst.msk [vmem:[#allocation2 + $0xb0] sm:$0xff] %vm442, -inf
          %466 = vst.msk [vmem:[#allocation2 + $0xb8] sm:$0xff] %vm442, -inf
          %467 = vst.msk [vmem:[#allocation3] sm:$0xff] %vm442, 0.0
          %468 = vst.msk [vmem:[#allocation3 + $0x8] sm:$0xff] %vm442, 0.0
          %469 = vst.msk [vmem:[#allocation3 + $0x10] sm:$0xff] %vm442, 0.0
          %470 = vst.msk [vmem:[#allocation3 + $0x18] sm:$0xff] %vm442, 0.0
          %471 = vst.msk [vmem:[#allocation3 + $0x20] sm:$0xff] %vm442, 0.0
          %472 = vst.msk [vmem:[#allocation3 + $0x28] sm:$0xff] %vm442, 0.0
          %473 = vst.msk [vmem:[#allocation3 + $0x30] sm:$0xff] %vm442, 0.0
          %474 = vst.msk [vmem:[#allocation3 + $0x38] sm:$0xff] %vm442, 0.0
          %475 = vst.msk [vmem:[#allocation3 + $0x40] sm:$0xff] %vm442, 0.0
          %476 = vst.msk [vmem:[#allocation3 + $0x48] sm:$0xff] %vm442, 0.0
          %477 = vst.msk [vmem:[#allocation3 + $0x50] sm:$0xff] %vm442, 0.0
          %478 = vst.msk [vmem:[#allocation3 + $0x58] sm:$0xff] %vm442, 0.0
          %479 = vst.msk [vmem:[#allocation3 + $0x60] sm:$0xff] %vm442, 0.0
          %480 = vst.msk [vmem:[#allocation3 + $0x68] sm:$0xff] %vm442, 0.0
          %481 = vst.msk [vmem:[#allocation3 + $0x70] sm:$0xff] %vm442, 0.0
          %482 = vst.msk [vmem:[#allocation3 + $0x78] sm:$0xff] %vm442, 0.0
          %483 = vst.msk [vmem:[#allocation3 + $0x80] sm:$0xff] %vm442, 0.0
          %484 = vst.msk [vmem:[#allocation3 + $0x88] sm:$0xff] %vm442, 0.0
          %485 = vst.msk [vmem:[#allocation3 + $0x90] sm:$0xff] %vm442, 0.0
          %486 = vst.msk [vmem:[#allocation3 + $0x98] sm:$0xff] %vm442, 0.0
          %487 = vst.msk [vmem:[#allocation3 + $0xa0] sm:$0xff] %vm442, 0.0
          %488 = vst.msk [vmem:[#allocation3 + $0xa8] sm:$0xff] %vm442, 0.0
          %489 = vst.msk [vmem:[#allocation3 + $0xb0] sm:$0xff] %vm442, 0.0
          %490 = vst.msk [vmem:[#allocation3 + $0xb8] sm:$0xff] %vm442, 0.0
          %vm491 = vcmask 261120
          %492 = vst.msk [vmem:[#allocation4] sm:$0xff] %vm491, 0.0
          %493 = vst.msk [vmem:[#allocation4 + $0x8] sm:$0xff] %vm491, 0.0
          %494 = vst.msk [vmem:[#allocation4 + $0x10] sm:$0xff] %vm491, 0.0
          %495 = vst.msk [vmem:[#allocation4 + $0x18] sm:$0xff] %vm491, 0.0
          %496 = vst.msk [vmem:[#allocation4 + $0x20] sm:$0xff] %vm491, 0.0
          %497 = vst.msk [vmem:[#allocation4 + $0x28] sm:$0xff] %vm491, 0.0
        $region88: #{attention_dec_forward.4} parent=51 // pred_fallthru
          _
        %v498 = vld [vmem:[%s379] sm:$0xff]
        %v499 = vld [vmem:[%s379 + $0x8] sm:$0xff]
        %v500 = vld [vmem:[%s379 + $0x10] sm:$0xff]
        %v501 = vld [vmem:[%s379 + $0x18] sm:$0xff]
        %v502 = vld [vmem:[%s379 + $0x20] sm:$0xff]
        %v503 = vld [vmem:[%s379 + $0x28] sm:$0xff]
        %v504 = vld [vmem:[%s379 + $0x30] sm:$0xff]
        %v505 = vld [vmem:[%s379 + $0x38] sm:$0xff]
        %v506 = vld [vmem:[%s379 + $0x40] sm:$0xff]
        %v507 = vld [vmem:[%s379 + $0x48] sm:$0xff]
        %v508 = vld [vmem:[%s379 + $0x50] sm:$0xff]
        %v509 = vld [vmem:[%s379 + $0x58] sm:$0xff]
        %v510 = vld [vmem:[%s379 + $0x60] sm:$0xff]
        %v511 = vld [vmem:[%s379 + $0x68] sm:$0xff]
        %v512 = vld [vmem:[%s379 + $0x70] sm:$0xff]
        %v513 = vld [vmem:[%s379 + $0x78] sm:$0xff]
        %v514 = vpack.c.bf16 %v499, %v498
        %v515 = vpack.c.bf16 %v501, %v500
        %v516 = vpack.c.bf16 %v503, %v502
        %v517 = vpack.c.bf16 %v505, %v504
        %v518 = vpack.c.bf16 %v507, %v506
        %v519 = vpack.c.bf16 %v509, %v508
        %v520 = vpack.c.bf16 %v511, %v510
        %v521 = vpack.c.bf16 %v513, %v512
        %v522 = vld [vmem:[#allocation10] sm:$0xf]
        %v523 = vld [vmem:[#allocation10 + $0x4] sm:$0xf]
        %v524 = vld [vmem:[#allocation10 + $0x8] sm:$0xf]
        %v525 = vld [vmem:[#allocation10 + $0xc] sm:$0xf]
        %v526 = vld [vmem:[#allocation11] sm:$0x1]
        %v528 = vlaneseq
        %v529 = vshrl.u32 %v528, 7
        %v530 = vsub.s32 0, %v529
        %v531 = vrot.slane %v526, %v530
        %v537 = vunpack.c.l.b16 %v522
        %v538 = vunpack.c.l.b16 %v523
        %v539 = vunpack.c.l.b16 %v524
        %v540 = vunpack.c.l.b16 %v525
        %v541 = vpack.c.b16 %v538, %v537
        %v542 = vpack.c.b16 %v540, %v539
        %vm545 = vcmask 261120
        %v547 = vsel %vm545, %v514, 0
        %v550 = vsel %vm545, %v515, 0
        %v553 = vsel %vm545, %v516, 0
        %v556 = vsel %vm545, %v517, 0
        %v559 = vsel %vm545, %v518, 0
        %v562 = vsel %vm545, %v519, 0
        %v565 = vsel %vm545, %v520, 0
        %v568 = vsel %vm545, %v521, 0
        %570 = vmatprep.subr.bf16.mxu0 0
        %571 = vmatpush1.bf16.msra.mxu0 %v541
        %572 = vmatprep.subr.bf16.mxu0 0
        %573 = vmatpush1.bf16.msra.mxu0 %v542
        %574 = vmatprep.subr.bf16.mxu0 0
        %575 = vmatpush1.bf16.msra.mxu0 0
        %576 = vmatprep.subr.bf16.mxu0 0
        %577 = vmatpush1.bf16.msra.mxu0 0
        %578 = vmatprep.subr.bf16.mxu0 0
        %579 = vmatpush1.bf16.msra.mxu0 0
        %580 = vmatprep.subr.bf16.mxu0 0
        %581 = vmatpush1.bf16.msra.mxu0 0
        %582 = vmatprep.subr.bf16.mxu0 0
        %583 = vmatpush1.bf16.msra.mxu0 0
        %584 = vmatprep.subr.bf16.mxu0 0
        %585 = vmatpush1.bf16.msra.mxu0 0
        %586 = vmatprep.subr.bf16.mxu0 0
        %587 = vmatpush1.bf16.msra.mxu0 0
        %588 = vmatprep.subr.bf16.mxu0 0
        %589 = vmatpush1.bf16.msra.mxu0 0
        %590 = vmatprep.subr.bf16.mxu0 0
        %591 = vmatpush1.bf16.msra.mxu0 0
        %592 = vmatprep.subr.bf16.mxu0 0
        %593 = vmatpush1.bf16.msra.mxu0 0
        %594 = vmatprep.subr.bf16.mxu0 0
        %595 = vmatpush1.bf16.msra.mxu0 0
        %596 = vmatprep.subr.bf16.mxu0 0
        %597 = vmatpush1.bf16.msra.mxu0 0
        %598 = vmatprep.subr.bf16.mxu0 0
        %599 = vmatpush1.bf16.msra.mxu0 0
        %600 = vmatprep.subr.bf16.mxu0 0
        %601 = vmatpush1.bf16.msra.mxu0 0
        %602 = vmatprep.mubr.bf16.mxu0 0
        %603 = vmatmul.mubr.bf16.gmra.mrb[0].mxu0 %v547
        %v604 = vpop.f32.mrb[0].mxu0
        %v605 = vadd.f32 %v531, %v604
        %v606 = vpop.f32.mrb[0].mxu0
        %v607 = vpop.f32.mrb[0].mxu0
        %v608 = vadd.f32 %v531, %v607
        %v609 = vpop.f32.mrb[0].mxu0
        %610 = vmatprep.mubr.bf16.mxu0 0
        %611 = vmatmul.mubr.bf16.gmra.mrb[0].mxu0 %v550
        %v612 = vpop.f32.mrb[0].mxu0
        %v613 = vadd.f32 %v531, %v612
        %v614 = vpop.f32.mrb[0].mxu0
        %v615 = vpop.f32.mrb[0].mxu0
        %v616 = vadd.f32 %v531, %v615
        %v617 = vpop.f32.mrb[0].mxu0
        %618 = vmatprep.mubr.bf16.mxu0 0
        %619 = vmatmul.mubr.bf16.gmra.mrb[0].mxu0 %v553
        %v620 = vpop.f32.mrb[0].mxu0
        %v621 = vadd.f32 %v531, %v620
        %v622 = vpop.f32.mrb[0].mxu0
        %v623 = vpop.f32.mrb[0].mxu0
        %v624 = vadd.f32 %v531, %v623
        %v625 = vpop.f32.mrb[0].mxu0
        %626 = vmatprep.mubr.bf16.mxu0 0
        %627 = vmatmul.mubr.bf16.gmra.mrb[0].mxu0 %v556
        %v628 = vpop.f32.mrb[0].mxu0
        %v629 = vadd.f32 %v531, %v628
        %v630 = vpop.f32.mrb[0].mxu0
        %v631 = vpop.f32.mrb[0].mxu0
        %v632 = vadd.f32 %v531, %v631
        %v633 = vpop.f32.mrb[0].mxu0
        %634 = vmatprep.mubr.bf16.mxu0 0
        %635 = vmatmul.mubr.bf16.gmra.mrb[0].mxu0 %v559
        %v636 = vpop.f32.mrb[0].mxu0
        %v637 = vadd.f32 %v531, %v636
        %v638 = vpop.f32.mrb[0].mxu0
        %v639 = vpop.f32.mrb[0].mxu0
        %v640 = vadd.f32 %v531, %v639
        %v641 = vpop.f32.mrb[0].mxu0
        %642 = vmatprep.mubr.bf16.mxu0 0
        %643 = vmatmul.mubr.bf16.gmra.mrb[0].mxu0 %v562
        %v644 = vpop.f32.mrb[0].mxu0
        %v645 = vadd.f32 %v531, %v644
        %v646 = vpop.f32.mrb[0].mxu0
        %v647 = vpop.f32.mrb[0].mxu0
        %v648 = vadd.f32 %v531, %v647
        %v649 = vpop.f32.mrb[0].mxu0
        %650 = vmatprep.mubr.bf16.mxu0 0
        %651 = vmatmul.mubr.bf16.gmra.mrb[0].mxu0 %v565
        %v652 = vpop.f32.mrb[0].mxu0
        %v653 = vadd.f32 %v531, %v652
        %v654 = vpop.f32.mrb[0].mxu0
        %v655 = vpop.f32.mrb[0].mxu0
        %v656 = vadd.f32 %v531, %v655
        %v657 = vpop.f32.mrb[0].mxu0
        %658 = vmatprep.mubr.bf16.mxu0 0
        %659 = vmatmul.mubr.bf16.gmra.mrb[0].mxu0 %v568
        %v660 = vpop.f32.mrb[0].mxu0
        %v661 = vadd.f32 %v531, %v660
        %v662 = vpop.f32.mrb[0].mxu0
        %v663 = vpop.f32.mrb[0].mxu0
        %v664 = vadd.f32 %v531, %v663
        %v665 = vpop.f32.mrb[0].mxu0
        %666 = vdwg.mxu0
        %v667 = vpack.c.bf16 %v608, %v605
        %v668 = vpack.c.bf16 %v616, %v613
        %v669 = vpack.c.bf16 %v624, %v621
        %v670 = vpack.c.bf16 %v632, %v629
        %v671 = vpack.c.bf16 %v640, %v637
        %v672 = vpack.c.bf16 %v648, %v645
        %v673 = vpack.c.bf16 %v656, %v653
        %v674 = vpack.c.bf16 %v664, %v661
        %v675 = vld [vmem:[#allocation13] sm:$0xf]
        %v676 = vld [vmem:[#allocation13 + $0x4] sm:$0xf]
        %v677 = vld [vmem:[#allocation13 + $0x8] sm:$0xf]
        %v678 = vld [vmem:[#allocation13 + $0xc] sm:$0xf]
        %v679 = vld [vmem:[#allocation14] sm:$0x1]
        %v681 = vlaneseq
        %v682 = vshrl.u32 %v681, 7
        %v683 = vsub.s32 0, %v682
        %v684 = vrot.slane %v679, %v683
        %v690 = vunpack.c.l.b16 %v675
        %v691 = vunpack.c.l.b16 %v676
        %v692 = vunpack.c.l.b16 %v677
        %v693 = vunpack.c.l.b16 %v678
        %v694 = vpack.c.b16 %v691, %v690
        %v695 = vpack.c.b16 %v693, %v692
        %698 = vmatprep.subr.bf16.mxu0 0
        %699 = vmatpush1.bf16.msra.mxu0 %v694
        %700 = vmatprep.subr.bf16.mxu0 0
        %701 = vmatpush1.bf16.msra.mxu0 %v695
        %702 = vmatprep.subr.bf16.mxu0 0
        %703 = vmatpush1.bf16.msra.mxu0 0
        %704 = vmatprep.subr.bf16.mxu0 0
        %705 = vmatpush1.bf16.msra.mxu0 0
        %706 = vmatprep.subr.bf16.mxu0 0
        %707 = vmatpush1.bf16.msra.mxu0 0
        %708 = vmatprep.subr.bf16.mxu0 0
        %709 = vmatpush1.bf16.msra.mxu0 0
        %710 = vmatprep.subr.bf16.mxu0 0
        %711 = vmatpush1.bf16.msra.mxu0 0
        %712 = vmatprep.subr.bf16.mxu0 0
        %713 = vmatpush1.bf16.msra.mxu0 0
        %714 = vmatprep.subr.bf16.mxu0 0
        %715 = vmatpush1.bf16.msra.mxu0 0
        %716 = vmatprep.subr.bf16.mxu0 0
        %717 = vmatpush1.bf16.msra.mxu0 0
        %718 = vmatprep.subr.bf16.mxu0 0
        %719 = vmatpush1.bf16.msra.mxu0 0
        %720 = vmatprep.subr.bf16.mxu0 0
        %721 = vmatpush1.bf16.msra.mxu0 0
        %722 = vmatprep.subr.bf16.mxu0 0
        %723 = vmatpush1.bf16.msra.mxu0 0
        %724 = vmatprep.subr.bf16.mxu0 0
        %725 = vmatpush1.bf16.msra.mxu0 0
        %726 = vmatprep.subr.bf16.mxu0 0
        %727 = vmatpush1.bf16.msra.mxu0 0
        %728 = vmatprep.subr.bf16.mxu0 0
        %729 = vmatpush1.bf16.msra.mxu0 0
        %730 = vmatprep.mubr.bf16.mxu0 0
        %731 = vmatmul.mubr.bf16.gmra.mrb[0].mxu0 %v547
        %v732 = vpop.f32.mrb[0].mxu0
        %v733 = vadd.f32 %v684, %v732
        %v734 = vpop.f32.mrb[0].mxu0
        %v735 = vpop.f32.mrb[0].mxu0
        %v736 = vadd.f32 %v684, %v735
        %v737 = vpop.f32.mrb[0].mxu0
        %738 = vmatprep.mubr.bf16.mxu0 0
        %739 = vmatmul.mubr.bf16.gmra.mrb[0].mxu0 %v550
        %v740 = vpop.f32.mrb[0].mxu0
        %v741 = vadd.f32 %v684, %v740
        %v742 = vpop.f32.mrb[0].mxu0
        %v743 = vpop.f32.mrb[0].mxu0
        %v744 = vadd.f32 %v684, %v743
        %v745 = vpop.f32.mrb[0].mxu0
        %746 = vmatprep.mubr.bf16.mxu0 0
        %747 = vmatmul.mubr.bf16.gmra.mrb[0].mxu0 %v553
        %v748 = vpop.f32.mrb[0].mxu0
        %v749 = vadd.f32 %v684, %v748
        %v750 = vpop.f32.mrb[0].mxu0
        %v751 = vpop.f32.mrb[0].mxu0
        %v752 = vadd.f32 %v684, %v751
        %v753 = vpop.f32.mrb[0].mxu0
        %754 = vmatprep.mubr.bf16.mxu0 0
        %755 = vmatmul.mubr.bf16.gmra.mrb[0].mxu0 %v556
        %v756 = vpop.f32.mrb[0].mxu0
        %v757 = vadd.f32 %v684, %v756
        %v758 = vpop.f32.mrb[0].mxu0
        %v759 = vpop.f32.mrb[0].mxu0
        %v760 = vadd.f32 %v684, %v759
        %v761 = vpop.f32.mrb[0].mxu0
        %762 = vmatprep.mubr.bf16.mxu0 0
        %763 = vmatmul.mubr.bf16.gmra.mrb[0].mxu0 %v559
        %v764 = vpop.f32.mrb[0].mxu0
        %v765 = vadd.f32 %v684, %v764
        %v766 = vpop.f32.mrb[0].mxu0
        %v767 = vpop.f32.mrb[0].mxu0
        %v768 = vadd.f32 %v684, %v767
        %v769 = vpop.f32.mrb[0].mxu0
        %770 = vmatprep.mubr.bf16.mxu0 0
        %771 = vmatmul.mubr.bf16.gmra.mrb[0].mxu0 %v562
        %v772 = vpop.f32.mrb[0].mxu0
        %v773 = vadd.f32 %v684, %v772
        %v774 = vpop.f32.mrb[0].mxu0
        %v775 = vpop.f32.mrb[0].mxu0
        %v776 = vadd.f32 %v684, %v775
        %v777 = vpop.f32.mrb[0].mxu0
        %778 = vmatprep.mubr.bf16.mxu0 0
        %779 = vmatmul.mubr.bf16.gmra.mrb[0].mxu0 %v565
        %v780 = vpop.f32.mrb[0].mxu0
        %v781 = vadd.f32 %v684, %v780
        %v782 = vpop.f32.mrb[0].mxu0
        %v783 = vpop.f32.mrb[0].mxu0
        %v784 = vadd.f32 %v684, %v783
        %v785 = vpop.f32.mrb[0].mxu0
        %786 = vmatprep.mubr.bf16.mxu0 0
        %787 = vmatmul.mubr.bf16.gmra.mrb[0].mxu0 %v568
        %v788 = vpop.f32.mrb[0].mxu0
        %v789 = vadd.f32 %v684, %v788
        %v790 = vpop.f32.mrb[0].mxu0
        %v791 = vpop.f32.mrb[0].mxu0
        %v792 = vadd.f32 %v684, %v791
        %v793 = vpop.f32.mrb[0].mxu0
        %794 = vdwg.mxu0
        %v795 = vpack.c.bf16 %v736, %v733
        %v796 = vpack.c.bf16 %v744, %v741
        %v797 = vpack.c.bf16 %v752, %v749
        %v798 = vpack.c.bf16 %v760, %v757
        %v799 = vpack.c.bf16 %v768, %v765
        %v800 = vpack.c.bf16 %v776, %v773
        %v801 = vpack.c.bf16 %v784, %v781
        %v802 = vpack.c.bf16 %v792, %v789
        %s803 = smul.u32 %s34, 128
        %v804 = vlaneseq
        %v805 = vand.u32 %v804, 127
        %v806 = vstv %s803
        %v807 = vadd.s32 %v806, %v805
        %vm808 = vcmp.lt.s32.totalorder %v807, 16
        %v809 = vld [vmem:[#allocation5] sm:$0xf]
        %v810 = vld [vmem:[#allocation5 + $0x4] sm:$0xf]
        %v811 = vld [vmem:[#allocation5 + $0x8] sm:$0xf]
        %v812 = vld [vmem:[#allocation5 + $0xc] sm:$0xf]
        %v813 = vld [vmem:[#allocation5 + $0x10] sm:$0xf]
        %v814 = vld [vmem:[#allocation5 + $0x14] sm:$0xf]
        %v821 = vunpack.c.l.b16 %v809
        %v822 = vunpack.c.l.b16 %v810
        %v823 = vunpack.c.l.b16 %v811
        %v824 = vunpack.c.l.b16 %v812
        %v825 = vunpack.c.l.b16 %v813
        %v826 = vunpack.c.l.b16 %v814
        %v827 = vpack.c.b16 %v822, %v821
        %v828 = vpack.c.b16 %v824, %v823
        %v829 = vpack.c.b16 %v826, %v825
        %vm830 = vcmask 64512
        %v832 = vsel %vm830, %v827, 0
        %v835 = vsel %vm830, %v828, 0
        %v838 = vsel %vm830, %v829, 0
        %v841 = vsel %vm830, %v667, 0
        %v844 = vsel %vm830, %v668, 0
        %v847 = vsel %vm830, %v669, 0
        %v850 = vsel %vm830, %v670, 0
        %v853 = vsel %vm830, %v671, 0
        %v856 = vsel %vm830, %v672, 0
        %v859 = vsel %vm830, %v673, 0
        %v862 = vsel %vm830, %v674, 0
        %864 = vmatprep.subr.bf16.mxu0 0
        %865 = vmatpush1.bf16.xpose.msra.mxu0 %v841
        %866 = vmatprep.subr.bf16.mxu0 0
        %867 = vmatpush1.bf16.xpose.msra.mxu0 %v844
        %868 = vmatprep.subr.bf16.mxu0 0
        %869 = vmatpush1.bf16.xpose.msra.mxu0 %v847
        %870 = vmatprep.subr.bf16.mxu0 0
        %871 = vmatpush1.bf16.xpose.msra.mxu0 %v850
        %872 = vmatprep.subr.bf16.mxu0 0
        %873 = vmatpush1.bf16.xpose.msra.mxu0 %v853
        %874 = vmatprep.subr.bf16.mxu0 0
        %875 = vmatpush1.bf16.xpose.msra.mxu0 %v856
        %876 = vmatprep.subr.bf16.mxu0 0
        %877 = vmatpush1.bf16.xpose.msra.mxu0 %v859
        %878 = vmatprep.subr.bf16.mxu0 0
        %879 = vmatpush1.bf16.xpose.msra.mxu0 %v862
        %880 = vmatprep.subr.bf16.mxu0 0
        %881 = vmatpush1.bf16.xpose.msra.mxu0 0
        %882 = vmatprep.subr.bf16.mxu0 0
        %883 = vmatpush1.bf16.xpose.msra.mxu0 0
        %884 = vmatprep.subr.bf16.mxu0 0
        %885 = vmatpush1.bf16.xpose.msra.mxu0 0
        %886 = vmatprep.subr.bf16.mxu0 0
        %887 = vmatpush1.bf16.xpose.msra.mxu0 0
        %888 = vmatprep.subr.bf16.mxu0 0
        %889 = vmatpush1.bf16.xpose.msra.mxu0 0
        %890 = vmatprep.subr.bf16.mxu0 0
        %891 = vmatpush1.bf16.xpose.msra.mxu0 0
        %892 = vmatprep.subr.bf16.mxu0 0
        %893 = vmatpush1.bf16.xpose.msra.mxu0 0
        %894 = vmatprep.subr.bf16.mxu0 0
        %895 = vmatpush1.bf16.xpose.msra.mxu0 0
        %896 = vmatprep.mubr.bf16.mxu0 0
        %897 = vmatmul.mubr.bf16.gmra.mrb[0].mxu0 %v832
        %v898 = vpop.f32.mrb[0].mxu0
        %v899 = vadd.f32 0.0, %v898
        %v900 = vpop.f32.mrb[0].mxu0
        %v901 = vpop.f32.mrb[0].mxu0
        %v902 = vadd.f32 0.0, %v901
        %v903 = vpop.f32.mrb[0].mxu0
        %904 = vmatprep.mubr.bf16.mxu0 0
        %905 = vmatmul.mubr.bf16.gmra.mrb[0].mxu0 %v835
        %v906 = vpop.f32.mrb[0].mxu0
        %v907 = vadd.f32 0.0, %v906
        %v908 = vpop.f32.mrb[0].mxu0
        %v909 = vpop.f32.mrb[0].mxu0
        %v910 = vadd.f32 0.0, %v909
        %v911 = vpop.f32.mrb[0].mxu0
        %912 = vmatprep.mubr.bf16.mxu0 0
        %913 = vmatmul.mubr.bf16.gmra.mrb[0].mxu0 %v838
        %v914 = vpop.f32.mrb[0].mxu0
        %v915 = vadd.f32 0.0, %v914
        %v916 = vpop.f32.mrb[0].mxu0
        %v917 = vpop.f32.mrb[0].mxu0
        %v918 = vadd.f32 0.0, %v917
        %v919 = vpop.f32.mrb[0].mxu0
        %920 = vdwg.mxu0
        %v921 = vsel %vm808, %v899, -inf
        %v922 = vsel %vm808, %v902, -inf
        %v923 = vsel %vm808, %v907, -inf
        %v924 = vsel %vm808, %v910, -inf
        %v925 = vsel %vm808, %v915, -inf
        %v926 = vsel %vm808, %v918, -inf
        %v927 = vld [vmem:[#allocation2] sm:$0xff]
        %v928 = vld [vmem:[#allocation2 + $0x8] sm:$0xff]
        %v929 = vld [vmem:[#allocation2 + $0x10] sm:$0xff]
        %v930 = vld [vmem:[#allocation2 + $0x18] sm:$0xff]
        %v931 = vld [vmem:[#allocation2 + $0x20] sm:$0xff]
        %v932 = vld [vmem:[#allocation2 + $0x28] sm:$0xff]
        %933 = vmax.xlane.f32.xlu0 %v921
        %v934 = vpop.xlane.xlu0 %933
        %935 = vmax.xlane.f32.xlu0 %v922
        %v936 = vpop.xlane.xlu0 %935
        %937 = vmax.xlane.f32.xlu0 %v923
        %v938 = vpop.xlane.xlu0 %937
        %939 = vmax.xlane.f32.xlu0 %v924
        %v940 = vpop.xlane.xlu0 %939
        %941 = vmax.xlane.f32.xlu0 %v925
        %v942 = vpop.xlane.xlu0 %941
        %943 = vmax.xlane.f32.xlu0 %v926
        %v944 = vpop.xlane.xlu0 %943
        %v945 = vmax.f32 %v927, %v934
        %v946 = vmax.f32 %v928, %v936
        %v947 = vmax.f32 %v929, %v938
        %v948 = vmax.f32 %v930, %v940
        %v949 = vmax.f32 %v931, %v942
        %v950 = vmax.f32 %v932, %v944
        %v951 = vsub.f32 %v927, %v945
        %v952 = vsub.f32 %v928, %v946
        %v953 = vsub.f32 %v929, %v947
        %v954 = vsub.f32 %v930, %v948
        %v955 = vsub.f32 %v931, %v949
        %v956 = vsub.f32 %v932, %v950
        %v957 = vmul.f32 %v951, 1.442695
        %v958 = vpow.pop %v957
        %v959 = vmul.f32 %v952, 1.442695
        %v960 = vpow.pop %v959
        %v961 = vmul.f32 %v953, 1.442695
        %v962 = vpow.pop %v961
        %v963 = vmul.f32 %v954, 1.442695
        %v964 = vpow.pop %v963
        %v965 = vmul.f32 %v955, 1.442695
        %v966 = vpow.pop %v965
        %v967 = vmul.f32 %v956, 1.442695
        %v968 = vpow.pop %v967
        %970 = vset.pattern.permute.xlu0 0
        %971 = vperm.xlu0 %970, %v945
        %v972 = vpop.permute.xlu0 %971
        %975 = vset.pattern.permute.xlu0 0
        %976 = vperm.xlu0 %975, %v946
        %v977 = vpop.permute.xlu0 %976
        %980 = vset.pattern.permute.xlu0 0
        %981 = vperm.xlu0 %980, %v947
        %v982 = vpop.permute.xlu0 %981
        %985 = vset.pattern.permute.xlu0 0
        %986 = vperm.xlu0 %985, %v948
        %v987 = vpop.permute.xlu0 %986
        %990 = vset.pattern.permute.xlu0 0
        %991 = vperm.xlu0 %990, %v949
        %v992 = vpop.permute.xlu0 %991
        %995 = vset.pattern.permute.xlu0 0
        %996 = vperm.xlu0 %995, %v950
        %v997 = vpop.permute.xlu0 %996
        %v999 = vsub.f32 %v921, %v972
        %v1000 = vsub.f32 %v922, %v977
        %v1001 = vsub.f32 %v923, %v982
        %v1002 = vsub.f32 %v924, %v987
        %v1003 = vsub.f32 %v925, %v992
        %v1004 = vsub.f32 %v926, %v997
        %v1005 = vmul.f32 %v999, 1.442695
        %v1006 = vpow.pop %v1005
        %v1007 = vmul.f32 %v1000, 1.442695
        %v1008 = vpow.pop %v1007
        %v1009 = vmul.f32 %v1001, 1.442695
        %v1010 = vpow.pop %v1009
        %v1011 = vmul.f32 %v1002, 1.442695
        %v1012 = vpow.pop %v1011
        %v1013 = vmul.f32 %v1003, 1.442695
        %v1014 = vpow.pop %v1013
        %v1015 = vmul.f32 %v1004, 1.442695
        %v1016 = vpow.pop %v1015
        %v1017 = vld [vmem:[#allocation3] sm:$0xff]
        %v1018 = vld [vmem:[#allocation3 + $0x8] sm:$0xff]
        %v1019 = vld [vmem:[#allocation3 + $0x10] sm:$0xff]
        %v1020 = vld [vmem:[#allocation3 + $0x18] sm:$0xff]
        %v1021 = vld [vmem:[#allocation3 + $0x20] sm:$0xff]
        %v1022 = vld [vmem:[#allocation3 + $0x28] sm:$0xff]
        %v1023 = vmul.f32 %v958, %v1017
        %v1024 = vmul.f32 %v960, %v1018
        %v1025 = vmul.f32 %v962, %v1019
        %v1026 = vmul.f32 %v964, %v1020
        %v1027 = vmul.f32 %v966, %v1021
        %v1028 = vmul.f32 %v968, %v1022
        %1029 = vadd.xlane.f32.xlu0 %v1006
        %v1030 = vpop.xlane.xlu0 %1029
        %1031 = vadd.xlane.f32.xlu0 %v1008
        %v1032 = vpop.xlane.xlu0 %1031
        %1033 = vadd.xlane.f32.xlu0 %v1010
        %v1034 = vpop.xlane.xlu0 %1033
        %1035 = vadd.xlane.f32.xlu0 %v1012
        %v1036 = vpop.xlane.xlu0 %1035
        %1037 = vadd.xlane.f32.xlu0 %v1014
        %v1038 = vpop.xlane.xlu0 %1037
        %1039 = vadd.xlane.f32.xlu0 %v1016
        %v1040 = vpop.xlane.xlu0 %1039
        %v1041 = vadd.f32 %v1023, %v1030
        %v1042 = vadd.f32 %v1024, %v1032
        %v1043 = vadd.f32 %v1025, %v1034
        %v1044 = vadd.f32 %v1026, %v1036
        %v1045 = vadd.f32 %v1027, %v1038
        %v1046 = vadd.f32 %v1028, %v1040
        %vm1047 = vcmask 7168
        %1048 = vst.msk [vmem:[#allocation3] sm:$0xff] %vm1047, %v1041
        %1049 = vst.msk [vmem:[#allocation3 + $0x8] sm:$0xff] %vm1047, %v1042
        %1050 = vst.msk [vmem:[#allocation3 + $0x10] sm:$0xff] %vm1047, %v1043
        %1051 = vst.msk [vmem:[#allocation3 + $0x18] sm:$0xff] %vm1047, %v1044
        %1052 = vst.msk [vmem:[#allocation3 + $0x20] sm:$0xff] %vm1047, %v1045
        %1053 = vst.msk [vmem:[#allocation3 + $0x28] sm:$0xff] %vm1047, %v1046
        %1054 = vst.msk [vmem:[#allocation2] sm:$0xff] %vm1047, %v945
        %1055 = vst.msk [vmem:[#allocation2 + $0x8] sm:$0xff] %vm1047, %v946
        %1056 = vst.msk [vmem:[#allocation2 + $0x10] sm:$0xff] %vm1047, %v947
        %1057 = vst.msk [vmem:[#allocation2 + $0x18] sm:$0xff] %vm1047, %v948
        %1058 = vst.msk [vmem:[#allocation2 + $0x20] sm:$0xff] %vm1047, %v949
        %1059 = vst.msk [vmem:[#allocation2 + $0x28] sm:$0xff] %vm1047, %v950
        %v1060 = vpack.c.bf16 %v1008, %v1006
        %v1061 = vpack.c.bf16 %v1012, %v1010
        %v1062 = vpack.c.bf16 %v1016, %v1014
        %1063 = vmatprep.subr.bf16.mxu0 0
        %1064 = vmatpush1.bf16.msra.mxu0 %v795
        %1065 = vmatprep.subr.bf16.mxu0 0
        %1066 = vmatpush1.bf16.msra.mxu0 %v796
        %1067 = vmatprep.subr.bf16.mxu0 0
        %1068 = vmatpush1.bf16.msra.mxu0 %v797
        %1069 = vmatprep.subr.bf16.mxu0 0
        %1070 = vmatpush1.bf16.msra.mxu0 %v798
        %1071 = vmatprep.subr.bf16.mxu0 0
        %1072 = vmatpush1.bf16.msra.mxu0 %v799
        %1073 = vmatprep.subr.bf16.mxu0 0
        %1074 = vmatpush1.bf16.msra.mxu0 %v800
        %1075 = vmatprep.subr.bf16.mxu0 0
        %1076 = vmatpush1.bf16.msra.mxu0 %v801
        %1077 = vmatprep.subr.bf16.mxu0 0
        %1078 = vmatpush1.bf16.msra.mxu0 %v802
        %1079 = vmatprep.subr.bf16.mxu0 0
        %1080 = vmatpush1.bf16.msra.mxu0 0
        %1081 = vmatprep.subr.bf16.mxu0 0
        %1082 = vmatpush1.bf16.msra.mxu0 0
        %1083 = vmatprep.subr.bf16.mxu0 0
        %1084 = vmatpush1.bf16.msra.mxu0 0
        %1085 = vmatprep.subr.bf16.mxu0 0
        %1086 = vmatpush1.bf16.msra.mxu0 0
        %1087 = vmatprep.subr.bf16.mxu0 0
        %1088 = vmatpush1.bf16.msra.mxu0 0
        %1089 = vmatprep.subr.bf16.mxu0 0
        %1090 = vmatpush1.bf16.msra.mxu0 0
        %1091 = vmatprep.subr.bf16.mxu0 0
        %1092 = vmatpush1.bf16.msra.mxu0 0
        %1093 = vmatprep.subr.bf16.mxu0 0
        %1094 = vmatpush1.bf16.msra.mxu0 0
        %1095 = vmatprep.mubr.bf16.mxu0 0
        %1096 = vmatmul.mubr.bf16.gmra.mrb[0].mxu0 %v1060
        %v1097 = vpop.f32.mrb[0].mxu0
        %v1098 = vadd.f32 0.0, %v1097
        %v1099 = vpop.f32.mrb[0].mxu0
        %v1100 = vpop.f32.mrb[0].mxu0
        %v1101 = vadd.f32 0.0, %v1100
        %v1102 = vpop.f32.mrb[0].mxu0
        %1103 = vmatprep.mubr.bf16.mxu0 0
        %1104 = vmatmul.mubr.bf16.gmra.mrb[0].mxu0 %v1061
        %v1105 = vpop.f32.mrb[0].mxu0
        %v1106 = vadd.f32 0.0, %v1105
        %v1107 = vpop.f32.mrb[0].mxu0
        %v1108 = vpop.f32.mrb[0].mxu0
        %v1109 = vadd.f32 0.0, %v1108
        %v1110 = vpop.f32.mrb[0].mxu0
        %1111 = vmatprep.mubr.bf16.mxu0 0
        %1112 = vmatmul.mubr.bf16.gmra.mrb[0].mxu0 %v1062
        %v1113 = vpop.f32.mrb[0].mxu0
        %v1114 = vadd.f32 0.0, %v1113
        %v1115 = vpop.f32.mrb[0].mxu0
        %v1116 = vpop.f32.mrb[0].mxu0
        %v1117 = vadd.f32 0.0, %v1116
        %v1118 = vpop.f32.mrb[0].mxu0
        %1119 = vdwg.mxu0
        %1121 = vset.pattern.permute.xlu0 0
        %1122 = vperm.xlu0 %1121, %v958
        %v1123 = vpop.permute.xlu0 %1122
        %1126 = vset.pattern.permute.xlu0 0
        %1127 = vperm.xlu0 %1126, %v960
        %v1128 = vpop.permute.xlu0 %1127
        %1131 = vset.pattern.permute.xlu0 0
        %1132 = vperm.xlu0 %1131, %v962
        %v1133 = vpop.permute.xlu0 %1132
        %1136 = vset.pattern.permute.xlu0 0
        %1137 = vperm.xlu0 %1136, %v964
        %v1138 = vpop.permute.xlu0 %1137
        %1141 = vset.pattern.permute.xlu0 0
        %1142 = vperm.xlu0 %1141, %v966
        %v1143 = vpop.permute.xlu0 %1142
        %1146 = vset.pattern.permute.xlu0 0
        %1147 = vperm.xlu0 %1146, %v968
        %v1148 = vpop.permute.xlu0 %1147
        %v1150 = vld [vmem:[#allocation5] sm:$0xf]
        %v1151 = vld [vmem:[#allocation5 + $0x4] sm:$0xf]
        %v1152 = vld [vmem:[#allocation5 + $0x8] sm:$0xf]
        %v1153 = vld [vmem:[#allocation5 + $0xc] sm:$0xf]
        %v1154 = vld [vmem:[#allocation5 + $0x10] sm:$0xf]
        %v1155 = vld [vmem:[#allocation5 + $0x14] sm:$0xf]
        %v1162 = vunpack.c.l.b16 %v1150
        %v1163 = vunpack.c.l.b16 %v1151
        %v1164 = vunpack.c.l.b16 %v1152
        %v1165 = vunpack.c.l.b16 %v1153
        %v1166 = vunpack.c.l.b16 %v1154
        %v1167 = vunpack.c.l.b16 %v1155
        %v1168 = vpack.c.b16 %v1163, %v1162
        %v1169 = vpack.c.b16 %v1165, %v1164
        %v1170 = vpack.c.b16 %v1167, %v1166
        %1171 = vrot.lane.b32.xlu0 %v1168, 120
        %v1172 = vpop.permute.xlu0 %1171
        %1173 = vrot.lane.b32.xlu0 %v1169, 120
        %v1174 = vpop.permute.xlu0 %1173
        %1175 = vrot.lane.b32.xlu0 %v1170, 120
        %v1176 = vpop.permute.xlu0 %1175
        %1185 = vrot.lane.b32.xlu0 %v667, 120
        %v1186 = vpop.permute.xlu0 %1185
        %1187 = vrot.lane.b32.xlu0 %v668, 120
        %v1188 = vpop.permute.xlu0 %1187
        %1189 = vrot.lane.b32.xlu0 %v669, 120
        %v1190 = vpop.permute.xlu0 %1189
        %1191 = vrot.lane.b32.xlu0 %v670, 120
        %v1192 = vpop.permute.xlu0 %1191
        %1193 = vrot.lane.b32.xlu0 %v671, 120
        %v1194 = vpop.permute.xlu0 %1193
        %1195 = vrot.lane.b32.xlu0 %v672, 120
        %v1196 = vpop.permute.xlu0 %1195
        %1197 = vrot.lane.b32.xlu0 %v673, 120
        %v1198 = vpop.permute.xlu0 %1197
        %1199 = vrot.lane.b32.xlu0 %v674, 120
        %v1200 = vpop.permute.xlu0 %1199
        %v1202 = vsel %vm830, %v1172, 0
        %v1205 = vsel %vm830, %v1174, 0
        %v1208 = vsel %vm830, %v1176, 0
        %v1211 = vsel %vm830, %v1186, 0
        %v1214 = vsel %vm830, %v1188, 0
        %v1217 = vsel %vm830, %v1190, 0
        %v1220 = vsel %vm830, %v1192, 0
        %v1223 = vsel %vm830, %v1194, 0
        %v1226 = vsel %vm830, %v1196, 0
        %v1229 = vsel %vm830, %v1198, 0
        %v1232 = vsel %vm830, %v1200, 0
        %1234 = vmatprep.subr.bf16.mxu0 0
        %1235 = vmatpush1.bf16.xpose.msra.mxu0 %v1211
        %1236 = vmatprep.subr.bf16.mxu0 0
        %1237 = vmatpush1.bf16.xpose.msra.mxu0 %v1214
        %1238 = vmatprep.subr.bf16.mxu0 0
        %1239 = vmatpush1.bf16.xpose.msra.mxu0 %v1217
        %1240 = vmatprep.subr.bf16.mxu0 0
        %1241 = vmatpush1.bf16.xpose.msra.mxu0 %v1220
        %1242 = vmatprep.subr.bf16.mxu0 0
        %1243 = vmatpush1.bf16.xpose.msra.mxu0 %v1223
        %1244 = vmatprep.subr.bf16.mxu0 0
        %1245 = vmatpush1.bf16.xpose.msra.mxu0 %v1226
        %1246 = vmatprep.subr.bf16.mxu0 0
        %1247 = vmatpush1.bf16.xpose.msra.mxu0 %v1229
        %1248 = vmatprep.subr.bf16.mxu0 0
        %1249 = vmatpush1.bf16.xpose.msra.mxu0 %v1232
        %1250 = vmatprep.subr.bf16.mxu0 0
        %1251 = vmatpush1.bf16.xpose.msra.mxu0 0
        %1252 = vmatprep.subr.bf16.mxu0 0
        %1253 = vmatpush1.bf16.xpose.msra.mxu0 0
        %1254 = vmatprep.subr.bf16.mxu0 0
        %1255 = vmatpush1.bf16.xpose.msra.mxu0 0
        %1256 = vmatprep.subr.bf16.mxu0 0
        %1257 = vmatpush1.bf16.xpose.msra.mxu0 0
        %1258 = vmatprep.subr.bf16.mxu0 0
        %1259 = vmatpush1.bf16.xpose.msra.mxu0 0
        %1260 = vmatprep.subr.bf16.mxu0 0
        %1261 = vmatpush1.bf16.xpose.msra.mxu0 0
        %1262 = vmatprep.subr.bf16.mxu0 0
        %1263 = vmatpush1.bf16.xpose.msra.mxu0 0
        %1264 = vmatprep.subr.bf16.mxu0 0
        %1265 = vmatpush1.bf16.xpose.msra.mxu0 0
        %1266 = vmatprep.mubr.bf16.mxu0 0
        %1267 = vmatmul.mubr.bf16.gmra.mrb[0].mxu0 %v1202
        %v1268 = vpop.f32.mrb[0].mxu0
        %v1269 = vadd.f32 0.0, %v1268
        %v1270 = vpop.f32.mrb[0].mxu0
        %v1271 = vpop.f32.mrb[0].mxu0
        %v1272 = vadd.f32 0.0, %v1271
        %v1273 = vpop.f32.mrb[0].mxu0
        %1274 = vmatprep.mubr.bf16.mxu0 0
        %1275 = vmatmul.mubr.bf16.gmra.mrb[0].mxu0 %v1205
        %v1276 = vpop.f32.mrb[0].mxu0
        %v1277 = vadd.f32 0.0, %v1276
        %v1278 = vpop.f32.mrb[0].mxu0
        %v1279 = vpop.f32.mrb[0].mxu0
        %v1280 = vadd.f32 0.0, %v1279
        %v1281 = vpop.f32.mrb[0].mxu0
        %1282 = vmatprep.mubr.bf16.mxu0 0
        %1283 = vmatmul.mubr.bf16.gmra.mrb[0].mxu0 %v1208
        %v1284 = vpop.f32.mrb[0].mxu0
        %v1285 = vadd.f32 0.0, %v1284
        %v1286 = vpop.f32.mrb[0].mxu0
        %v1287 = vpop.f32.mrb[0].mxu0
        %v1288 = vadd.f32 0.0, %v1287
        %v1289 = vpop.f32.mrb[0].mxu0
        %1290 = vdwg.mxu0
        %v1291 = vsel %vm808, %v1269, -inf
        %v1292 = vsel %vm808, %v1272, -inf
        %v1293 = vsel %vm808, %v1277, -inf
        %v1294 = vsel %vm808, %v1280, -inf
        %v1295 = vsel %vm808, %v1285, -inf
        %v1296 = vsel %vm808, %v1288, -inf
        %s1297 = scalar_lea.vmem [#allocation2], 48
        %v1298 = vld [vmem:[%s1297] sm:$0xff]
        %v1299 = vld [vmem:[%s1297 + $0x8] sm:$0xff]
        %v1300 = vld [vmem:[%s1297 + $0x10] sm:$0xff]
        %v1301 = vld [vmem:[%s1297 + $0x18] sm:$0xff]
        %v1302 = vld [vmem:[%s1297 + $0x20] sm:$0xff]
        %v1303 = vld [vmem:[%s1297 + $0x28] sm:$0xff]
        %1304 = vmax.xlane.f32.xlu0 %v1291
        %v1305 = vpop.xlane.xlu0 %1304
        %1306 = vmax.xlane.f32.xlu0 %v1292
        %v1307 = vpop.xlane.xlu0 %1306
        %1308 = vmax.xlane.f32.xlu0 %v1293
        %v1309 = vpop.xlane.xlu0 %1308
        %1310 = vmax.xlane.f32.xlu0 %v1294
        %v1311 = vpop.xlane.xlu0 %1310
        %1312 = vmax.xlane.f32.xlu0 %v1295
        %v1313 = vpop.xlane.xlu0 %1312
        %1314 = vmax.xlane.f32.xlu0 %v1296
        %v1315 = vpop.xlane.xlu0 %1314
        %v1316 = vmax.f32 %v1298, %v1305
        %v1317 = vmax.f32 %v1299, %v1307
        %v1318 = vmax.f32 %v1300, %v1309
        %v1319 = vmax.f32 %v1301, %v1311
        %v1320 = vmax.f32 %v1302, %v1313
        %v1321 = vmax.f32 %v1303, %v1315
        %v1322 = vsub.f32 %v1298, %v1316
        %v1323 = vsub.f32 %v1299, %v1317
        %v1324 = vsub.f32 %v1300, %v1318
        %v1325 = vsub.f32 %v1301, %v1319
        %v1326 = vsub.f32 %v1302, %v1320
        %v1327 = vsub.f32 %v1303, %v1321
        %v1328 = vmul.f32 %v1322, 1.442695
        %v1329 = vpow.pop %v1328
        %v1330 = vmul.f32 %v1323, 1.442695
        %v1331 = vpow.pop %v1330
        %v1332 = vmul.f32 %v1324, 1.442695
        %v1333 = vpow.pop %v1332
        %v1334 = vmul.f32 %v1325, 1.442695
        %v1335 = vpow.pop %v1334
        %v1336 = vmul.f32 %v1326, 1.442695
        %v1337 = vpow.pop %v1336
        %v1338 = vmul.f32 %v1327, 1.442695
        %v1339 = vpow.pop %v1338
        %1341 = vset.pattern.permute.xlu0 0
        %1342 = vperm.xlu0 %1341, %v1316
        %v1343 = vpop.permute.xlu0 %1342
        %1346 = vset.pattern.permute.xlu0 0
        %1347 = vperm.xlu0 %1346, %v1317
        %v1348 = vpop.permute.xlu0 %1347
        %1351 = vset.pattern.permute.xlu0 0
        %1352 = vperm.xlu0 %1351, %v1318
        %v1353 = vpop.permute.xlu0 %1352
        %1356 = vset.pattern.permute.xlu0 0
        %1357 = vperm.xlu0 %1356, %v1319
        %v1358 = vpop.permute.xlu0 %1357
        %1361 = vset.pattern.permute.xlu0 0
        %1362 = vperm.xlu0 %1361, %v1320
        %v1363 = vpop.permute.xlu0 %1362
        %1366 = vset.pattern.permute.xlu0 0
        %1367 = vperm.xlu0 %1366, %v1321
        %v1368 = vpop.permute.xlu0 %1367
        %v1370 = vsub.f32 %v1291, %v1343
        %v1371 = vsub.f32 %v1292, %v1348
        %v1372 = vsub.f32 %v1293, %v1353
        %v1373 = vsub.f32 %v1294, %v1358
        %v1374 = vsub.f32 %v1295, %v1363
        %v1375 = vsub.f32 %v1296, %v1368
        %v1376 = vmul.f32 %v1370, 1.442695
        %v1377 = vpow.pop %v1376
        %v1378 = vmul.f32 %v1371, 1.442695
        %v1379 = vpow.pop %v1378
        %v1380 = vmul.f32 %v1372, 1.442695
        %v1381 = vpow.pop %v1380
        %v1382 = vmul.f32 %v1373, 1.442695
        %v1383 = vpow.pop %v1382
        %v1384 = vmul.f32 %v1374, 1.442695
        %v1385 = vpow.pop %v1384
        %v1386 = vmul.f32 %v1375, 1.442695
        %v1387 = vpow.pop %v1386
        %s1388 = scalar_lea.vmem [#allocation3], 48
        %v1389 = vld [vmem:[%s1388] sm:$0xff]
        %v1390 = vld [vmem:[%s1388 + $0x8] sm:$0xff]
        %v1391 = vld [vmem:[%s1388 + $0x10] sm:$0xff]
        %v1392 = vld [vmem:[%s1388 + $0x18] sm:$0xff]
        %v1393 = vld [vmem:[%s1388 + $0x20] sm:$0xff]
        %v1394 = vld [vmem:[%s1388 + $0x28] sm:$0xff]
        %v1395 = vmul.f32 %v1329, %v1389
        %v1396 = vmul.f32 %v1331, %v1390
        %v1397 = vmul.f32 %v1333, %v1391
        %v1398 = vmul.f32 %v1335, %v1392
        %v1399 = vmul.f32 %v1337, %v1393
        %v1400 = vmul.f32 %v1339, %v1394
        %1401 = vadd.xlane.f32.xlu0 %v1377
        %v1402 = vpop.xlane.xlu0 %1401
        %1403 = vadd.xlane.f32.xlu0 %v1379
        %v1404 = vpop.xlane.xlu0 %1403
        %1405 = vadd.xlane.f32.xlu0 %v1381
        %v1406 = vpop.xlane.xlu0 %1405
        %1407 = vadd.xlane.f32.xlu0 %v1383
        %v1408 = vpop.xlane.xlu0 %1407
        %1409 = vadd.xlane.f32.xlu0 %v1385
        %v1410 = vpop.xlane.xlu0 %1409
        %1411 = vadd.xlane.f32.xlu0 %v1387
        %v1412 = vpop.xlane.xlu0 %1411
        %v1413 = vadd.f32 %v1395, %v1402
        %v1414 = vadd.f32 %v1396, %v1404
        %v1415 = vadd.f32 %v1397, %v1406
        %v1416 = vadd.f32 %v1398, %v1408
        %v1417 = vadd.f32 %v1399, %v1410
        %v1418 = vadd.f32 %v1400, %v1412
        %1419 = vst.msk [vmem:[%s1388] sm:$0xff] %vm1047, %v1413
        %1420 = vst.msk [vmem:[%s1388 + $0x8] sm:$0xff] %vm1047, %v1414
        %1421 = vst.msk [vmem:[%s1388 + $0x10] sm:$0xff] %vm1047, %v1415
        %1422 = vst.msk [vmem:[%s1388 + $0x18] sm:$0xff] %vm1047, %v1416
        %1423 = vst.msk [vmem:[%s1388 + $0x20] sm:$0xff] %vm1047, %v1417
        %1424 = vst.msk [vmem:[%s1388 + $0x28] sm:$0xff] %vm1047, %v1418
        %1425 = vst.msk [vmem:[%s1297] sm:$0xff] %vm1047, %v1316
        %1426 = vst.msk [vmem:[%s1297 + $0x8] sm:$0xff] %vm1047, %v1317
        %1427 = vst.msk [vmem:[%s1297 + $0x10] sm:$0xff] %vm1047, %v1318
        %1428 = vst.msk [vmem:[%s1297 + $0x18] sm:$0xff] %vm1047, %v1319
        %1429 = vst.msk [vmem:[%s1297 + $0x20] sm:$0xff] %vm1047, %v1320
        %1430 = vst.msk [vmem:[%s1297 + $0x28] sm:$0xff] %vm1047, %v1321
        %v1431 = vpack.c.bf16 %v1379, %v1377
        %v1432 = vpack.c.bf16 %v1383, %v1381
        %v1433 = vpack.c.bf16 %v1387, %v1385
        %1442 = vrot.lane.b32.xlu0 %v795, 120
        %v1443 = vpop.permute.xlu0 %1442
        %1444 = vrot.lane.b32.xlu0 %v796, 120
        %v1445 = vpop.permute.xlu0 %1444
        %1446 = vrot.lane.b32.xlu0 %v797, 120
        %v1447 = vpop.permute.xlu0 %1446
        %1448 = vrot.lane.b32.xlu0 %v798, 120
        %v1449 = vpop.permute.xlu0 %1448
        %1450 = vrot.lane.b32.xlu0 %v799, 120
        %v1451 = vpop.permute.xlu0 %1450
        %1452 = vrot.lane.b32.xlu0 %v800, 120
        %v1453 = vpop.permute.xlu0 %1452
        %1454 = vrot.lane.b32.xlu0 %v801, 120
        %v1455 = vpop.permute.xlu0 %1454
        %1456 = vrot.lane.b32.xlu0 %v802, 120
        %v1457 = vpop.permute.xlu0 %1456
        %1466 = vmatprep.subr.bf16.mxu0 0
        %1467 = vmatpush1.bf16.msra.mxu0 %v1443
        %1468 = vmatprep.subr.bf16.mxu0 0
        %1469 = vmatpush1.bf16.msra.mxu0 %v1445
        %1470 = vmatprep.subr.bf16.mxu0 0
        %1471 = vmatpush1.bf16.msra.mxu0 %v1447
        %1472 = vmatprep.subr.bf16.mxu0 0
        %1473 = vmatpush1.bf16.msra.mxu0 %v1449
        %1474 = vmatprep.subr.bf16.mxu0 0
        %1475 = vmatpush1.bf16.msra.mxu0 %v1451
        %1476 = vmatprep.subr.bf16.mxu0 0
        %1477 = vmatpush1.bf16.msra.mxu0 %v1453
        %1478 = vmatprep.subr.bf16.mxu0 0
        %1479 = vmatpush1.bf16.msra.mxu0 %v1455
        %1480 = vmatprep.subr.bf16.mxu0 0
        %1481 = vmatpush1.bf16.msra.mxu0 %v1457
        %1482 = vmatprep.subr.bf16.mxu0 0
        %1483 = vmatpush1.bf16.msra.mxu0 0
        %1484 = vmatprep.subr.bf16.mxu0 0
        %1485 = vmatpush1.bf16.msra.mxu0 0
        %1486 = vmatprep.subr.bf16.mxu0 0
        %1487 = vmatpush1.bf16.msra.mxu0 0
        %1488 = vmatprep.subr.bf16.mxu0 0
        %1489 = vmatpush1.bf16.msra.mxu0 0
        %1490 = vmatprep.subr.bf16.mxu0 0
        %1491 = vmatpush1.bf16.msra.mxu0 0
        %1492 = vmatprep.subr.bf16.mxu0 0
        %1493 = vmatpush1.bf16.msra.mxu0 0
        %1494 = vmatprep.subr.bf16.mxu0 0
        %1495 = vmatpush1.bf16.msra.mxu0 0
        %1496 = vmatprep.subr.bf16.mxu0 0
        %1497 = vmatpush1.bf16.msra.mxu0 0
        %1498 = vmatprep.mubr.bf16.mxu0 0
        %1499 = vmatmul.mubr.bf16.gmra.mrb[0].mxu0 %v1431
        %v1500 = vpop.f32.mrb[0].mxu0
        %v1501 = vadd.f32 0.0, %v1500
        %v1502 = vpop.f32.mrb[0].mxu0
        %v1503 = vpop.f32.mrb[0].mxu0
        %v1504 = vadd.f32 0.0, %v1503
        %v1505 = vpop.f32.mrb[0].mxu0
        %1506 = vmatprep.mubr.bf16.mxu0 0
        %1507 = vmatmul.mubr.bf16.gmra.mrb[0].mxu0 %v1432
        %v1508 = vpop.f32.mrb[0].mxu0
        %v1509 = vadd.f32 0.0, %v1508
        %v1510 = vpop.f32.mrb[0].mxu0
        %v1511 = vpop.f32.mrb[0].mxu0
        %v1512 = vadd.f32 0.0, %v1511
        %v1513 = vpop.f32.mrb[0].mxu0
        %1514 = vmatprep.mubr.bf16.mxu0 0
        %1515 = vmatmul.mubr.bf16.gmra.mrb[0].mxu0 %v1433
        %v1516 = vpop.f32.mrb[0].mxu0
        %v1517 = vadd.f32 0.0, %v1516
        %v1518 = vpop.f32.mrb[0].mxu0
        %v1519 = vpop.f32.mrb[0].mxu0
        %v1520 = vadd.f32 0.0, %v1519
        %v1521 = vpop.f32.mrb[0].mxu0
        %1522 = vdwg.mxu0
        %1524 = vset.pattern.permute.xlu0 0
        %1525 = vperm.xlu0 %1524, %v1329
        %v1526 = vpop.permute.xlu0 %1525
        %1529 = vset.pattern.permute.xlu0 0
        %1530 = vperm.xlu0 %1529, %v1331
        %v1531 = vpop.permute.xlu0 %1530
        %1534 = vset.pattern.permute.xlu0 0
        %1535 = vperm.xlu0 %1534, %v1333
        %v1536 = vpop.permute.xlu0 %1535
        %1539 = vset.pattern.permute.xlu0 0
        %1540 = vperm.xlu0 %1539, %v1335
        %v1541 = vpop.permute.xlu0 %1540
        %1544 = vset.pattern.permute.xlu0 0
        %1545 = vperm.xlu0 %1544, %v1337
        %v1546 = vpop.permute.xlu0 %1545
        %1549 = vset.pattern.permute.xlu0 0
        %1550 = vperm.xlu0 %1549, %v1339
        %v1551 = vpop.permute.xlu0 %1550
        %v1553 = vld [vmem:[#allocation5] sm:$0xf]
        %v1554 = vld [vmem:[#allocation5 + $0x4] sm:$0xf]
        %v1555 = vld [vmem:[#allocation5 + $0x8] sm:$0xf]
        %v1556 = vld [vmem:[#allocation5 + $0xc] sm:$0xf]
        %v1557 = vld [vmem:[#allocation5 + $0x10] sm:$0xf]
        %v1558 = vld [vmem:[#allocation5 + $0x14] sm:$0xf]
        %v1565 = vunpack.c.l.b16 %v1553
        %v1566 = vunpack.c.l.b16 %v1554
        %v1567 = vunpack.c.l.b16 %v1555
        %v1568 = vunpack.c.l.b16 %v1556
        %v1569 = vunpack.c.l.b16 %v1557
        %v1570 = vunpack.c.l.b16 %v1558
        %v1571 = vpack.c.b16 %v1566, %v1565
        %v1572 = vpack.c.b16 %v1568, %v1567
        %v1573 = vpack.c.b16 %v1570, %v1569
        %1574 = vrot.lane.b32.xlu0 %v1571, 112
        %v1575 = vpop.permute.xlu0 %1574
        %1576 = vrot.lane.b32.xlu0 %v1572, 112
        %v1577 = vpop.permute.xlu0 %1576
        %1578 = vrot.lane.b32.xlu0 %v1573, 112
        %v1579 = vpop.permute.xlu0 %1578
        %1580 = vrot.lane.b32.xlu0 %v667, 112
        %v1581 = vpop.permute.xlu0 %1580
        %1582 = vrot.lane.b32.xlu0 %v668, 112
        %v1583 = vpop.permute.xlu0 %1582
        %1584 = vrot.lane.b32.xlu0 %v669, 112
        %v1585 = vpop.permute.xlu0 %1584
        %1586 = vrot.lane.b32.xlu0 %v670, 112
        %v1587 = vpop.permute.xlu0 %1586
        %1588 = vrot.lane.b32.xlu0 %v671, 112
        %v1589 = vpop.permute.xlu0 %1588
        %1590 = vrot.lane.b32.xlu0 %v672, 112
        %v1591 = vpop.permute.xlu0 %1590
        %1592 = vrot.lane.b32.xlu0 %v673, 112
        %v1593 = vpop.permute.xlu0 %1592
        %1594 = vrot.lane.b32.xlu0 %v674, 112
        %v1595 = vpop.permute.xlu0 %1594
        %v1597 = vsel %vm830, %v1575, 0
        %v1600 = vsel %vm830, %v1577, 0
        %v1603 = vsel %vm830, %v1579, 0
        %v1606 = vsel %vm830, %v1581, 0
        %v1609 = vsel %vm830, %v1583, 0
        %v1612 = vsel %vm830, %v1585, 0
        %v1615 = vsel %vm830, %v1587, 0
        %v1618 = vsel %vm830, %v1589, 0
        %v1621 = vsel %vm830, %v1591, 0
        %v1624 = vsel %vm830, %v1593, 0
        %v1627 = vsel %vm830, %v1595, 0
        %1629 = vmatprep.subr.bf16.mxu0 0
        %1630 = vmatpush1.bf16.xpose.msra.mxu0 %v1606
        %1631 = vmatprep.subr.bf16.mxu0 0
        %1632 = vmatpush1.bf16.xpose.msra.mxu0 %v1609
        %1633 = vmatprep.subr.bf16.mxu0 0
        %1634 = vmatpush1.bf16.xpose.msra.mxu0 %v1612
        %1635 = vmatprep.subr.bf16.mxu0 0
        %1636 = vmatpush1.bf16.xpose.msra.mxu0 %v1615
        %1637 = vmatprep.subr.bf16.mxu0 0
        %1638 = vmatpush1.bf16.xpose.msra.mxu0 %v1618
        %1639 = vmatprep.subr.bf16.mxu0 0
        %1640 = vmatpush1.bf16.xpose.msra.mxu0 %v1621
        %1641 = vmatprep.subr.bf16.mxu0 0
        %1642 = vmatpush1.bf16.xpose.msra.mxu0 %v1624
        %1643 = vmatprep.subr.bf16.mxu0 0
        %1644 = vmatpush1.bf16.xpose.msra.mxu0 %v1627
        %1645 = vmatprep.subr.bf16.mxu0 0
        %1646 = vmatpush1.bf16.xpose.msra.mxu0 0
        %1647 = vmatprep.subr.bf16.mxu0 0
        %1648 = vmatpush1.bf16.xpose.msra.mxu0 0
        %1649 = vmatprep.subr.bf16.mxu0 0
        %1650 = vmatpush1.bf16.xpose.msra.mxu0 0
        %1651 = vmatprep.subr.bf16.mxu0 0
        %1652 = vmatpush1.bf16.xpose.msra.mxu0 0
        %1653 = vmatprep.subr.bf16.mxu0 0
        %1654 = vmatpush1.bf16.xpose.msra.mxu0 0
        %1655 = vmatprep.subr.bf16.mxu0 0
        %1656 = vmatpush1.bf16.xpose.msra.mxu0 0
        %1657 = vmatprep.subr.bf16.mxu0 0
        %1658 = vmatpush1.bf16.xpose.msra.mxu0 0
        %1659 = vmatprep.subr.bf16.mxu0 0
        %1660 = vmatpush1.bf16.xpose.msra.mxu0 0
        %1661 = vmatprep.mubr.bf16.mxu0 0
        %1662 = vmatmul.mubr.bf16.gmra.mrb[0].mxu0 %v1597
        %v1663 = vpop.f32.mrb[0].mxu0
        %v1664 = vadd.f32 0.0, %v1663
        %v1665 = vpop.f32.mrb[0].mxu0
        %v1666 = vpop.f32.mrb[0].mxu0
        %v1667 = vadd.f32 0.0, %v1666
        %v1668 = vpop.f32.mrb[0].mxu0
        %1669 = vmatprep.mubr.bf16.mxu0 0
        %1670 = vmatmul.mubr.bf16.gmra.mrb[0].mxu0 %v1600
        %v1671 = vpop.f32.mrb[0].mxu0
        %v1672 = vadd.f32 0.0, %v1671
        %v1673 = vpop.f32.mrb[0].mxu0
        %v1674 = vpop.f32.mrb[0].mxu0
        %v1675 = vadd.f32 0.0, %v1674
        %v1676 = vpop.f32.mrb[0].mxu0
        %1677 = vmatprep.mubr.bf16.mxu0 0
        %1678 = vmatmul.mubr.bf16.gmra.mrb[0].mxu0 %v1603
        %v1679 = vpop.f32.mrb[0].mxu0
        %v1680 = vadd.f32 0.0, %v1679
        %v1681 = vpop.f32.mrb[0].mxu0
        %v1682 = vpop.f32.mrb[0].mxu0
        %v1683 = vadd.f32 0.0, %v1682
        %v1684 = vpop.f32.mrb[0].mxu0
        %1685 = vdwg.mxu0
        %v1686 = vsel %vm808, %v1664, -inf
        %v1687 = vsel %vm808, %v1667, -inf
        %v1688 = vsel %vm808, %v1672, -inf
        %v1689 = vsel %vm808, %v1675, -inf
        %v1690 = vsel %vm808, %v1680, -inf
        %v1691 = vsel %vm808, %v1683, -inf
        %s1692 = scalar_lea.vmem [#allocation2], 96
        %v1693 = vld [vmem:[%s1692] sm:$0xff]
        %v1694 = vld [vmem:[%s1692 + $0x8] sm:$0xff]
        %v1695 = vld [vmem:[%s1692 + $0x10] sm:$0xff]
        %v1696 = vld [vmem:[%s1692 + $0x18] sm:$0xff]
        %v1697 = vld [vmem:[%s1692 + $0x20] sm:$0xff]
        %v1698 = vld [vmem:[%s1692 + $0x28] sm:$0xff]
        %1699 = vmax.xlane.f32.xlu0 %v1686
        %v1700 = vpop.xlane.xlu0 %1699
        %1701 = vmax.xlane.f32.xlu0 %v1687
        %v1702 = vpop.xlane.xlu0 %1701
        %1703 = vmax.xlane.f32.xlu0 %v1688
        %v1704 = vpop.xlane.xlu0 %1703
        %1705 = vmax.xlane.f32.xlu0 %v1689
        %v1706 = vpop.xlane.xlu0 %1705
        %1707 = vmax.xlane.f32.xlu0 %v1690
        %v1708 = vpop.xlane.xlu0 %1707
        %1709 = vmax.xlane.f32.xlu0 %v1691
        %v1710 = vpop.xlane.xlu0 %1709
        %v1711 = vmax.f32 %v1693, %v1700
        %v1712 = vmax.f32 %v1694, %v1702
        %v1713 = vmax.f32 %v1695, %v1704
        %v1714 = vmax.f32 %v1696, %v1706
        %v1715 = vmax.f32 %v1697, %v1708
        %v1716 = vmax.f32 %v1698, %v1710
        %v1717 = vsub.f32 %v1693, %v1711
        %v1718 = vsub.f32 %v1694, %v1712
        %v1719 = vsub.f32 %v1695, %v1713
        %v1720 = vsub.f32 %v1696, %v1714
        %v1721 = vsub.f32 %v1697, %v1715
        %v1722 = vsub.f32 %v1698, %v1716
        %v1723 = vmul.f32 %v1717, 1.442695
        %v1724 = vpow.pop %v1723
        %v1725 = vmul.f32 %v1718, 1.442695
        %v1726 = vpow.pop %v1725
        %v1727 = vmul.f32 %v1719, 1.442695
        %v1728 = vpow.pop %v1727
        %v1729 = vmul.f32 %v1720, 1.442695
        %v1730 = vpow.pop %v1729
        %v1731 = vmul.f32 %v1721, 1.442695
        %v1732 = vpow.pop %v1731
        %v1733 = vmul.f32 %v1722, 1.442695
        %v1734 = vpow.pop %v1733
        %1736 = vset.pattern.permute.xlu0 0
        %1737 = vperm.xlu0 %1736, %v1711
        %v1738 = vpop.permute.xlu0 %1737
        %1741 = vset.pattern.permute.xlu0 0
        %1742 = vperm.xlu0 %1741, %v1712
        %v1743 = vpop.permute.xlu0 %1742
        %1746 = vset.pattern.permute.xlu0 0
        %1747 = vperm.xlu0 %1746, %v1713
        %v1748 = vpop.permute.xlu0 %1747
        %1751 = vset.pattern.permute.xlu0 0
        %1752 = vperm.xlu0 %1751, %v1714
        %v1753 = vpop.permute.xlu0 %1752
        %1756 = vset.pattern.permute.xlu0 0
        %1757 = vperm.xlu0 %1756, %v1715
        %v1758 = vpop.permute.xlu0 %1757
        %1761 = vset.pattern.permute.xlu0 0
        %1762 = vperm.xlu0 %1761, %v1716
        %v1763 = vpop.permute.xlu0 %1762
        %v1765 = vsub.f32 %v1686, %v1738
        %v1766 = vsub.f32 %v1687, %v1743
        %v1767 = vsub.f32 %v1688, %v1748
        %v1768 = vsub.f32 %v1689, %v1753
        %v1769 = vsub.f32 %v1690, %v1758
        %v1770 = vsub.f32 %v1691, %v1763
        %v1771 = vmul.f32 %v1765, 1.442695
        %v1772 = vpow.pop %v1771
        %v1773 = vmul.f32 %v1766, 1.442695
        %v1774 = vpow.pop %v1773
        %v1775 = vmul.f32 %v1767, 1.442695
        %v1776 = vpow.pop %v1775
        %v1777 = vmul.f32 %v1768, 1.442695
        %v1778 = vpow.pop %v1777
        %v1779 = vmul.f32 %v1769, 1.442695
        %v1780 = vpow.pop %v1779
        %v1781 = vmul.f32 %v1770, 1.442695
        %v1782 = vpow.pop %v1781
        %s1783 = scalar_lea.vmem [#allocation3], 96
        %v1784 = vld [vmem:[%s1783] sm:$0xff]
        %v1785 = vld [vmem:[%s1783 + $0x8] sm:$0xff]
        %v1786 = vld [vmem:[%s1783 + $0x10] sm:$0xff]
        %v1787 = vld [vmem:[%s1783 + $0x18] sm:$0xff]
        %v1788 = vld [vmem:[%s1783 + $0x20] sm:$0xff]
        %v1789 = vld [vmem:[%s1783 + $0x28] sm:$0xff]
        %v1790 = vmul.f32 %v1724, %v1784
        %v1791 = vmul.f32 %v1726, %v1785
        %v1792 = vmul.f32 %v1728, %v1786
        %v1793 = vmul.f32 %v1730, %v1787
        %v1794 = vmul.f32 %v1732, %v1788
        %v1795 = vmul.f32 %v1734, %v1789
        %1796 = vadd.xlane.f32.xlu0 %v1772
        %v1797 = vpop.xlane.xlu0 %1796
        %1798 = vadd.xlane.f32.xlu0 %v1774
        %v1799 = vpop.xlane.xlu0 %1798
        %1800 = vadd.xlane.f32.xlu0 %v1776
        %v1801 = vpop.xlane.xlu0 %1800
        %1802 = vadd.xlane.f32.xlu0 %v1778
        %v1803 = vpop.xlane.xlu0 %1802
        %1804 = vadd.xlane.f32.xlu0 %v1780
        %v1805 = vpop.xlane.xlu0 %1804
        %1806 = vadd.xlane.f32.xlu0 %v1782
        %v1807 = vpop.xlane.xlu0 %1806
        %v1808 = vadd.f32 %v1790, %v1797
        %v1809 = vadd.f32 %v1791, %v1799
        %v1810 = vadd.f32 %v1792, %v1801
        %v1811 = vadd.f32 %v1793, %v1803
        %v1812 = vadd.f32 %v1794, %v1805
        %v1813 = vadd.f32 %v1795, %v1807
        %1814 = vst.msk [vmem:[%s1783] sm:$0xff] %vm1047, %v1808
        %1815 = vst.msk [vmem:[%s1783 + $0x8] sm:$0xff] %vm1047, %v1809
        %1816 = vst.msk [vmem:[%s1783 + $0x10] sm:$0xff] %vm1047, %v1810
        %1817 = vst.msk [vmem:[%s1783 + $0x18] sm:$0xff] %vm1047, %v1811
        %1818 = vst.msk [vmem:[%s1783 + $0x20] sm:$0xff] %vm1047, %v1812
        %1819 = vst.msk [vmem:[%s1783 + $0x28] sm:$0xff] %vm1047, %v1813
        %1820 = vst.msk [vmem:[%s1692] sm:$0xff] %vm1047, %v1711
        %1821 = vst.msk [vmem:[%s1692 + $0x8] sm:$0xff] %vm1047, %v1712
        %1822 = vst.msk [vmem:[%s1692 + $0x10] sm:$0xff] %vm1047, %v1713
        %1823 = vst.msk [vmem:[%s1692 + $0x18] sm:$0xff] %vm1047, %v1714
        %1824 = vst.msk [vmem:[%s1692 + $0x20] sm:$0xff] %vm1047, %v1715
        %1825 = vst.msk [vmem:[%s1692 + $0x28] sm:$0xff] %vm1047, %v1716
        %v1826 = vpack.c.bf16 %v1774, %v1772
        %v1827 = vpack.c.bf16 %v1778, %v1776
        %v1828 = vpack.c.bf16 %v1782, %v1780
        %1829 = vrot.lane.b32.xlu0 %v795, 112
        %v1830 = vpop.permute.xlu0 %1829
        %1831 = vrot.lane.b32.xlu0 %v796, 112
        %v1832 = vpop.permute.xlu0 %1831
        %1833 = vrot.lane.b32.xlu0 %v797, 112
        %v1834 = vpop.permute.xlu0 %1833
        %1835 = vrot.lane.b32.xlu0 %v798, 112
        %v1836 = vpop.permute.xlu0 %1835
        %1837 = vrot.lane.b32.xlu0 %v799, 112
        %v1838 = vpop.permute.xlu0 %1837
        %1839 = vrot.lane.b32.xlu0 %v800, 112
        %v1840 = vpop.permute.xlu0 %1839
        %1841 = vrot.lane.b32.xlu0 %v801, 112
        %v1842 = vpop.permute.xlu0 %1841
        %1843 = vrot.lane.b32.xlu0 %v802, 112
        %v1844 = vpop.permute.xlu0 %1843
        %1853 = vmatprep.subr.bf16.mxu0 0
        %1854 = vmatpush1.bf16.msra.mxu0 %v1830
        %1855 = vmatprep.subr.bf16.mxu0 0
        %1856 = vmatpush1.bf16.msra.mxu0 %v1832
        %1857 = vmatprep.subr.bf16.mxu0 0
        %1858 = vmatpush1.bf16.msra.mxu0 %v1834
        %1859 = vmatprep.subr.bf16.mxu0 0
        %1860 = vmatpush1.bf16.msra.mxu0 %v1836
        %1861 = vmatprep.subr.bf16.mxu0 0
        %1862 = vmatpush1.bf16.msra.mxu0 %v1838
        %1863 = vmatprep.subr.bf16.mxu0 0
        %1864 = vmatpush1.bf16.msra.mxu0 %v1840
        %1865 = vmatprep.subr.bf16.mxu0 0
        %1866 = vmatpush1.bf16.msra.mxu0 %v1842
        %1867 = vmatprep.subr.bf16.mxu0 0
        %1868 = vmatpush1.bf16.msra.mxu0 %v1844
        %1869 = vmatprep.subr.bf16.mxu0 0
        %1870 = vmatpush1.bf16.msra.mxu0 0
        %1871 = vmatprep.subr.bf16.mxu0 0
        %1872 = vmatpush1.bf16.msra.mxu0 0
        %1873 = vmatprep.subr.bf16.mxu0 0
        %1874 = vmatpush1.bf16.msra.mxu0 0
        %1875 = vmatprep.subr.bf16.mxu0 0
        %1876 = vmatpush1.bf16.msra.mxu0 0
        %1877 = vmatprep.subr.bf16.mxu0 0
        %1878 = vmatpush1.bf16.msra.mxu0 0
        %1879 = vmatprep.subr.bf16.mxu0 0
        %1880 = vmatpush1.bf16.msra.mxu0 0
        %1881 = vmatprep.subr.bf16.mxu0 0
        %1882 = vmatpush1.bf16.msra.mxu0 0
        %1883 = vmatprep.subr.bf16.mxu0 0
        %1884 = vmatpush1.bf16.msra.mxu0 0
        %1885 = vmatprep.mubr.bf16.mxu0 0
        %1886 = vmatmul.mubr.bf16.gmra.mrb[0].mxu0 %v1826
        %v1887 = vpop.f32.mrb[0].mxu0
        %v1888 = vadd.f32 0.0, %v1887
        %v1889 = vpop.f32.mrb[0].mxu0
        %v1890 = vpop.f32.mrb[0].mxu0
        %v1891 = vadd.f32 0.0, %v1890
        %v1892 = vpop.f32.mrb[0].mxu0
        %1893 = vmatprep.mubr.bf16.mxu0 0
        %1894 = vmatmul.mubr.bf16.gmra.mrb[0].mxu0 %v1827
        %v1895 = vpop.f32.mrb[0].mxu0
        %v1896 = vadd.f32 0.0, %v1895
        %v1897 = vpop.f32.mrb[0].mxu0
        %v1898 = vpop.f32.mrb[0].mxu0
        %v1899 = vadd.f32 0.0, %v1898
        %v1900 = vpop.f32.mrb[0].mxu0
        %1901 = vmatprep.mubr.bf16.mxu0 0
        %1902 = vmatmul.mubr.bf16.gmra.mrb[0].mxu0 %v1828
        %v1903 = vpop.f32.mrb[0].mxu0
        %v1904 = vadd.f32 0.0, %v1903
        %v1905 = vpop.f32.mrb[0].mxu0
        %v1906 = vpop.f32.mrb[0].mxu0
        %v1907 = vadd.f32 0.0, %v1906
        %v1908 = vpop.f32.mrb[0].mxu0
        %1909 = vdwg.mxu0
        %1911 = vset.pattern.permute.xlu0 0
        %1912 = vperm.xlu0 %1911, %v1724
        %v1913 = vpop.permute.xlu0 %1912
        %1916 = vset.pattern.permute.xlu0 0
        %1917 = vperm.xlu0 %1916, %v1726
        %v1918 = vpop.permute.xlu0 %1917
        %1921 = vset.pattern.permute.xlu0 0
        %1922 = vperm.xlu0 %1921, %v1728
        %v1923 = vpop.permute.xlu0 %1922
        %1926 = vset.pattern.permute.xlu0 0
        %1927 = vperm.xlu0 %1926, %v1730
        %v1928 = vpop.permute.xlu0 %1927
        %1931 = vset.pattern.permute.xlu0 0
        %1932 = vperm.xlu0 %1931, %v1732
        %v1933 = vpop.permute.xlu0 %1932
        %1936 = vset.pattern.permute.xlu0 0
        %1937 = vperm.xlu0 %1936, %v1734
        %v1938 = vpop.permute.xlu0 %1937
        %v1940 = vld [vmem:[#allocation5] sm:$0xf]
        %v1941 = vld [vmem:[#allocation5 + $0x4] sm:$0xf]
        %v1942 = vld [vmem:[#allocation5 + $0x8] sm:$0xf]
        %v1943 = vld [vmem:[#allocation5 + $0xc] sm:$0xf]
        %v1944 = vld [vmem:[#allocation5 + $0x10] sm:$0xf]
        %v1945 = vld [vmem:[#allocation5 + $0x14] sm:$0xf]
        %v1952 = vunpack.c.l.b16 %v1940
        %v1953 = vunpack.c.l.b16 %v1941
        %v1954 = vunpack.c.l.b16 %v1942
        %v1955 = vunpack.c.l.b16 %v1943
        %v1956 = vunpack.c.l.b16 %v1944
        %v1957 = vunpack.c.l.b16 %v1945
        %v1958 = vpack.c.b16 %v1953, %v1952
        %v1959 = vpack.c.b16 %v1955, %v1954
        %v1960 = vpack.c.b16 %v1957, %v1956
        %1961 = vrot.lane.b32.xlu0 %v1958, 104
        %v1962 = vpop.permute.xlu0 %1961
        %1963 = vrot.lane.b32.xlu0 %v1959, 104
        %v1964 = vpop.permute.xlu0 %1963
        %1965 = vrot.lane.b32.xlu0 %v1960, 104
        %v1966 = vpop.permute.xlu0 %1965
        %1967 = vrot.lane.b32.xlu0 %v667, 104
        %v1968 = vpop.permute.xlu0 %1967
        %1969 = vrot.lane.b32.xlu0 %v668, 104
        %v1970 = vpop.permute.xlu0 %1969
        %1971 = vrot.lane.b32.xlu0 %v669, 104
        %v1972 = vpop.permute.xlu0 %1971
        %1973 = vrot.lane.b32.xlu0 %v670, 104
        %v1974 = vpop.permute.xlu0 %1973
        %1975 = vrot.lane.b32.xlu0 %v671, 104
        %v1976 = vpop.permute.xlu0 %1975
        %1977 = vrot.lane.b32.xlu0 %v672, 104
        %v1978 = vpop.permute.xlu0 %1977
        %1979 = vrot.lane.b32.xlu0 %v673, 104
        %v1980 = vpop.permute.xlu0 %1979
        %1981 = vrot.lane.b32.xlu0 %v674, 104
        %v1982 = vpop.permute.xlu0 %1981
        %v1984 = vsel %vm830, %v1962, 0
        %v1987 = vsel %vm830, %v1964, 0
        %v1990 = vsel %vm830, %v1966, 0
        %v1993 = vsel %vm830, %v1968, 0
        %v1996 = vsel %vm830, %v1970, 0
        %v1999 = vsel %vm830, %v1972, 0
        %v2002 = vsel %vm830, %v1974, 0
        %v2005 = vsel %vm830, %v1976, 0
        %v2008 = vsel %vm830, %v1978, 0
        %v2011 = vsel %vm830, %v1980, 0
        %v2014 = vsel %vm830, %v1982, 0
        %2016 = vmatprep.subr.bf16.mxu0 0
        %2017 = vmatpush1.bf16.xpose.msra.mxu0 %v1993
        %2018 = vmatprep.subr.bf16.mxu0 0
        %2019 = vmatpush1.bf16.xpose.msra.mxu0 %v1996
        %2020 = vmatprep.subr.bf16.mxu0 0
        %2021 = vmatpush1.bf16.xpose.msra.mxu0 %v1999
        %2022 = vmatprep.subr.bf16.mxu0 0
        %2023 = vmatpush1.bf16.xpose.msra.mxu0 %v2002
        %2024 = vmatprep.subr.bf16.mxu0 0
        %2025 = vmatpush1.bf16.xpose.msra.mxu0 %v2005
        %2026 = vmatprep.subr.bf16.mxu0 0
        %2027 = vmatpush1.bf16.xpose.msra.mxu0 %v2008
        %2028 = vmatprep.subr.bf16.mxu0 0
        %2029 = vmatpush1.bf16.xpose.msra.mxu0 %v2011
        %2030 = vmatprep.subr.bf16.mxu0 0
        %2031 = vmatpush1.bf16.xpose.msra.mxu0 %v2014
        %2032 = vmatprep.subr.bf16.mxu0 0
        %2033 = vmatpush1.bf16.xpose.msra.mxu0 0
        %2034 = vmatprep.subr.bf16.mxu0 0
        %2035 = vmatpush1.bf16.xpose.msra.mxu0 0
        %2036 = vmatprep.subr.bf16.mxu0 0
        %2037 = vmatpush1.bf16.xpose.msra.mxu0 0
        %2038 = vmatprep.subr.bf16.mxu0 0
        %2039 = vmatpush1.bf16.xpose.msra.mxu0 0
        %2040 = vmatprep.subr.bf16.mxu0 0
        %2041 = vmatpush1.bf16.xpose.msra.mxu0 0
        %2042 = vmatprep.subr.bf16.mxu0 0
        %2043 = vmatpush1.bf16.xpose.msra.mxu0 0
        %2044 = vmatprep.subr.bf16.mxu0 0
        %2045 = vmatpush1.bf16.xpose.msra.mxu0 0
        %2046 = vmatprep.subr.bf16.mxu0 0
        %2047 = vmatpush1.bf16.xpose.msra.mxu0 0
        %2048 = vmatprep.mubr.bf16.mxu0 0
        %2049 = vmatmul.mubr.bf16.gmra.mrb[0].mxu0 %v1984
        %v2050 = vpop.f32.mrb[0].mxu0
        %v2051 = vadd.f32 0.0, %v2050
        %v2052 = vpop.f32.mrb[0].mxu0
        %v2053 = vpop.f32.mrb[0].mxu0
        %v2054 = vadd.f32 0.0, %v2053
        %v2055 = vpop.f32.mrb[0].mxu0
        %2056 = vmatprep.mubr.bf16.mxu0 0
        %2057 = vmatmul.mubr.bf16.gmra.mrb[0].mxu0 %v1987
        %v2058 = vpop.f32.mrb[0].mxu0
        %v2059 = vadd.f32 0.0, %v2058
        %v2060 = vpop.f32.mrb[0].mxu0
        %v2061 = vpop.f32.mrb[0].mxu0
        %v2062 = vadd.f32 0.0, %v2061
        %v2063 = vpop.f32.mrb[0].mxu0
        %2064 = vmatprep.mubr.bf16.mxu0 0
        %2065 = vmatmul.mubr.bf16.gmra.mrb[0].mxu0 %v1990
        %v2066 = vpop.f32.mrb[0].mxu0
        %v2067 = vadd.f32 0.0, %v2066
        %v2068 = vpop.f32.mrb[0].mxu0
        %v2069 = vpop.f32.mrb[0].mxu0
        %v2070 = vadd.f32 0.0, %v2069
        %v2071 = vpop.f32.mrb[0].mxu0
        %2072 = vdwg.mxu0
        %v2073 = vsel %vm808, %v2051, -inf
        %v2074 = vsel %vm808, %v2054, -inf
        %v2075 = vsel %vm808, %v2059, -inf
        %v2076 = vsel %vm808, %v2062, -inf
        %v2077 = vsel %vm808, %v2067, -inf
        %v2078 = vsel %vm808, %v2070, -inf
        %s2079 = scalar_lea.vmem [#allocation2], 144
        %v2080 = vld [vmem:[%s2079] sm:$0xff]
        %v2081 = vld [vmem:[%s2079 + $0x8] sm:$0xff]
        %v2082 = vld [vmem:[%s2079 + $0x10] sm:$0xff]
        %v2083 = vld [vmem:[%s2079 + $0x18] sm:$0xff]
        %v2084 = vld [vmem:[%s2079 + $0x20] sm:$0xff]
        %v2085 = vld [vmem:[%s2079 + $0x28] sm:$0xff]
        %2086 = vmax.xlane.f32.xlu0 %v2073
        %v2087 = vpop.xlane.xlu0 %2086
        %2088 = vmax.xlane.f32.xlu0 %v2074
        %v2089 = vpop.xlane.xlu0 %2088
        %2090 = vmax.xlane.f32.xlu0 %v2075
        %v2091 = vpop.xlane.xlu0 %2090
        %2092 = vmax.xlane.f32.xlu0 %v2076
        %v2093 = vpop.xlane.xlu0 %2092
        %2094 = vmax.xlane.f32.xlu0 %v2077
        %v2095 = vpop.xlane.xlu0 %2094
        %2096 = vmax.xlane.f32.xlu0 %v2078
        %v2097 = vpop.xlane.xlu0 %2096
        %v2098 = vmax.f32 %v2080, %v2087
        %v2099 = vmax.f32 %v2081, %v2089
        %v2100 = vmax.f32 %v2082, %v2091
        %v2101 = vmax.f32 %v2083, %v2093
        %v2102 = vmax.f32 %v2084, %v2095
        %v2103 = vmax.f32 %v2085, %v2097
        %v2104 = vsub.f32 %v2080, %v2098
        %v2105 = vsub.f32 %v2081, %v2099
        %v2106 = vsub.f32 %v2082, %v2100
        %v2107 = vsub.f32 %v2083, %v2101
        %v2108 = vsub.f32 %v2084, %v2102
        %v2109 = vsub.f32 %v2085, %v2103
        %v2110 = vmul.f32 %v2104, 1.442695
        %v2111 = vpow.pop %v2110
        %v2112 = vmul.f32 %v2105, 1.442695
        %v2113 = vpow.pop %v2112
        %v2114 = vmul.f32 %v2106, 1.442695
        %v2115 = vpow.pop %v2114
        %v2116 = vmul.f32 %v2107, 1.442695
        %v2117 = vpow.pop %v2116
        %v2118 = vmul.f32 %v2108, 1.442695
        %v2119 = vpow.pop %v2118
        %v2120 = vmul.f32 %v2109, 1.442695
        %v2121 = vpow.pop %v2120
        %2123 = vset.pattern.permute.xlu0 0
        %2124 = vperm.xlu0 %2123, %v2098
        %v2125 = vpop.permute.xlu0 %2124
        %2128 = vset.pattern.permute.xlu0 0
        %2129 = vperm.xlu0 %2128, %v2099
        %v2130 = vpop.permute.xlu0 %2129
        %2133 = vset.pattern.permute.xlu0 0
        %2134 = vperm.xlu0 %2133, %v2100
        %v2135 = vpop.permute.xlu0 %2134
        %2138 = vset.pattern.permute.xlu0 0
        %2139 = vperm.xlu0 %2138, %v2101
        %v2140 = vpop.permute.xlu0 %2139
        %2143 = vset.pattern.permute.xlu0 0
        %2144 = vperm.xlu0 %2143, %v2102
        %v2145 = vpop.permute.xlu0 %2144
        %2148 = vset.pattern.permute.xlu0 0
        %2149 = vperm.xlu0 %2148, %v2103
        %v2150 = vpop.permute.xlu0 %2149
        %v2152 = vsub.f32 %v2073, %v2125
        %v2153 = vsub.f32 %v2074, %v2130
        %v2154 = vsub.f32 %v2075, %v2135
        %v2155 = vsub.f32 %v2076, %v2140
        %v2156 = vsub.f32 %v2077, %v2145
        %v2157 = vsub.f32 %v2078, %v2150
        %v2158 = vmul.f32 %v2152, 1.442695
        %v2159 = vpow.pop %v2158
        %v2160 = vmul.f32 %v2153, 1.442695
        %v2161 = vpow.pop %v2160
        %v2162 = vmul.f32 %v2154, 1.442695
        %v2163 = vpow.pop %v2162
        %v2164 = vmul.f32 %v2155, 1.442695
        %v2165 = vpow.pop %v2164
        %v2166 = vmul.f32 %v2156, 1.442695
        %v2167 = vpow.pop %v2166
        %v2168 = vmul.f32 %v2157, 1.442695
        %v2169 = vpow.pop %v2168
        %s2170 = scalar_lea.vmem [#allocation3], 144
        %v2171 = vld [vmem:[%s2170] sm:$0xff]
        %v2172 = vld [vmem:[%s2170 + $0x8] sm:$0xff]
        %v2173 = vld [vmem:[%s2170 + $0x10] sm:$0xff]
        %v2174 = vld [vmem:[%s2170 + $0x18] sm:$0xff]
        %v2175 = vld [vmem:[%s2170 + $0x20] sm:$0xff]
        %v2176 = vld [vmem:[%s2170 + $0x28] sm:$0xff]
        %v2177 = vmul.f32 %v2111, %v2171
        %v2178 = vmul.f32 %v2113, %v2172
        %v2179 = vmul.f32 %v2115, %v2173
        %v2180 = vmul.f32 %v2117, %v2174
        %v2181 = vmul.f32 %v2119, %v2175
        %v2182 = vmul.f32 %v2121, %v2176
        %2183 = vadd.xlane.f32.xlu0 %v2159
        %v2184 = vpop.xlane.xlu0 %2183
        %2185 = vadd.xlane.f32.xlu0 %v2161
        %v2186 = vpop.xlane.xlu0 %2185
        %2187 = vadd.xlane.f32.xlu0 %v2163
        %v2188 = vpop.xlane.xlu0 %2187
        %2189 = vadd.xlane.f32.xlu0 %v2165
        %v2190 = vpop.xlane.xlu0 %2189
        %2191 = vadd.xlane.f32.xlu0 %v2167
        %v2192 = vpop.xlane.xlu0 %2191
        %2193 = vadd.xlane.f32.xlu0 %v2169
        %v2194 = vpop.xlane.xlu0 %2193
        %v2195 = vadd.f32 %v2177, %v2184
        %v2196 = vadd.f32 %v2178, %v2186
        %v2197 = vadd.f32 %v2179, %v2188
        %v2198 = vadd.f32 %v2180, %v2190
        %v2199 = vadd.f32 %v2181, %v2192
        %v2200 = vadd.f32 %v2182, %v2194
        %2201 = vst.msk [vmem:[%s2170] sm:$0xff] %vm1047, %v2195
        %2202 = vst.msk [vmem:[%s2170 + $0x8] sm:$0xff] %vm1047, %v2196
        %2203 = vst.msk [vmem:[%s2170 + $0x10] sm:$0xff] %vm1047, %v2197
        %2204 = vst.msk [vmem:[%s2170 + $0x18] sm:$0xff] %vm1047, %v2198
        %2205 = vst.msk [vmem:[%s2170 + $0x20] sm:$0xff] %vm1047, %v2199
        %2206 = vst.msk [vmem:[%s2170 + $0x28] sm:$0xff] %vm1047, %v2200
        %2207 = vst.msk [vmem:[%s2079] sm:$0xff] %vm1047, %v2098
        %2208 = vst.msk [vmem:[%s2079 + $0x8] sm:$0xff] %vm1047, %v2099
        %2209 = vst.msk [vmem:[%s2079 + $0x10] sm:$0xff] %vm1047, %v2100
        %2210 = vst.msk [vmem:[%s2079 + $0x18] sm:$0xff] %vm1047, %v2101
        %2211 = vst.msk [vmem:[%s2079 + $0x20] sm:$0xff] %vm1047, %v2102
        %2212 = vst.msk [vmem:[%s2079 + $0x28] sm:$0xff] %vm1047, %v2103
        %v2213 = vpack.c.bf16 %v2161, %v2159
        %v2214 = vpack.c.bf16 %v2165, %v2163
        %v2215 = vpack.c.bf16 %v2169, %v2167
        %2216 = vrot.lane.b32.xlu0 %v795, 104
        %v2217 = vpop.permute.xlu0 %2216
        %2218 = vrot.lane.b32.xlu0 %v796, 104
        %v2219 = vpop.permute.xlu0 %2218
        %2220 = vrot.lane.b32.xlu0 %v797, 104
        %v2221 = vpop.permute.xlu0 %2220
        %2222 = vrot.lane.b32.xlu0 %v798, 104
        %v2223 = vpop.permute.xlu0 %2222
        %2224 = vrot.lane.b32.xlu0 %v799, 104
        %v2225 = vpop.permute.xlu0 %2224
        %2226 = vrot.lane.b32.xlu0 %v800, 104
        %v2227 = vpop.permute.xlu0 %2226
        %2228 = vrot.lane.b32.xlu0 %v801, 104
        %v2229 = vpop.permute.xlu0 %2228
        %2230 = vrot.lane.b32.xlu0 %v802, 104
        %v2231 = vpop.permute.xlu0 %2230
        %2240 = vmatprep.subr.bf16.mxu0 0
        %2241 = vmatpush1.bf16.msra.mxu0 %v2217
        %2242 = vmatprep.subr.bf16.mxu0 0
        %2243 = vmatpush1.bf16.msra.mxu0 %v2219
        %2244 = vmatprep.subr.bf16.mxu0 0
        %2245 = vmatpush1.bf16.msra.mxu0 %v2221
        %2246 = vmatprep.subr.bf16.mxu0 0
        %2247 = vmatpush1.bf16.msra.mxu0 %v2223
        %2248 = vmatprep.subr.bf16.mxu0 0
        %2249 = vmatpush1.bf16.msra.mxu0 %v2225
        %2250 = vmatprep.subr.bf16.mxu0 0
        %2251 = vmatpush1.bf16.msra.mxu0 %v2227
        %2252 = vmatprep.subr.bf16.mxu0 0
        %2253 = vmatpush1.bf16.msra.mxu0 %v2229
        %2254 = vmatprep.subr.bf16.mxu0 0
        %2255 = vmatpush1.bf16.msra.mxu0 %v2231
        %2256 = vmatprep.subr.bf16.mxu0 0
        %2257 = vmatpush1.bf16.msra.mxu0 0
        %2258 = vmatprep.subr.bf16.mxu0 0
        %2259 = vmatpush1.bf16.msra.mxu0 0
        %2260 = vmatprep.subr.bf16.mxu0 0
        %2261 = vmatpush1.bf16.msra.mxu0 0
        %2262 = vmatprep.subr.bf16.mxu0 0
        %2263 = vmatpush1.bf16.msra.mxu0 0
        %2264 = vmatprep.subr.bf16.mxu0 0
        %2265 = vmatpush1.bf16.msra.mxu0 0
        %2266 = vmatprep.subr.bf16.mxu0 0
        %2267 = vmatpush1.bf16.msra.mxu0 0
        %2268 = vmatprep.subr.bf16.mxu0 0
        %2269 = vmatpush1.bf16.msra.mxu0 0
        %2270 = vmatprep.subr.bf16.mxu0 0
        %2271 = vmatpush1.bf16.msra.mxu0 0
        %2272 = vmatprep.mubr.bf16.mxu0 0
        %2273 = vmatmul.mubr.bf16.gmra.mrb[0].mxu0 %v2213
        %v2274 = vpop.f32.mrb[0].mxu0
        %v2275 = vadd.f32 0.0, %v2274
        %v2276 = vpop.f32.mrb[0].mxu0
        %v2277 = vpop.f32.mrb[0].mxu0
        %v2278 = vadd.f32 0.0, %v2277
        %v2279 = vpop.f32.mrb[0].mxu0
        %2280 = vmatprep.mubr.bf16.mxu0 0
        %2281 = vmatmul.mubr.bf16.gmra.mrb[0].mxu0 %v2214
        %v2282 = vpop.f32.mrb[0].mxu0
        %v2283 = vadd.f32 0.0, %v2282
        %v2284 = vpop.f32.mrb[0].mxu0
        %v2285 = vpop.f32.mrb[0].mxu0
        %v2286 = vadd.f32 0.0, %v2285
        %v2287 = vpop.f32.mrb[0].mxu0
        %2288 = vmatprep.mubr.bf16.mxu0 0
        %2289 = vmatmul.mubr.bf16.gmra.mrb[0].mxu0 %v2215
        %v2290 = vpop.f32.mrb[0].mxu0
        %v2291 = vadd.f32 0.0, %v2290
        %v2292 = vpop.f32.mrb[0].mxu0
        %v2293 = vpop.f32.mrb[0].mxu0
        %v2294 = vadd.f32 0.0, %v2293
        %v2295 = vpop.f32.mrb[0].mxu0
        %2296 = vdwg.mxu0
        %2298 = vset.pattern.permute.xlu0 0
        %2299 = vperm.xlu0 %2298, %v2111
        %v2300 = vpop.permute.xlu0 %2299
        %2303 = vset.pattern.permute.xlu0 0
        %2304 = vperm.xlu0 %2303, %v2113
        %v2305 = vpop.permute.xlu0 %2304
        %2308 = vset.pattern.permute.xlu0 0
        %2309 = vperm.xlu0 %2308, %v2115
        %v2310 = vpop.permute.xlu0 %2309
        %2313 = vset.pattern.permute.xlu0 0
        %2314 = vperm.xlu0 %2313, %v2117
        %v2315 = vpop.permute.xlu0 %2314
        %2318 = vset.pattern.permute.xlu0 0
        %2319 = vperm.xlu0 %2318, %v2119
        %v2320 = vpop.permute.xlu0 %2319
        %2323 = vset.pattern.permute.xlu0 0
        %2324 = vperm.xlu0 %2323, %v2121
        %v2325 = vpop.permute.xlu0 %2324
        %v2327 = vsel %vm830, %v1123, %v1526
        %v2328 = vsel %vm830, %v1128, %v1531
        %v2329 = vsel %vm830, %v1133, %v1536
        %v2330 = vsel %vm830, %v1138, %v1541
        %v2331 = vsel %vm830, %v1143, %v1546
        %v2332 = vsel %vm830, %v1148, %v1551
        %vm2333 = vcmask 130048
        %v2334 = vsel %vm2333, %v2327, %v1913
        %v2335 = vsel %vm2333, %v2328, %v1918
        %v2336 = vsel %vm2333, %v2329, %v1923
        %v2337 = vsel %vm2333, %v2330, %v1928
        %v2338 = vsel %vm2333, %v2331, %v1933
        %v2339 = vsel %vm2333, %v2332, %v1938
        %vm2340 = vcmask 195584
        %v2341 = vsel %vm2340, %v2334, %v2300
        %v2342 = vsel %vm2340, %v2335, %v2305
        %v2343 = vsel %vm2340, %v2336, %v2310
        %v2344 = vsel %vm2340, %v2337, %v2315
        %v2345 = vsel %vm2340, %v2338, %v2320
        %v2346 = vsel %vm2340, %v2339, %v2325
        %v2347 = vld [vmem:[#allocation4] sm:$0xff]
        %v2348 = vld [vmem:[#allocation4 + $0x8] sm:$0xff]
        %v2349 = vld [vmem:[#allocation4 + $0x10] sm:$0xff]
        %v2350 = vld [vmem:[#allocation4 + $0x18] sm:$0xff]
        %v2351 = vld [vmem:[#allocation4 + $0x20] sm:$0xff]
        %v2352 = vld [vmem:[#allocation4 + $0x28] sm:$0xff]
        %v2353 = vmul.f32 %v2341, %v2347
        %v2354 = vmul.f32 %v2342, %v2348
        %v2355 = vmul.f32 %v2343, %v2349
        %v2356 = vmul.f32 %v2344, %v2350
        %v2357 = vmul.f32 %v2345, %v2351
        %v2358 = vmul.f32 %v2346, %v2352
        %2365 = vrot.lane.b32.xlu0 %v1501, 8
        %v2366 = vpop.permute.xlu0 %2365
        %2367 = vrot.lane.b32.xlu0 %v1504, 8
        %v2368 = vpop.permute.xlu0 %2367
        %2369 = vrot.lane.b32.xlu0 %v1509, 8
        %v2370 = vpop.permute.xlu0 %2369
        %2371 = vrot.lane.b32.xlu0 %v1512, 8
        %v2372 = vpop.permute.xlu0 %2371
        %2373 = vrot.lane.b32.xlu0 %v1517, 8
        %v2374 = vpop.permute.xlu0 %2373
        %2375 = vrot.lane.b32.xlu0 %v1520, 8
        %v2376 = vpop.permute.xlu0 %2375
        %2389 = vrot.lane.b32.xlu0 %v1888, 16
        %v2390 = vpop.permute.xlu0 %2389
        %2391 = vrot.lane.b32.xlu0 %v1891, 16
        %v2392 = vpop.permute.xlu0 %2391
        %2393 = vrot.lane.b32.xlu0 %v1896, 16
        %v2394 = vpop.permute.xlu0 %2393
        %2395 = vrot.lane.b32.xlu0 %v1899, 16
        %v2396 = vpop.permute.xlu0 %2395
        %2397 = vrot.lane.b32.xlu0 %v1904, 16
        %v2398 = vpop.permute.xlu0 %2397
        %2399 = vrot.lane.b32.xlu0 %v1907, 16
        %v2400 = vpop.permute.xlu0 %2399
        %2413 = vrot.lane.b32.xlu0 %v2275, 24
        %v2414 = vpop.permute.xlu0 %2413
        %2415 = vrot.lane.b32.xlu0 %v2278, 24
        %v2416 = vpop.permute.xlu0 %2415
        %2417 = vrot.lane.b32.xlu0 %v2283, 24
        %v2418 = vpop.permute.xlu0 %2417
        %2419 = vrot.lane.b32.xlu0 %v2286, 24
        %v2420 = vpop.permute.xlu0 %2419
        %2421 = vrot.lane.b32.xlu0 %v2291, 24
        %v2422 = vpop.permute.xlu0 %2421
        %2423 = vrot.lane.b32.xlu0 %v2294, 24
        %v2424 = vpop.permute.xlu0 %2423
        %v2431 = vsel %vm830, %v1098, %v2366
        %v2432 = vsel %vm830, %v1101, %v2368
        %v2433 = vsel %vm830, %v1106, %v2370
        %v2434 = vsel %vm830, %v1109, %v2372
        %v2435 = vsel %vm830, %v1114, %v2374
        %v2436 = vsel %vm830, %v1117, %v2376
        %v2437 = vsel %vm2333, %v2431, %v2390
        %v2438 = vsel %vm2333, %v2432, %v2392
        %v2439 = vsel %vm2333, %v2433, %v2394
        %v2440 = vsel %vm2333, %v2434, %v2396
        %v2441 = vsel %vm2333, %v2435, %v2398
        %v2442 = vsel %vm2333, %v2436, %v2400
        %v2443 = vsel %vm2340, %v2437, %v2414
        %v2444 = vsel %vm2340, %v2438, %v2416
        %v2445 = vsel %vm2340, %v2439, %v2418
        %v2446 = vsel %vm2340, %v2440, %v2420
        %v2447 = vsel %vm2340, %v2441, %v2422
        %v2448 = vsel %vm2340, %v2442, %v2424
        %v2449 = vadd.f32 %v2353, %v2443
        %v2450 = vadd.f32 %v2354, %v2444
        %v2451 = vadd.f32 %v2355, %v2445
        %v2452 = vadd.f32 %v2356, %v2446
        %v2453 = vadd.f32 %v2357, %v2447
        %v2454 = vadd.f32 %v2358, %v2448
        %2455 = vst.msk [vmem:[#allocation4] sm:$0xff] %vm545, %v2449
        %2456 = vst.msk [vmem:[#allocation4 + $0x8] sm:$0xff] %vm545, %v2450
        %2457 = vst.msk [vmem:[#allocation4 + $0x10] sm:$0xff] %vm545, %v2451
        %2458 = vst.msk [vmem:[#allocation4 + $0x18] sm:$0xff] %vm545, %v2452
        %2459 = vst.msk [vmem:[#allocation4 + $0x20] sm:$0xff] %vm545, %v2453
        %2460 = vst.msk [vmem:[#allocation4 + $0x28] sm:$0xff] %vm545, %v2454
        // Predicated region
        $region89: #{attention_dec_forward.4} parent=51 // pred_check
          %p2461 = pneg %p438
        $region90: #{attention_dec_forward.4} parent=51 // pred_check_branch
          %2463 = sbr.rel (%p2461) target = $region92
        $region91: #{attention_dec_forward.4} parent=51 // pred_region
          %v2464 = vld [vmem:[#allocation3] sm:$0xff]
          %v2465 = vld [vmem:[#allocation3 + $0x8] sm:$0xff]
          %v2466 = vld [vmem:[#allocation3 + $0x10] sm:$0xff]
          %v2467 = vld [vmem:[#allocation3 + $0x18] sm:$0xff]
          %v2468 = vld [vmem:[#allocation3 + $0x20] sm:$0xff]
          %v2469 = vld [vmem:[#allocation3 + $0x28] sm:$0xff]
          %2471 = vset.pattern.permute.xlu0 0
          %2472 = vperm.xlu0 %2471, %v2464
          %v2473 = vpop.permute.xlu0 %2472
          %2476 = vset.pattern.permute.xlu0 0
          %2477 = vperm.xlu0 %2476, %v2465
          %v2478 = vpop.permute.xlu0 %2477
          %2481 = vset.pattern.permute.xlu0 0
          %2482 = vperm.xlu0 %2481, %v2466
          %v2483 = vpop.permute.xlu0 %2482
          %2486 = vset.pattern.permute.xlu0 0
          %2487 = vperm.xlu0 %2486, %v2467
          %v2488 = vpop.permute.xlu0 %2487
          %2491 = vset.pattern.permute.xlu0 0
          %2492 = vperm.xlu0 %2491, %v2468
          %v2493 = vpop.permute.xlu0 %2492
          %2496 = vset.pattern.permute.xlu0 0
          %2497 = vperm.xlu0 %2496, %v2469
          %v2498 = vpop.permute.xlu0 %2497
          %v2500 = vld [vmem:[%s1388] sm:$0xff]
          %v2501 = vld [vmem:[%s1388 + $0x8] sm:$0xff]
          %v2502 = vld [vmem:[%s1388 + $0x10] sm:$0xff]
          %v2503 = vld [vmem:[%s1388 + $0x18] sm:$0xff]
          %v2504 = vld [vmem:[%s1388 + $0x20] sm:$0xff]
          %v2505 = vld [vmem:[%s1388 + $0x28] sm:$0xff]
          %2507 = vset.pattern.permute.xlu0 0
          %2508 = vperm.xlu0 %2507, %v2500
          %v2509 = vpop.permute.xlu0 %2508
          %2512 = vset.pattern.permute.xlu0 0
          %2513 = vperm.xlu0 %2512, %v2501
          %v2514 = vpop.permute.xlu0 %2513
          %2517 = vset.pattern.permute.xlu0 0
          %2518 = vperm.xlu0 %2517, %v2502
          %v2519 = vpop.permute.xlu0 %2518
          %2522 = vset.pattern.permute.xlu0 0
          %2523 = vperm.xlu0 %2522, %v2503
          %v2524 = vpop.permute.xlu0 %2523
          %2527 = vset.pattern.permute.xlu0 0
          %2528 = vperm.xlu0 %2527, %v2504
          %v2529 = vpop.permute.xlu0 %2528
          %2532 = vset.pattern.permute.xlu0 0
          %2533 = vperm.xlu0 %2532, %v2505
          %v2534 = vpop.permute.xlu0 %2533
          %v2536 = vld [vmem:[%s1783] sm:$0xff]
          %v2537 = vld [vmem:[%s1783 + $0x8] sm:$0xff]
          %v2538 = vld [vmem:[%s1783 + $0x10] sm:$0xff]
          %v2539 = vld [vmem:[%s1783 + $0x18] sm:$0xff]
          %v2540 = vld [vmem:[%s1783 + $0x20] sm:$0xff]
          %v2541 = vld [vmem:[%s1783 + $0x28] sm:$0xff]
          %2543 = vset.pattern.permute.xlu0 0
          %2544 = vperm.xlu0 %2543, %v2536
          %v2545 = vpop.permute.xlu0 %2544
          %2548 = vset.pattern.permute.xlu0 0
          %2549 = vperm.xlu0 %2548, %v2537
          %v2550 = vpop.permute.xlu0 %2549
          %2553 = vset.pattern.permute.xlu0 0
          %2554 = vperm.xlu0 %2553, %v2538
          %v2555 = vpop.permute.xlu0 %2554
          %2558 = vset.pattern.permute.xlu0 0
          %2559 = vperm.xlu0 %2558, %v2539
          %v2560 = vpop.permute.xlu0 %2559
          %2563 = vset.pattern.permute.xlu0 0
          %2564 = vperm.xlu0 %2563, %v2540
          %v2565 = vpop.permute.xlu0 %2564
          %2568 = vset.pattern.permute.xlu0 0
          %2569 = vperm.xlu0 %2568, %v2541
          %v2570 = vpop.permute.xlu0 %2569
          %v2572 = vld [vmem:[%s2170] sm:$0xff]
          %v2573 = vld [vmem:[%s2170 + $0x8] sm:$0xff]
          %v2574 = vld [vmem:[%s2170 + $0x10] sm:$0xff]
          %v2575 = vld [vmem:[%s2170 + $0x18] sm:$0xff]
          %v2576 = vld [vmem:[%s2170 + $0x20] sm:$0xff]
          %v2577 = vld [vmem:[%s2170 + $0x28] sm:$0xff]
          %2579 = vset.pattern.permute.xlu0 0
          %2580 = vperm.xlu0 %2579, %v2572
          %v2581 = vpop.permute.xlu0 %2580
          %2584 = vset.pattern.permute.xlu0 0
          %2585 = vperm.xlu0 %2584, %v2573
          %v2586 = vpop.permute.xlu0 %2585
          %2589 = vset.pattern.permute.xlu0 0
          %2590 = vperm.xlu0 %2589, %v2574
          %v2591 = vpop.permute.xlu0 %2590
          %2594 = vset.pattern.permute.xlu0 0
          %2595 = vperm.xlu0 %2594, %v2575
          %v2596 = vpop.permute.xlu0 %2595
          %2599 = vset.pattern.permute.xlu0 0
          %2600 = vperm.xlu0 %2599, %v2576
          %v2601 = vpop.permute.xlu0 %2600
          %2604 = vset.pattern.permute.xlu0 0
          %2605 = vperm.xlu0 %2604, %v2577
          %v2606 = vpop.permute.xlu0 %2605
          %v2608 = vsel %vm830, %v2473, %v2509
          %v2609 = vsel %vm830, %v2478, %v2514
          %v2610 = vsel %vm830, %v2483, %v2519
          %v2611 = vsel %vm830, %v2488, %v2524
          %v2612 = vsel %vm830, %v2493, %v2529
          %v2613 = vsel %vm830, %v2498, %v2534
          %v2614 = vsel %vm2333, %v2608, %v2545
          %v2615 = vsel %vm2333, %v2609, %v2550
          %v2616 = vsel %vm2333, %v2610, %v2555
          %v2617 = vsel %vm2333, %v2611, %v2560
          %v2618 = vsel %vm2333, %v2612, %v2565
          %v2619 = vsel %vm2333, %v2613, %v2570
          %v2620 = vsel %vm2340, %v2614, %v2581
          %v2621 = vsel %vm2340, %v2615, %v2586
          %v2622 = vsel %vm2340, %v2616, %v2591
          %v2623 = vsel %vm2340, %v2617, %v2596
          %v2624 = vsel %vm2340, %v2618, %v2601
          %v2625 = vsel %vm2340, %v2619, %v2606
          %v2626 = vld [vmem:[#allocation4] sm:$0xff]
          %v2627 = vld [vmem:[#allocation4 + $0x8] sm:$0xff]
          %v2628 = vld [vmem:[#allocation4 + $0x10] sm:$0xff]
          %v2629 = vld [vmem:[#allocation4 + $0x18] sm:$0xff]
          %v2630 = vld [vmem:[#allocation4 + $0x20] sm:$0xff]
          %v2631 = vld [vmem:[#allocation4 + $0x28] sm:$0xff]
          %v2632 = vrcp.pop %v2620
          %v2633 = vrcp.pop %v2621
          %v2634 = vrcp.pop %v2622
          %v2635 = vrcp.pop %v2623
          %v2636 = vrcp.pop %v2624
          %v2637 = vrcp.pop %v2625
          %v2638 = vmul.f32 %v2626, %v2632
          %v2639 = vmul.f32 %v2627, %v2633
          %v2640 = vmul.f32 %v2628, %v2634
          %v2641 = vmul.f32 %v2629, %v2635
          %v2642 = vmul.f32 %v2630, %v2636
          %v2643 = vmul.f32 %v2631, %v2637
          %v2644 = vpack.c.bf16 %v2639, %v2638
          %v2645 = vpack.c.bf16 %v2641, %v2640
          %v2646 = vpack.c.bf16 %v2643, %v2642
          %v2647 = vld [vmem:[#allocation16] sm:$0xf]
          %v2648 = vld [vmem:[#allocation16 + $0x4] sm:$0xf]
          %v2649 = vld [vmem:[#allocation16 + $0x8] sm:$0xf]
          %v2650 = vld [vmem:[#allocation16 + $0xc] sm:$0xf]
          %v2651 = vld [vmem:[#allocation17] sm:$0x1]
          %v2653 = vlaneseq
          %v2654 = vshrl.u32 %v2653, 7
          %v2655 = vsub.s32 0, %v2654
          %v2656 = vrot.slane %v2651, %v2655
          %v2662 = vunpack.c.l.b16 %v2647
          %v2663 = vunpack.c.l.b16 %v2648
          %v2664 = vunpack.c.l.b16 %v2649
          %v2665 = vunpack.c.l.b16 %v2650
          %v2666 = vpack.c.b16 %v2663, %v2662
          %v2667 = vpack.c.b16 %v2665, %v2664
          %v2671 = vsel %vm545, %v2644, 0
          %v2674 = vsel %vm545, %v2645, 0
          %v2677 = vsel %vm545, %v2646, 0
          %2679 = vmatprep.subr.bf16.mxu0 0
          %2680 = vmatpush1.bf16.msra.mxu0 %v2666
          %2681 = vmatprep.subr.bf16.mxu0 0
          %2682 = vmatpush1.bf16.msra.mxu0 %v2667
          %2683 = vmatprep.subr.bf16.mxu0 0
          %2684 = vmatpush1.bf16.msra.mxu0 0
          %2685 = vmatprep.subr.bf16.mxu0 0
          %2686 = vmatpush1.bf16.msra.mxu0 0
          %2687 = vmatprep.subr.bf16.mxu0 0
          %2688 = vmatpush1.bf16.msra.mxu0 0
          %2689 = vmatprep.subr.bf16.mxu0 0
          %2690 = vmatpush1.bf16.msra.mxu0 0
          %2691 = vmatprep.subr.bf16.mxu0 0
          %2692 = vmatpush1.bf16.msra.mxu0 0
          %2693 = vmatprep.subr.bf16.mxu0 0
          %2694 = vmatpush1.bf16.msra.mxu0 0
          %2695 = vmatprep.subr.bf16.mxu0 0
          %2696 = vmatpush1.bf16.msra.mxu0 0
          %2697 = vmatprep.subr.bf16.mxu0 0
          %2698 = vmatpush1.bf16.msra.mxu0 0
          %2699 = vmatprep.subr.bf16.mxu0 0
          %2700 = vmatpush1.bf16.msra.mxu0 0
          %2701 = vmatprep.subr.bf16.mxu0 0
          %2702 = vmatpush1.bf16.msra.mxu0 0
          %2703 = vmatprep.subr.bf16.mxu0 0
          %2704 = vmatpush1.bf16.msra.mxu0 0
          %2705 = vmatprep.subr.bf16.mxu0 0
          %2706 = vmatpush1.bf16.msra.mxu0 0
          %2707 = vmatprep.subr.bf16.mxu0 0
          %2708 = vmatpush1.bf16.msra.mxu0 0
          %2709 = vmatprep.subr.bf16.mxu0 0
          %2710 = vmatpush1.bf16.msra.mxu0 0
          %2711 = vmatprep.mubr.bf16.mxu0 0
          %2712 = vmatmul.mubr.bf16.gmra.mrb[0].mxu0 %v2671
          %v2713 = vpop.f32.mrb[0].mxu0
          %v2714 = vadd.f32 %v2656, %v2713
          %v2715 = vpop.f32.mrb[0].mxu0
          %v2716 = vpop.f32.mrb[0].mxu0
          %v2717 = vadd.f32 %v2656, %v2716
          %v2718 = vpop.f32.mrb[0].mxu0
          %2719 = vmatprep.mubr.bf16.mxu0 0
          %2720 = vmatmul.mubr.bf16.gmra.mrb[0].mxu0 %v2674
          %v2721 = vpop.f32.mrb[0].mxu0
          %v2722 = vadd.f32 %v2656, %v2721
          %v2723 = vpop.f32.mrb[0].mxu0
          %v2724 = vpop.f32.mrb[0].mxu0
          %v2725 = vadd.f32 %v2656, %v2724
          %v2726 = vpop.f32.mrb[0].mxu0
          %2727 = vmatprep.mubr.bf16.mxu0 0
          %2728 = vmatmul.mubr.bf16.gmra.mrb[0].mxu0 %v2677
          %v2729 = vpop.f32.mrb[0].mxu0
          %v2730 = vadd.f32 %v2656, %v2729
          %v2731 = vpop.f32.mrb[0].mxu0
          %v2732 = vpop.f32.mrb[0].mxu0
          %v2733 = vadd.f32 %v2656, %v2732
          %v2734 = vpop.f32.mrb[0].mxu0
          %2735 = vdwg.mxu0
          %2736 = vst.msk [vmem:[%s435] sm:$0xff] %vm545, %v2714
          %2737 = vst.msk [vmem:[%s435 + $0x8] sm:$0xff] %vm545, %v2717
          %2738 = vst.msk [vmem:[%s435 + $0x10] sm:$0xff] %vm545, %v2722
          %2739 = vst.msk [vmem:[%s435 + $0x18] sm:$0xff] %vm545, %v2725
          %2740 = vst.msk [vmem:[%s435 + $0x20] sm:$0xff] %vm545, %v2730
          %2741 = vst.msk [vmem:[%s435 + $0x28] sm:$0xff] %vm545, %v2733
        $region92: #{attention_dec_forward.4} parent=51 // pred_fallthru
          _
        %s2742 = sand.u32 %s224, 1
        %s2743 = scalar_lea.sflag [#allocation7], %s2742
        %s2744 = sand.u32 %s224, 1
        %s2745 = smul.addr %s2744, 48
        %s2746 = scalar_lea.vmem [#allocation19], %s2745
        // Predicated region
        $region93: #{attention_dec_forward.4} parent=51 // pred_check
          %p2747 = pneg %p234
        $region94: #{attention_dec_forward.4} parent=51 // pred_check_branch
          %2749 = sbr.rel (%p2747) target = $region96
        $region95: #{attention_dec_forward.4} parent=51 // pred_region
          %s2751 = ssub.s32 768, 768
          %2752 = vsyncadd %s2743, %s2751
          %s2753 = smul.addr %s33, 6
          %s2754 = smul.addr %s2753, 128
          %s2755 = scalar_lea.hbm %s8, %s2754
          %s2756 = sshll.u32 %s2746, 4
          %s2757 = int_to_ptr.vmem [resolvable:$true] %s2756
          %2762 = dma.vmem_to_hbm [thread:$0]  %s2757, 768, %s2755, %s2743, 128, 128, 8
        $region96: #{attention_dec_forward.4} parent=51 // pred_fallthru
          _
      $region52: #{attention_dec_forward.4} parent=5 // pred_fallthru
        _
      %p2763 = scmp.le.s32.totalorder 2, %s24
      // Predicated region
      $region97: #{attention_dec_forward.4} parent=5 // pred_check
        %p2764 = pneg %p2763
      $region98: #{attention_dec_forward.4} parent=5 // pred_check_branch
        %2766 = sbr.rel (%p2764) target = $region100
      $region99: #{attention_dec_forward.4} parent=5 // pred_region
        %s2767 = ssub.s32 %s24, 2
        // Predicated region
        $region101: #{attention_dec_forward.4} parent=99 // pred_check
          %p2768 = pneg %p240
        $region102: #{attention_dec_forward.4} parent=99 // pred_check_branch
          %2770 = sbr.rel (%p2768) target = $region104
        $region103: #{attention_dec_forward.4} parent=99 // pred_region
          %s2771 = sand.u32 %s225, 1
          %s2772 = scalar_lea.sflag [#allocation7], %s2771
          %s2773 = sand.u32 %s225, 1
          %s2774 = smul.addr %s2773, 48
          %s2775 = scalar_lea.vmem [#allocation19], %s2774
          %2776 = dma.done %s2772, 768
        $region104: #{attention_dec_forward.4} parent=99 // pred_fallthru
          _
      $region100: #{attention_dec_forward.4} parent=5 // pred_fallthru
        _
    $region6: #{attention_dec_forward.4} parent=1 // loop_footer
      %s28 = sadd.s32 1, %s24
    $region7: #{attention_dec_forward.4} parent=1 // loop_footer_branch
      %23 = sbr.rel target = $region3
    $region8: #{attention_dec_forward.4} parent=1 // loop_exit
      _
    %2777 = vsyncpa [#allocation6], 1
    %s2778 = scalar_lea.sflag [#allocation6], 1
    %2779 = vsyncpa %s2778, 1
    %2780 = vsyncpa [#allocation9], 1
    %s2781 = scalar_lea.sflag [#allocation9], 1
    %2782 = vsyncpa %s2781, 1
    %2783 = vsyncpa [#allocation12], 1
    %2784 = vsyncpa [#allocation15], 1
    %2785 = vsyncpa [#allocation18], 1
    %2786 = vsyncpa [#allocation7], 1
    %s2787 = scalar_lea.sflag [#allocation7], 1
    %2788 = vsyncpa %s2787, 1

</llo_original>
